<compile_context>
chip_gen: v6e
topology: v6e:2x2x1
jax: 0.10.0
libtpu: 0.0.40
codegen_flags: <defaults>
</compile_context>

<pallas_src>
import functools
import math

import jax
import jax.numpy as jnp
from jax.experimental import pallas as pl
from jax.experimental.pallas import tpu as pltpu

_F32 = jnp.float32
_BF16 = jnp.bfloat16


def _fuzzy(x):
    # FuzzyMembershipFunction(a=0.0, b=0.3, c=0.7, d=1.0):
    #   max(min((x - a) / (b - a), (d - x) / (d - c)), 0)
    inv = 1.0 / 0.3
    return jnp.maximum(jnp.minimum(x * inv, (1.0 - x) * inv), 0.0)


def _round_up(x, m):
    return (x + m - 1) // m * m


# ----------------------------- Pallas kernel -----------------------------

def _double_conv_kernel(xb_ref, w1_ref, w2_ref, pp_ref, o_ref, yscr_ref, *, th, w):
    # xb_ref : (H+4, W+2, Cin_p) bf16  spatially padded input (2-row / 1-col halo)
    # w1_ref : (9, Cin_p, Cp)    bf16  conv1 weights per (kh, kw) tap
    # w2_ref : (9, Cp, Cp)       bf16  conv2 weights per (kh, kw) tap
    # pp_ref : (6, Cp)           f32   rows = (b1, s1, sh1, b2, s2, sh2)
    # o_ref  : (TH*W, Cp)        f32   output strip (lane-dense, Cp % 128 == 0)
    # yscr   : (TH+2, W+2, Cp)   bf16  conv2's zero-padded input slab for this strip
    s = pl.program_id(1)
    n_strips = pl.num_programs(1)
    cin_p = xb_ref.shape[-1]
    cp = o_ref.shape[-1]
    rows1 = (th + 2) * w
    row0 = pl.multiple_of(s * th, th)
    pp = pp_ref[...]

    # ---- stage 1: conv1 over the strip + 1-row halo, nine accumulated matmuls ----
    # NOTE: the shifted slices are sublane-offset relayout copies; acceptable here,
    # a pltpu.roll-based formulation could move them onto the idle XLU.
    y = None
    for k in range(9):
        kh, kw = k // 3, k % 3
        col = xb_ref[pl.ds(row0 + kh, th + 2), pl.ds(kw, w), :].reshape(rows1, cin_p)
        d = jnp.dot(col, w1_ref[k], preferred_element_type=_F32)
        y = d if y is None else y + d
    y = y + pp[0:1]                      # conv1 bias
    y = _fuzzy(y)                        # FuzzyConv2d membership
    y = y * pp[1:2] + pp[2:3]            # BatchNorm2d (eval, folded)
    y = jnp.maximum(y, 0.0)              # ReLU

    # ---- stage the intermediate in VMEM as bf16 (no HBM round trip) ----
    # Interior columns hold real data; the 1-wide border must be conv2's zero pad.
    yscr_ref[:, pl.ds(1, w), :] = y.astype(_BF16).reshape(th + 2, w, cp)

    @pl.when(s == 0)
    def _():
        # Left/right pad columns: zeroed once per batch element; they are never
        # written by the interior store, so they stay zero for later strips.
        zc = jnp.zeros((th + 2, 1, cp), _BF16)
        yscr_ref[:, pl.ds(0, 1), :] = zc
        yscr_ref[:, pl.ds(w + 1, 1), :] = zc
        # Top image boundary: the halo row above the first strip is zero pad.
        yscr_ref[pl.ds(0, 1), :, :] = jnp.zeros((1, w + 2, cp), _BF16)

    @pl.when(s == n_strips - 1)
    def _():
        # Bottom image boundary: the halo row below the last strip is zero pad.
        yscr_ref[pl.ds(th + 1, 1), :, :] = jnp.zeros((1, w + 2, cp), _BF16)

    # ---- stage 2: conv2 over the staged slab, nine accumulated matmuls ----
    z = None
    for k in range(9):
        kh, kw = k // 3, k % 3
        col = yscr_ref[pl.ds(kh, th), pl.ds(kw, w), :].reshape(th * w, cp)
        d = jnp.dot(col, w2_ref[k], preferred_element_type=_F32)
        z = d if z is None else z + d
    z = z + pp[3:4]
    z = _fuzzy(z)
    z = z * pp[4:5] + pp[5:6]
    o_ref[...] = jnp.maximum(z, 0.0)


# ----------------------------- wrapper -----------------------------

def double_conv(x, p, *, th=8):
    # FuzzyConv2d(3x3,pad=1) + BN(eval) + ReLU, twice, fused in one pallas_call.
    N, H, W, Cin = x.shape
    Cout = p["w1"].shape[-1]
    TH = th if H % th == 0 else H            # strip height (divides H)
    n_strips = H // TH
    Cp = _round_up(Cout, 128)                # lane-dense output channels
    Cin_p = _round_up(Cin, 8)                # sublane-aligned K for conv1

    # Spatial halo padding only (no im2col): 2 rows / 1 col on each side.
    xp = jnp.pad(x, ((0, 0), (2, 2), (1, 1), (0, Cin_p - Cin))).astype(_BF16)

    w1 = jnp.pad(p["w1"], ((0, 0), (0, 0), (0, Cin_p - Cin), (0, Cp - Cout)))
    w1 = w1.reshape(9, Cin_p, Cp).astype(_BF16)
    w2 = jnp.pad(p["w2"], ((0, 0), (0, 0), (0, Cp - Cout), (0, Cp - Cout)))
    w2 = w2.reshape(9, Cp, Cp).astype(_BF16)

    padc = lambda v: jnp.pad(v, (0, Cp - Cout))
    pp = jnp.stack([padc(p["b1"]), padc(p["s1"]), padc(p["sh1"]),
                    padc(p["b2"]), padc(p["s2"]), padc(p["sh2"])]).astype(_F32)

    kernel = functools.partial(_double_conv_kernel, th=TH, w=W)
    out = pl.pallas_call(
        kernel,
        out_shape=jax.ShapeDtypeStruct((N, H * W, Cp), _F32),
        grid=(N, n_strips),
        in_specs=[
            # Full padded image per batch element; same block index across the
            # strip axis, so it is fetched once per batch element.
            pl.BlockSpec((None, H + 4, W + 2, Cin_p), lambda n, s: (n, 0, 0, 0)),
            pl.BlockSpec((9, Cin_p, Cp), lambda n, s: (0, 0, 0)),
            pl.BlockSpec((9, Cp, Cp), lambda n, s: (0, 0, 0)),
            pl.BlockSpec((6, Cp), lambda n, s: (0, 0)),
        ],
        out_specs=pl.BlockSpec((None, TH * W, Cp), lambda n, s: (n, s, 0)),
        scratch_shapes=[pltpu.VMEM((TH + 2, W + 2, Cp), _BF16)],
        compiler_params=pltpu.CompilerParams(
            dimension_semantics=("parallel", "arbitrary")),
    )(xp, w1, w2, pp)
    return out.reshape(N, H, W, Cp)[..., :Cout]


# ----------------------------- pure-JAX reference -----------------------------

def double_conv_ref(x, p):
    def block(h, w, b, scale, shift):
        y = jax.lax.conv_general_dilated(
            h.astype(_BF16), w.astype(_BF16),
            window_strides=(1, 1), padding=((1, 1), (1, 1)),
            dimension_numbers=("NHWC", "HWIO", "NHWC"),
            preferred_element_type=_F32)
        y = y + b
        y = _fuzzy(y)
        y = y * scale + shift
        return jnp.maximum(y, 0.0)

    y = block(x, p["w1"], p["b1"], p["s1"], p["sh1"])
    return block(y, p["w2"], p["b2"], p["s2"], p["sh2"])


# ----------------------------- params -----------------------------

def init_params(key, cin, cout):
    ks = jax.random.split(key, 8)
    eps = 1e-5
    bn = 1.0 / math.sqrt(1.0 + eps)   # fresh BatchNorm2d running stats, eval mode

    def draw(k, shape, scale):
        return (scale * jax.random.normal(k, shape)).astype(_F32)

    return dict(
        w1=draw(ks[0], (3, 3, cin, cout), 1.0 / math.sqrt(9 * cin)),
        b1=draw(ks[1], (cout,), 0.05),
        s1=((1.0 + 0.1 * jax.random.normal(ks[2], (cout,))) * bn).astype(_F32),
        sh1=draw(ks[3], (cout,), 0.05),
        w2=draw(ks[4], (3, 3, cout, cout), 1.0 / math.sqrt(9 * cout)),
        b2=draw(ks[5], (cout,), 0.05),
        s2=((1.0 + 0.1 * jax.random.normal(ks[6], (cout,))) * bn).astype(_F32),
        sh2=draw(ks[7], (cout,), 0.05),
    )


if __name__ == "__main__":
    key = jax.random.PRNGKey(0)
    N, H, W, CIN, COUT = 2, 16, 16, 4, 64
    kx, kp = jax.random.split(key)
    # PyTorch would take NCHW (2, 4, 16, 16); our layout is NHWC.
    x = jax.random.normal(kx, (N, H, W, CIN), dtype=_F32)
    params = init_params(kp, CIN, COUT)

    fwd = jax.jit(double_conv)
    out = jax.block_until_ready(fwd(x, params))

    assert out.shape == (N, H, W, COUT), out.shape
    assert bool(jnp.all(jnp.isfinite(out)))

    ref = double_conv_ref(x, params)
    err = float(jnp.max(jnp.abs(out - ref)))
    assert bool(jnp.allclose(out, ref, rtol=1e-2, atol=1e-2)), err

    print("KERNEL_OK")
</pallas_src>

<mosaic_0001>
module attributes {stable_mosaic.version = 11 : i64} {
  func.func @_double_conv_kernel(%arg0: i32, %arg1: i32, %arg2: memref<1x20x18x8xbf16, #tpu.memory_space<vmem>>, %arg3: memref<9x8x128xbf16, #tpu.memory_space<vmem>>, %arg4: memref<9x128x128xbf16, #tpu.memory_space<vmem>>, %arg5: memref<6x128xf32, #tpu.memory_space<vmem>>, %arg6: memref<1x128x128xf32, #tpu.memory_space<vmem>>, %arg7: memref<10x18x128xbf16, #tpu.memory_space<vmem>>) attributes {dimension_semantics = [#tpu.dimension_semantics<parallel>, #tpu.dimension_semantics<arbitrary>], iteration_bounds = array<i64: 2, 2>, scalar_prefetch = 0 : i64, scratch_operands = 1 : i64, tpu.core_type = #tpu.core_type<tc>, window_params = [{transform_indices = @transform_0, window_bounds = array<i64: 1, 20, 18, 8>}, {pipeline_mode = #tpu.pipeline_mode<synchronous>, transform_indices = @transform_1, window_bounds = array<i64: 9, 8, 128>}, {pipeline_mode = #tpu.pipeline_mode<synchronous>, transform_indices = @transform_2, window_bounds = array<i64: 9, 128, 128>}, {pipeline_mode = #tpu.pipeline_mode<synchronous>, transform_indices = @transform_3, window_bounds = array<i64: 6, 128>}, {transform_indices = @transform_4, window_bounds = array<i64: 1, 128, 128>}]} {
    %c8_i32 = arith.constant 8 : i32
    %0 = arith.muli %arg1, %c8_i32 : i32
    %1 = tpu.assume_multiple %0, 8 : i32
    %c0 = arith.constant 0 : index
    %c0_0 = arith.constant 0 : index
    %2 = vector.load %arg5[%c0, %c0_0] : memref<6x128xf32, #tpu.memory_space<vmem>>, vector<6x128xf32>
    %c0_i32 = arith.constant 0 : i32
    %3 = arith.addi %1, %c0_i32 : i32
    %c0_1 = arith.constant 0 : index
    %4 = arith.index_cast %3 : i32 to index
    %c0_2 = arith.constant 0 : index
    %c0_3 = arith.constant 0 : index
    %5 = vector.load %arg2[%c0_1, %4, %c0_2, %c0_3] : memref<1x20x18x8xbf16, #tpu.memory_space<vmem>>, vector<1x10x16x8xbf16>
    %6 = vector.shape_cast %5 : vector<1x10x16x8xbf16> to vector<10x16x8xbf16>
    %7 = vector.shape_cast %6 : vector<10x16x8xbf16> to vector<160x8xbf16>
    %c0_4 = arith.constant 0 : index
    %c0_5 = arith.constant 0 : index
    %c0_6 = arith.constant 0 : index
    %8 = vector.load %arg3[%c0_4, %c0_5, %c0_6] : memref<9x8x128xbf16, #tpu.memory_space<vmem>>, vector<1x8x128xbf16>
    %9 = vector.shape_cast %8 : vector<1x8x128xbf16> to vector<8x128xbf16>
    %cst = arith.constant dense<0.000000e+00> : vector<160x128xf32>
    %10 = tpu.matmul %7, %9, %cst {dimension_numbers = #tpu.dot_dimension_numbers<[1], [0], [0], [1], [0, 0, 1, 1], [], []>} : vector<160x8xbf16>, vector<8x128xbf16>, vector<160x128xf32> -> vector<160x128xf32>
    %c0_i32_7 = arith.constant 0 : i32
    %11 = arith.addi %1, %c0_i32_7 : i32
    %c0_8 = arith.constant 0 : index
    %12 = arith.index_cast %11 : i32 to index
    %c1 = arith.constant 1 : index
    %c0_9 = arith.constant 0 : index
    %13 = vector.load %arg2[%c0_8, %12, %c1, %c0_9] : memref<1x20x18x8xbf16, #tpu.memory_space<vmem>>, vector<1x10x16x8xbf16>
    %14 = vector.shape_cast %13 : vector<1x10x16x8xbf16> to vector<10x16x8xbf16>
    %15 = vector.shape_cast %14 : vector<10x16x8xbf16> to vector<160x8xbf16>
    %c1_10 = arith.constant 1 : index
    %c0_11 = arith.constant 0 : index
    %c0_12 = arith.constant 0 : index
    %16 = vector.load %arg3[%c1_10, %c0_11, %c0_12] : memref<9x8x128xbf16, #tpu.memory_space<vmem>>, vector<1x8x128xbf16>
    %17 = vector.shape_cast %16 : vector<1x8x128xbf16> to vector<8x128xbf16>
    %cst_13 = arith.constant dense<0.000000e+00> : vector<160x128xf32>
    %18 = tpu.matmul %15, %17, %cst_13 {dimension_numbers = #tpu.dot_dimension_numbers<[1], [0], [0], [1], [0, 0, 1, 1], [], []>} : vector<160x8xbf16>, vector<8x128xbf16>, vector<160x128xf32> -> vector<160x128xf32>
    %19 = arith.addf %10, %18 : vector<160x128xf32>
    %c0_i32_14 = arith.constant 0 : i32
    %20 = arith.addi %1, %c0_i32_14 : i32
    %c0_15 = arith.constant 0 : index
    %21 = arith.index_cast %20 : i32 to index
    %c2 = arith.constant 2 : index
    %c0_16 = arith.constant 0 : index
    %22 = vector.load %arg2[%c0_15, %21, %c2, %c0_16] : memref<1x20x18x8xbf16, #tpu.memory_space<vmem>>, vector<1x10x16x8xbf16>
    %23 = vector.shape_cast %22 : vector<1x10x16x8xbf16> to vector<10x16x8xbf16>
    %24 = vector.shape_cast %23 : vector<10x16x8xbf16> to vector<160x8xbf16>
    %c2_17 = arith.constant 2 : index
    %c0_18 = arith.constant 0 : index
    %c0_19 = arith.constant 0 : index
    %25 = vector.load %arg3[%c2_17, %c0_18, %c0_19] : memref<9x8x128xbf16, #tpu.memory_space<vmem>>, vector<1x8x128xbf16>
    %26 = vector.shape_cast %25 : vector<1x8x128xbf16> to vector<8x128xbf16>
    %cst_20 = arith.constant dense<0.000000e+00> : vector<160x128xf32>
    %27 = tpu.matmul %24, %26, %cst_20 {dimension_numbers = #tpu.dot_dimension_numbers<[1], [0], [0], [1], [0, 0, 1, 1], [], []>} : vector<160x8xbf16>, vector<8x128xbf16>, vector<160x128xf32> -> vector<160x128xf32>
    %28 = arith.addf %19, %27 : vector<160x128xf32>
    %c1_i32 = arith.constant 1 : i32
    %29 = arith.addi %1, %c1_i32 : i32
    %c0_21 = arith.constant 0 : index
    %30 = arith.index_cast %29 : i32 to index
    %c0_22 = arith.constant 0 : index
    %c0_23 = arith.constant 0 : index
    %31 = vector.load %arg2[%c0_21, %30, %c0_22, %c0_23] : memref<1x20x18x8xbf16, #tpu.memory_space<vmem>>, vector<1x10x16x8xbf16>
    %32 = vector.shape_cast %31 : vector<1x10x16x8xbf16> to vector<10x16x8xbf16>
    %33 = vector.shape_cast %32 : vector<10x16x8xbf16> to vector<160x8xbf16>
    %c3 = arith.constant 3 : index
    %c0_24 = arith.constant 0 : index
    %c0_25 = arith.constant 0 : index
    %34 = vector.load %arg3[%c3, %c0_24, %c0_25] : memref<9x8x128xbf16, #tpu.memory_space<vmem>>, vector<1x8x128xbf16>
    %35 = vector.shape_cast %34 : vector<1x8x128xbf16> to vector<8x128xbf16>
    %cst_26 = arith.constant dense<0.000000e+00> : vector<160x128xf32>
    %36 = tpu.matmul %33, %35, %cst_26 {dimension_numbers = #tpu.dot_dimension_numbers<[1], [0], [0], [1], [0, 0, 1, 1], [], []>} : vector<160x8xbf16>, vector<8x128xbf16>, vector<160x128xf32> -> vector<160x128xf32>
    %37 = arith.addf %28, %36 : vector<160x128xf32>
    %c1_i32_27 = arith.constant 1 : i32
    %38 = arith.addi %1, %c1_i32_27 : i32
    %c0_28 = arith.constant 0 : index
    %39 = arith.index_cast %38 : i32 to index
    %c1_29 = arith.constant 1 : index
    %c0_30 = arith.constant 0 : index
    %40 = vector.load %arg2[%c0_28, %39, %c1_29, %c0_30] : memref<1x20x18x8xbf16, #tpu.memory_space<vmem>>, vector<1x10x16x8xbf16>
    %41 = vector.shape_cast %40 : vector<1x10x16x8xbf16> to vector<10x16x8xbf16>
    %42 = vector.shape_cast %41 : vector<10x16x8xbf16> to vector<160x8xbf16>
    %c4 = arith.constant 4 : index
    %c0_31 = arith.constant 0 : index
    %c0_32 = arith.constant 0 : index
    %43 = vector.load %arg3[%c4, %c0_31, %c0_32] : memref<9x8x128xbf16, #tpu.memory_space<vmem>>, vector<1x8x128xbf16>
    %44 = vector.shape_cast %43 : vector<1x8x128xbf16> to vector<8x128xbf16>
    %cst_33 = arith.constant dense<0.000000e+00> : vector<160x128xf32>
    %45 = tpu.matmul %42, %44, %cst_33 {dimension_numbers = #tpu.dot_dimension_numbers<[1], [0], [0], [1], [0, 0, 1, 1], [], []>} : vector<160x8xbf16>, vector<8x128xbf16>, vector<160x128xf32> -> vector<160x128xf32>
    %46 = arith.addf %37, %45 : vector<160x128xf32>
    %c1_i32_34 = arith.constant 1 : i32
    %47 = arith.addi %1, %c1_i32_34 : i32
    %c0_35 = arith.constant 0 : index
    %48 = arith.index_cast %47 : i32 to index
    %c2_36 = arith.constant 2 : index
    %c0_37 = arith.constant 0 : index
    %49 = vector.load %arg2[%c0_35, %48, %c2_36, %c0_37] : memref<1x20x18x8xbf16, #tpu.memory_space<vmem>>, vector<1x10x16x8xbf16>
    %50 = vector.shape_cast %49 : vector<1x10x16x8xbf16> to vector<10x16x8xbf16>
    %51 = vector.shape_cast %50 : vector<10x16x8xbf16> to vector<160x8xbf16>
    %c5 = arith.constant 5 : index
    %c0_38 = arith.constant 0 : index
    %c0_39 = arith.constant 0 : index
    %52 = vector.load %arg3[%c5, %c0_38, %c0_39] : memref<9x8x128xbf16, #tpu.memory_space<vmem>>, vector<1x8x128xbf16>
    %53 = vector.shape_cast %52 : vector<1x8x128xbf16> to vector<8x128xbf16>
    %cst_40 = arith.constant dense<0.000000e+00> : vector<160x128xf32>
    %54 = tpu.matmul %51, %53, %cst_40 {dimension_numbers = #tpu.dot_dimension_numbers<[1], [0], [0], [1], [0, 0, 1, 1], [], []>} : vector<160x8xbf16>, vector<8x128xbf16>, vector<160x128xf32> -> vector<160x128xf32>
    %55 = arith.addf %46, %54 : vector<160x128xf32>
    %c2_i32 = arith.constant 2 : i32
    %56 = arith.addi %1, %c2_i32 : i32
    %c0_41 = arith.constant 0 : index
    %57 = arith.index_cast %56 : i32 to index
    %c0_42 = arith.constant 0 : index
    %c0_43 = arith.constant 0 : index
    %58 = vector.load %arg2[%c0_41, %57, %c0_42, %c0_43] : memref<1x20x18x8xbf16, #tpu.memory_space<vmem>>, vector<1x10x16x8xbf16>
    %59 = vector.shape_cast %58 : vector<1x10x16x8xbf16> to vector<10x16x8xbf16>
    %60 = vector.shape_cast %59 : vector<10x16x8xbf16> to vector<160x8xbf16>
    %c6 = arith.constant 6 : index
    %c0_44 = arith.constant 0 : index
    %c0_45 = arith.constant 0 : index
    %61 = vector.load %arg3[%c6, %c0_44, %c0_45] : memref<9x8x128xbf16, #tpu.memory_space<vmem>>, vector<1x8x128xbf16>
    %62 = vector.shape_cast %61 : vector<1x8x128xbf16> to vector<8x128xbf16>
    %cst_46 = arith.constant dense<0.000000e+00> : vector<160x128xf32>
    %63 = tpu.matmul %60, %62, %cst_46 {dimension_numbers = #tpu.dot_dimension_numbers<[1], [0], [0], [1], [0, 0, 1, 1], [], []>} : vector<160x8xbf16>, vector<8x128xbf16>, vector<160x128xf32> -> vector<160x128xf32>
    %64 = arith.addf %55, %63 : vector<160x128xf32>
    %c2_i32_47 = arith.constant 2 : i32
    %65 = arith.addi %1, %c2_i32_47 : i32
    %c0_48 = arith.constant 0 : index
    %66 = arith.index_cast %65 : i32 to index
    %c1_49 = arith.constant 1 : index
    %c0_50 = arith.constant 0 : index
    %67 = vector.load %arg2[%c0_48, %66, %c1_49, %c0_50] : memref<1x20x18x8xbf16, #tpu.memory_space<vmem>>, vector<1x10x16x8xbf16>
    %68 = vector.shape_cast %67 : vector<1x10x16x8xbf16> to vector<10x16x8xbf16>
    %69 = vector.shape_cast %68 : vector<10x16x8xbf16> to vector<160x8xbf16>
    %c7 = arith.constant 7 : index
    %c0_51 = arith.constant 0 : index
    %c0_52 = arith.constant 0 : index
    %70 = vector.load %arg3[%c7, %c0_51, %c0_52] : memref<9x8x128xbf16, #tpu.memory_space<vmem>>, vector<1x8x128xbf16>
    %71 = vector.shape_cast %70 : vector<1x8x128xbf16> to vector<8x128xbf16>
    %cst_53 = arith.constant dense<0.000000e+00> : vector<160x128xf32>
    %72 = tpu.matmul %69, %71, %cst_53 {dimension_numbers = #tpu.dot_dimension_numbers<[1], [0], [0], [1], [0, 0, 1, 1], [], []>} : vector<160x8xbf16>, vector<8x128xbf16>, vector<160x128xf32> -> vector<160x128xf32>
    %73 = arith.addf %64, %72 : vector<160x128xf32>
    %c2_i32_54 = arith.constant 2 : i32
    %74 = arith.addi %1, %c2_i32_54 : i32
    %c0_55 = arith.constant 0 : index
    %75 = arith.index_cast %74 : i32 to index
    %c2_56 = arith.constant 2 : index
    %c0_57 = arith.constant 0 : index
    %76 = vector.load %arg2[%c0_55, %75, %c2_56, %c0_57] : memref<1x20x18x8xbf16, #tpu.memory_space<vmem>>, vector<1x10x16x8xbf16>
    %77 = vector.shape_cast %76 : vector<1x10x16x8xbf16> to vector<10x16x8xbf16>
    %78 = vector.shape_cast %77 : vector<10x16x8xbf16> to vector<160x8xbf16>
    %c8 = arith.constant 8 : index
    %c0_58 = arith.constant 0 : index
    %c0_59 = arith.constant 0 : index
    %79 = vector.load %arg3[%c8, %c0_58, %c0_59] : memref<9x8x128xbf16, #tpu.memory_space<vmem>>, vector<1x8x128xbf16>
    %80 = vector.shape_cast %79 : vector<1x8x128xbf16> to vector<8x128xbf16>
    %cst_60 = arith.constant dense<0.000000e+00> : vector<160x128xf32>
    %81 = tpu.matmul %78, %80, %cst_60 {dimension_numbers = #tpu.dot_dimension_numbers<[1], [0], [0], [1], [0, 0, 1, 1], [], []>} : vector<160x8xbf16>, vector<8x128xbf16>, vector<160x128xf32> -> vector<160x128xf32>
    %82 = arith.addf %73, %81 : vector<160x128xf32>
    %83 = vector.extract_strided_slice %2 {offsets = [0, 0], sizes = [1, 128], strides = [1, 1]} : vector<6x128xf32> to vector<1x128xf32>
    %84 = vector.broadcast %83 : vector<1x128xf32> to vector<160x128xf32>
    %85 = arith.addf %82, %84 : vector<160x128xf32>
    %cst_61 = arith.constant 3.33333325 : f32
    %86 = vector.broadcast %cst_61 : f32 to vector<160x128xf32>
    %87 = arith.mulf %85, %86 : vector<160x128xf32>
    %cst_62 = arith.constant 1.000000e+00 : f32
    %88 = vector.broadcast %cst_62 : f32 to vector<160x128xf32>
    %89 = arith.subf %88, %85 : vector<160x128xf32>
    %cst_63 = arith.constant 3.33333325 : f32
    %90 = vector.broadcast %cst_63 : f32 to vector<160x128xf32>
    %91 = arith.mulf %89, %90 : vector<160x128xf32>
    %92 = arith.minimumf %87, %91 : vector<160x128xf32>
    %cst_64 = arith.constant 0.000000e+00 : f32
    %93 = vector.broadcast %cst_64 : f32 to vector<160x128xf32>
    %94 = arith.maximumf %92, %93 : vector<160x128xf32>
    %95 = vector.extract_strided_slice %2 {offsets = [1, 0], sizes = [1, 128], strides = [1, 1]} : vector<6x128xf32> to vector<1x128xf32>
    %96 = vector.broadcast %95 : vector<1x128xf32> to vector<160x128xf32>
    %97 = arith.mulf %94, %96 : vector<160x128xf32>
    %98 = vector.extract_strided_slice %2 {offsets = [2, 0], sizes = [1, 128], strides = [1, 1]} : vector<6x128xf32> to vector<1x128xf32>
    %99 = vector.broadcast %98 : vector<1x128xf32> to vector<160x128xf32>
    %100 = arith.addf %97, %99 : vector<160x128xf32>
    %cst_65 = arith.constant 0.000000e+00 : f32
    %101 = vector.broadcast %cst_65 : f32 to vector<160x128xf32>
    %102 = arith.maximumf %100, %101 : vector<160x128xf32>
    %103 = arith.truncf %102 : vector<160x128xf32> to vector<160x128xbf16>
    %104 = vector.shape_cast %103 : vector<160x128xbf16> to vector<10x16x128xbf16>
    %c0_66 = arith.constant 0 : index
    %c1_67 = arith.constant 1 : index
    %c0_68 = arith.constant 0 : index
    %105 = vector.load %arg7[%c0_66, %c1_67, %c0_68] : memref<10x18x128xbf16, #tpu.memory_space<vmem>>, vector<10x16x128xbf16>
    tpu.vector_store %arg7[%c0_66, %c1_67, %c0_68], %104 {strides = array<i32>} : memref<10x18x128xbf16, #tpu.memory_space<vmem>>, vector<10x16x128xbf16>,
    %c0_i32_69 = arith.constant 0 : i32
    %106 = arith.cmpi eq, %arg1, %c0_i32_69 : i32
    %107 = arith.extui %106 : i1 to i32
    %c0_i32_70 = arith.constant 0 : i32
    %108 = arith.cmpi ne, %107, %c0_i32_70 : i32
    scf.if %108 {
      %cst_144 = arith.constant 0.000000e+00 : bf16
      %188 = vector.broadcast %cst_144 : bf16 to vector<10x1x128xbf16>
      %c0_145 = arith.constant 0 : index
      %c0_146 = arith.constant 0 : index
      %c0_147 = arith.constant 0 : index
      %189 = vector.load %arg7[%c0_145, %c0_146, %c0_147] : memref<10x18x128xbf16, #tpu.memory_space<vmem>>, vector<10x1x128xbf16>
      tpu.vector_store %arg7[%c0_145, %c0_146, %c0_147], %188 {strides = array<i32>} : memref<10x18x128xbf16, #tpu.memory_space<vmem>>, vector<10x1x128xbf16>,
      %c0_148 = arith.constant 0 : index
      %c17 = arith.constant 17 : index
      %c0_149 = arith.constant 0 : index
      %190 = vector.load %arg7[%c0_148, %c17, %c0_149] : memref<10x18x128xbf16, #tpu.memory_space<vmem>>, vector<10x1x128xbf16>
      tpu.vector_store %arg7[%c0_148, %c17, %c0_149], %188 {strides = array<i32>} : memref<10x18x128xbf16, #tpu.memory_space<vmem>>, vector<10x1x128xbf16>,
      %cst_150 = arith.constant 0.000000e+00 : bf16
      %191 = vector.broadcast %cst_150 : bf16 to vector<1x18x128xbf16>
      %c0_151 = arith.constant 0 : index
      %c0_152 = arith.constant 0 : index
      %c0_153 = arith.constant 0 : index
      %192 = vector.load %arg7[%c0_151, %c0_152, %c0_153] : memref<10x18x128xbf16, #tpu.memory_space<vmem>>, vector<1x18x128xbf16>
      tpu.vector_store %arg7[%c0_151, %c0_152, %c0_153], %191 {strides = array<i32>} : memref<10x18x128xbf16, #tpu.memory_space<vmem>>, vector<1x18x128xbf16>,
    } else {
    }
    %c1_i32_71 = arith.constant 1 : i32
    %109 = arith.cmpi eq, %arg1, %c1_i32_71 : i32
    %110 = arith.extui %109 : i1 to i32
    %c0_i32_72 = arith.constant 0 : i32
    %111 = arith.cmpi ne, %110, %c0_i32_72 : i32
    scf.if %111 {
      %cst_144 = arith.constant 0.000000e+00 : bf16
      %188 = vector.broadcast %cst_144 : bf16 to vector<1x18x128xbf16>
      %c9 = arith.constant 9 : index
      %c0_145 = arith.constant 0 : index
      %c0_146 = arith.constant 0 : index
      %189 = vector.load %arg7[%c9, %c0_145, %c0_146] : memref<10x18x128xbf16, #tpu.memory_space<vmem>>, vector<1x18x128xbf16>
      tpu.vector_store %arg7[%c9, %c0_145, %c0_146], %188 {strides = array<i32>} : memref<10x18x128xbf16, #tpu.memory_space<vmem>>, vector<1x18x128xbf16>,
    } else {
    }
    %c0_73 = arith.constant 0 : index
    %c0_74 = arith.constant 0 : index
    %c0_75 = arith.constant 0 : index
    %112 = vector.load %arg7[%c0_73, %c0_74, %c0_75] : memref<10x18x128xbf16, #tpu.memory_space<vmem>>, vector<8x16x128xbf16>
    %113 = vector.shape_cast %112 : vector<8x16x128xbf16> to vector<128x128xbf16>
    %c0_76 = arith.constant 0 : index
    %c0_77 = arith.constant 0 : index
    %c0_78 = arith.constant 0 : index
    %114 = vector.load %arg4[%c0_76, %c0_77, %c0_78] : memref<9x128x128xbf16, #tpu.memory_space<vmem>>, vector<1x128x128xbf16>
    %115 = vector.shape_cast %114 : vector<1x128x128xbf16> to vector<128x128xbf16>
    %cst_79 = arith.constant dense<0.000000e+00> : vector<128x128xf32>
    %116 = tpu.matmul %113, %115, %cst_79 {dimension_numbers = #tpu.dot_dimension_numbers<[1], [0], [0], [1], [0, 0, 1, 1], [], []>} : vector<128x128xbf16>, vector<128x128xbf16>, vector<128x128xf32> -> vector<128x128xf32>
    %c0_80 = arith.constant 0 : index
    %c1_81 = arith.constant 1 : index
    %c0_82 = arith.constant 0 : index
    %117 = vector.load %arg7[%c0_80, %c1_81, %c0_82] : memref<10x18x128xbf16, #tpu.memory_space<vmem>>, vector<8x16x128xbf16>
    %118 = vector.shape_cast %117 : vector<8x16x128xbf16> to vector<128x128xbf16>
    %c1_83 = arith.constant 1 : index
    %c0_84 = arith.constant 0 : index
    %c0_85 = arith.constant 0 : index
    %119 = vector.load %arg4[%c1_83, %c0_84, %c0_85] : memref<9x128x128xbf16, #tpu.memory_space<vmem>>, vector<1x128x128xbf16>
    %120 = vector.shape_cast %119 : vector<1x128x128xbf16> to vector<128x128xbf16>
    %cst_86 = arith.constant dense<0.000000e+00> : vector<128x128xf32>
    %121 = tpu.matmul %118, %120, %cst_86 {dimension_numbers = #tpu.dot_dimension_numbers<[1], [0], [0], [1], [0, 0, 1, 1], [], []>} : vector<128x128xbf16>, vector<128x128xbf16>, vector<128x128xf32> -> vector<128x128xf32>
    %122 = arith.addf %116, %121 : vector<128x128xf32>
    %c0_87 = arith.constant 0 : index
    %c2_88 = arith.constant 2 : index
    %c0_89 = arith.constant 0 : index
    %123 = vector.load %arg7[%c0_87, %c2_88, %c0_89] : memref<10x18x128xbf16, #tpu.memory_space<vmem>>, vector<8x16x128xbf16>
    %124 = vector.shape_cast %123 : vector<8x16x128xbf16> to vector<128x128xbf16>
    %c2_90 = arith.constant 2 : index
    %c0_91 = arith.constant 0 : index
    %c0_92 = arith.constant 0 : index
    %125 = vector.load %arg4[%c2_90, %c0_91, %c0_92] : memref<9x128x128xbf16, #tpu.memory_space<vmem>>, vector<1x128x128xbf16>
    %126 = vector.shape_cast %125 : vector<1x128x128xbf16> to vector<128x128xbf16>
    %cst_93 = arith.constant dense<0.000000e+00> : vector<128x128xf32>
    %127 = tpu.matmul %124, %126, %cst_93 {dimension_numbers = #tpu.dot_dimension_numbers<[1], [0], [0], [1], [0, 0, 1, 1], [], []>} : vector<128x128xbf16>, vector<128x128xbf16>, vector<128x128xf32> -> vector<128x128xf32>
    %128 = arith.addf %122, %127 : vector<128x128xf32>
    %c1_94 = arith.constant 1 : index
    %c0_95 = arith.constant 0 : index
    %c0_96 = arith.constant 0 : index
    %129 = vector.load %arg7[%c1_94, %c0_95, %c0_96] : memref<10x18x128xbf16, #tpu.memory_space<vmem>>, vector<8x16x128xbf16>
    %130 = vector.shape_cast %129 : vector<8x16x128xbf16> to vector<128x128xbf16>
    %c3_97 = arith.constant 3 : index
    %c0_98 = arith.constant 0 : index
    %c0_99 = arith.constant 0 : index
    %131 = vector.load %arg4[%c3_97, %c0_98, %c0_99] : memref<9x128x128xbf16, #tpu.memory_space<vmem>>, vector<1x128x128xbf16>
    %132 = vector.shape_cast %131 : vector<1x128x128xbf16> to vector<128x128xbf16>
    %cst_100 = arith.constant dense<0.000000e+00> : vector<128x128xf32>
    %133 = tpu.matmul %130, %132, %cst_100 {dimension_numbers = #tpu.dot_dimension_numbers<[1], [0], [0], [1], [0, 0, 1, 1], [], []>} : vector<128x128xbf16>, vector<128x128xbf16>, vector<128x128xf32> -> vector<128x128xf32>
    %134 = arith.addf %128, %133 : vector<128x128xf32>
    %c1_101 = arith.constant 1 : index
    %c1_102 = arith.constant 1 : index
    %c0_103 = arith.constant 0 : index
    %135 = vector.load %arg7[%c1_101, %c1_102, %c0_103] : memref<10x18x128xbf16, #tpu.memory_space<vmem>>, vector<8x16x128xbf16>
    %136 = vector.shape_cast %135 : vector<8x16x128xbf16> to vector<128x128xbf16>
    %c4_104 = arith.constant 4 : index
    %c0_105 = arith.constant 0 : index
    %c0_106 = arith.constant 0 : index
    %137 = vector.load %arg4[%c4_104, %c0_105, %c0_106] : memref<9x128x128xbf16, #tpu.memory_space<vmem>>, vector<1x128x128xbf16>
    %138 = vector.shape_cast %137 : vector<1x128x128xbf16> to vector<128x128xbf16>
    %cst_107 = arith.constant dense<0.000000e+00> : vector<128x128xf32>
    %139 = tpu.matmul %136, %138, %cst_107 {dimension_numbers = #tpu.dot_dimension_numbers<[1], [0], [0], [1], [0, 0, 1, 1], [], []>} : vector<128x128xbf16>, vector<128x128xbf16>, vector<128x128xf32> -> vector<128x128xf32>
    %140 = arith.addf %134, %139 : vector<128x128xf32>
    %c1_108 = arith.constant 1 : index
    %c2_109 = arith.constant 2 : index
    %c0_110 = arith.constant 0 : index
    %141 = vector.load %arg7[%c1_108, %c2_109, %c0_110] : memref<10x18x128xbf16, #tpu.memory_space<vmem>>, vector<8x16x128xbf16>
    %142 = vector.shape_cast %141 : vector<8x16x128xbf16> to vector<128x128xbf16>
    %c5_111 = arith.constant 5 : index
    %c0_112 = arith.constant 0 : index
    %c0_113 = arith.constant 0 : index
    %143 = vector.load %arg4[%c5_111, %c0_112, %c0_113] : memref<9x128x128xbf16, #tpu.memory_space<vmem>>, vector<1x128x128xbf16>
    %144 = vector.shape_cast %143 : vector<1x128x128xbf16> to vector<128x128xbf16>
    %cst_114 = arith.constant dense<0.000000e+00> : vector<128x128xf32>
    %145 = tpu.matmul %142, %144, %cst_114 {dimension_numbers = #tpu.dot_dimension_numbers<[1], [0], [0], [1], [0, 0, 1, 1], [], []>} : vector<128x128xbf16>, vector<128x128xbf16>, vector<128x128xf32> -> vector<128x128xf32>
    %146 = arith.addf %140, %145 : vector<128x128xf32>
    %c2_115 = arith.constant 2 : index
    %c0_116 = arith.constant 0 : index
    %c0_117 = arith.constant 0 : index
    %147 = vector.load %arg7[%c2_115, %c0_116, %c0_117] : memref<10x18x128xbf16, #tpu.memory_space<vmem>>, vector<8x16x128xbf16>
    %148 = vector.shape_cast %147 : vector<8x16x128xbf16> to vector<128x128xbf16>
    %c6_118 = arith.constant 6 : index
    %c0_119 = arith.constant 0 : index
    %c0_120 = arith.constant 0 : index
    %149 = vector.load %arg4[%c6_118, %c0_119, %c0_120] : memref<9x128x128xbf16, #tpu.memory_space<vmem>>, vector<1x128x128xbf16>
    %150 = vector.shape_cast %149 : vector<1x128x128xbf16> to vector<128x128xbf16>
    %cst_121 = arith.constant dense<0.000000e+00> : vector<128x128xf32>
    %151 = tpu.matmul %148, %150, %cst_121 {dimension_numbers = #tpu.dot_dimension_numbers<[1], [0], [0], [1], [0, 0, 1, 1], [], []>} : vector<128x128xbf16>, vector<128x128xbf16>, vector<128x128xf32> -> vector<128x128xf32>
    %152 = arith.addf %146, %151 : vector<128x128xf32>
    %c2_122 = arith.constant 2 : index
    %c1_123 = arith.constant 1 : index
    %c0_124 = arith.constant 0 : index
    %153 = vector.load %arg7[%c2_122, %c1_123, %c0_124] : memref<10x18x128xbf16, #tpu.memory_space<vmem>>, vector<8x16x128xbf16>
    %154 = vector.shape_cast %153 : vector<8x16x128xbf16> to vector<128x128xbf16>
    %c7_125 = arith.constant 7 : index
    %c0_126 = arith.constant 0 : index
    %c0_127 = arith.constant 0 : index
    %155 = vector.load %arg4[%c7_125, %c0_126, %c0_127] : memref<9x128x128xbf16, #tpu.memory_space<vmem>>, vector<1x128x128xbf16>
    %156 = vector.shape_cast %155 : vector<1x128x128xbf16> to vector<128x128xbf16>
    %cst_128 = arith.constant dense<0.000000e+00> : vector<128x128xf32>
    %157 = tpu.matmul %154, %156, %cst_128 {dimension_numbers = #tpu.dot_dimension_numbers<[1], [0], [0], [1], [0, 0, 1, 1], [], []>} : vector<128x128xbf16>, vector<128x128xbf16>, vector<128x128xf32> -> vector<128x128xf32>
    %158 = arith.addf %152, %157 : vector<128x128xf32>
    %c2_129 = arith.constant 2 : index
    %c2_130 = arith.constant 2 : index
    %c0_131 = arith.constant 0 : index
    %159 = vector.load %arg7[%c2_129, %c2_130, %c0_131] : memref<10x18x128xbf16, #tpu.memory_space<vmem>>, vector<8x16x128xbf16>
    %160 = vector.shape_cast %159 : vector<8x16x128xbf16> to vector<128x128xbf16>
    %c8_132 = arith.constant 8 : index
    %c0_133 = arith.constant 0 : index
    %c0_134 = arith.constant 0 : index
    %161 = vector.load %arg4[%c8_132, %c0_133, %c0_134] : memref<9x128x128xbf16, #tpu.memory_space<vmem>>, vector<1x128x128xbf16>
    %162 = vector.shape_cast %161 : vector<1x128x128xbf16> to vector<128x128xbf16>
    %cst_135 = arith.constant dense<0.000000e+00> : vector<128x128xf32>
    %163 = tpu.matmul %160, %162, %cst_135 {dimension_numbers = #tpu.dot_dimension_numbers<[1], [0], [0], [1], [0, 0, 1, 1], [], []>} : vector<128x128xbf16>, vector<128x128xbf16>, vector<128x128xf32> -> vector<128x128xf32>
    %164 = arith.addf %158, %163 : vector<128x128xf32>
    %165 = vector.extract_strided_slice %2 {offsets = [3, 0], sizes = [1, 128], strides = [1, 1]} : vector<6x128xf32> to vector<1x128xf32>
    %166 = vector.broadcast %165 : vector<1x128xf32> to vector<128x128xf32>
    %167 = arith.addf %164, %166 : vector<128x128xf32>
    %cst_136 = arith.constant 3.33333325 : f32
    %168 = vector.broadcast %cst_136 : f32 to vector<128x128xf32>
    %169 = arith.mulf %167, %168 : vector<128x128xf32>
    %cst_137 = arith.constant 1.000000e+00 : f32
    %170 = vector.broadcast %cst_137 : f32 to vector<128x128xf32>
    %171 = arith.subf %170, %167 : vector<128x128xf32>
    %cst_138 = arith.constant 3.33333325 : f32
    %172 = vector.broadcast %cst_138 : f32 to vector<128x128xf32>
    %173 = arith.mulf %171, %172 : vector<128x128xf32>
    %174 = arith.minimumf %169, %173 : vector<128x128xf32>
    %cst_139 = arith.constant 0.000000e+00 : f32
    %175 = vector.broadcast %cst_139 : f32 to vector<128x128xf32>
    %176 = arith.maximumf %174, %175 : vector<128x128xf32>
    %177 = vector.extract_strided_slice %2 {offsets = [4, 0], sizes = [1, 128], strides = [1, 1]} : vector<6x128xf32> to vector<1x128xf32>
    %178 = vector.broadcast %177 : vector<1x128xf32> to vector<128x128xf32>
    %179 = arith.mulf %176, %178 : vector<128x128xf32>
    %180 = vector.extract_strided_slice %2 {offsets = [5, 0], sizes = [1, 128], strides = [1, 1]} : vector<6x128xf32> to vector<1x128xf32>
    %181 = vector.broadcast %180 : vector<1x128xf32> to vector<128x128xf32>
    %182 = arith.addf %179, %181 : vector<128x128xf32>
    %cst_140 = arith.constant 0.000000e+00 : f32
    %183 = vector.broadcast %cst_140 : f32 to vector<128x128xf32>
    %184 = arith.maximumf %182, %183 : vector<128x128xf32>
    %c0_141 = arith.constant 0 : index
    %c0_142 = arith.constant 0 : index
    %c0_143 = arith.constant 0 : index
    %185 = vector.load %arg6[%c0_141, %c0_142, %c0_143] : memref<1x128x128xf32, #tpu.memory_space<vmem>>, vector<1x128x128xf32>
    %186 = vector.shape_cast %185 : vector<1x128x128xf32> to vector<128x128xf32>
    %187 = vector.shape_cast %184 : vector<128x128xf32> to vector<1x128x128xf32>
    tpu.vector_store %arg6[%c0_141, %c0_142, %c0_143], %187 {strides = array<i32>} : memref<1x128x128xf32, #tpu.memory_space<vmem>>, vector<1x128x128xf32>,
    return
  }
  func.func @transform_0(%arg0: i32, %arg1: i32) -> (i32, i32, i32, i32) {
    %c0_i32 = arith.constant 0 : i32
    %c0_i32_0 = arith.constant 0 : i32
    %c0_i32_1 = arith.constant 0 : i32
    %c0_i32_2 = arith.constant 0 : i32
    return %arg0, %c0_i32, %c0_i32_0, %c0_i32_1 : i32, i32, i32, i32
  }
  func.func @transform_1(%arg0: i32, %arg1: i32) -> (i32, i32, i32) {
    %c0_i32 = arith.constant 0 : i32
    %c0_i32_0 = arith.constant 0 : i32
    %c0_i32_1 = arith.constant 0 : i32
    %c0_i32_2 = arith.constant 0 : i32
    return %c0_i32, %c0_i32_0, %c0_i32_1 : i32, i32, i32
  }
  func.func @transform_2(%arg0: i32, %arg1: i32) -> (i32, i32, i32) {
    %c0_i32 = arith.constant 0 : i32
    %c0_i32_0 = arith.constant 0 : i32
    %c0_i32_1 = arith.constant 0 : i32
    %c0_i32_2 = arith.constant 0 : i32
    return %c0_i32, %c0_i32_0, %c0_i32_1 : i32, i32, i32
  }
  func.func @transform_3(%arg0: i32, %arg1: i32) -> (i32, i32) {
    %c0_i32 = arith.constant 0 : i32
    %c0_i32_0 = arith.constant 0 : i32
    %c0_i32_1 = arith.constant 0 : i32
    return %c0_i32, %c0_i32_0 : i32, i32
  }
  func.func @transform_4(%arg0: i32, %arg1: i32) -> (i32, i32, i32) {
    %c0_i32 = arith.constant 0 : i32
    %c0_i32_0 = arith.constant 0 : i32
    return %arg0, %arg1, %c0_i32 : i32, i32, i32
  }
}

</mosaic_0001>

<llo_original>
// kernel: double_conv.1
$region0: #{double_conv.1}
  #allocation0 [shape = 'u32[]', space=smem, size = 0x4, offset = 0x4, fixed_abs, tag = 'smem constant byte address 0x4 - core index']
  #allocation1 [shape = 'u32[144,128]{1,0:T(1,128)}', space=vmem, size = 0x12000, scoped, tag = 'internal scratch']
  #allocation2 [shape = 'bf16[10,18,128]{2,1,0:T(8,128)(2,1)}', space=vmem, size = 0xf000, scoped, tag = 'scratch operand']
  %s0 = inlined_call_operand.vmem [shape: bf16[2,20,18,8], index: 0, kind: input, shape index: {}]
  %s1 = inlined_call_operand.vmem [shape: bf16[9,8,128], index: 1, kind: input, shape index: {}]
  %s2 = inlined_call_operand.vmem [shape: bf16[9,128,128], index: 2, kind: input, shape index: {}]
  %s3 = inlined_call_operand.vmem [shape: f32[6,128], index: 3, kind: input, shape index: {}]
  %s4 = inlined_call_operand.hbm [shape: f32[2,256,128], index: 4, kind: output, shape index: {}]
  %s5 = sld [smem:[#allocation0]]
  $region57: #{double_conv.1} parent=0
    _
  %s7 = ssub.s32 1, %s5
  %s8 = scalar_select 0, %s7, %s5
  $region1: #{double_conv.1} parent=0
    #allocation3 [shape = 'u8[131072]{0}', space=vmem, size = 0x20000, scoped, tag = 'output window, operand 0']
    #allocation4 [shape = 's32[2]{0}', space=sflag, size = 0x8, scoped, tag = 'scoped memory for double_conv.1']
    %9 = vsyncpa [#allocation4], 0
    %s10 = scalar_lea.sflag [#allocation4], 1
    %11 = vsyncpa %s10, 0
    loop: start=0, step=1, limit=6
    $region2: #{double_conv.1} parent=1 // loop_pre_header
      _
    $region3: #{double_conv.1} parent=1 // loop_header
      %s13 = sphi 0, %s17
      %p14 = scmp.ge.s32.totalorder %s13, 6
      %s20 = sphi 0, %s32
      %s21 = sphi 0, %s28
      %s22 = sphi 0, %s20
      %s23 = sphi 0, %s21
      %s24 = sphi 0, %s22
      %s25 = sphi 0, %s23
      %s35 = sphi 0, %s37
      %s38 = sphi 0, %s35
      %s39 = sphi 0, %s38
      %s55 = sphi 0, %s39
      %s59 = sphi 0, %s59
      %s61 = sphi 0, %s59
      %s62 = sphi 0, %s61
      %s76 = sphi 0, %s62
      %s80 = sphi 0, %s80
      %s82 = sphi 0, %s80
      %s83 = sphi 0, %s82
      %s97 = sphi 0, %s83
      %s101 = sphi 0, %s101
      %s103 = sphi 0, %s101
      %s104 = sphi 0, %s103
      %s118 = sphi 0, %s104
      %s126 = sphi 0, %s128
      %s129 = sphi 0, %s126
      %s130 = sphi 0, %s129
      %s146 = sphi 0, %s130
    $region4: #{double_conv.1} parent=1 // loop_header_branch
      %16 = sbr.rel (%p14) target = $region8
    $region5: #{double_conv.1} parent=1 // loop_body
      %s18 = ssub.s32 %s13, 1
      %s19 = ssub.s32 %s13, 2
      %s26 = sadd.s32 1, %s21
      %p27 = scmp.ge.s32.totalorder %s26, 2
      %s28 = scalar_select %p27, 0, %s26
      %s29 = sadd.s32 1, %s20
      %s30 = scalar_select %p27, %s29, %s20
      %p31 = scmp.ge.s32.totalorder %s30, 2
      %s32 = scalar_select %p31, 0, %s30
      %s33 = ssub.s32 %s20, %s32
      %p34 = scmp.eq.s32.totalorder %s33, 0
      %s36 = sadd.s32 %s35, 1
      %s37 = scalar_select %p34, %s35, %s36
      %p40 = pneg %p34
      %p41 = scmp.eq.s32.totalorder %s13, 3
      %p42 = por %p40, %p41
      %p43 = scmp.ne.s32.totalorder %s35, %s38
      %p44 = scmp.eq.s32.totalorder %s13, 0
      %p45 = por %p43, %p44
      %p46 = scmp.ne.s32.totalorder %s35, %s38
      %p47 = scmp.eq.s32.totalorder %s18, 3
      %p48 = por %p46, %p47
      %p49 = scmp.ne.s32.totalorder %s38, %s39
      %p50 = scmp.eq.s32.totalorder %s18, 0
      %p51 = por %p49, %p50
      %p52 = scmp.ne.s32.totalorder %s38, %s39
      %p53 = scmp.eq.s32.totalorder %s19, 3
      %p54 = por %p52, %p53
      %p56 = scmp.ne.s32.totalorder %s39, %s55
      %p57 = scmp.eq.s32.totalorder %s19, 0
      %p58 = por %p56, %p57
      %s60 = sadd.s32 %s59, 1
      %p63 = scmp.eq.s32.totalorder %s13, 3
      %p64 = scmp.ne.s32.totalorder %s59, %s61
      %p65 = scmp.eq.s32.totalorder %s13, 0
      %p66 = por %p64, %p65
      %p67 = scmp.ne.s32.totalorder %s59, %s61
      %p68 = scmp.eq.s32.totalorder %s18, 3
      %p69 = por %p67, %p68
      %p70 = scmp.ne.s32.totalorder %s61, %s62
      %p71 = scmp.eq.s32.totalorder %s18, 0
      %p72 = por %p70, %p71
      %p73 = scmp.ne.s32.totalorder %s61, %s62
      %p74 = scmp.eq.s32.totalorder %s19, 3
      %p75 = por %p73, %p74
      %p77 = scmp.ne.s32.totalorder %s62, %s76
      %p78 = scmp.eq.s32.totalorder %s19, 0
      %p79 = por %p77, %p78
      %s81 = sadd.s32 %s80, 1
      %p84 = scmp.eq.s32.totalorder %s13, 3
      %p85 = scmp.ne.s32.totalorder %s80, %s82
      %p86 = scmp.eq.s32.totalorder %s13, 0
      %p87 = por %p85, %p86
      %p88 = scmp.ne.s32.totalorder %s80, %s82
      %p89 = scmp.eq.s32.totalorder %s18, 3
      %p90 = por %p88, %p89
      %p91 = scmp.ne.s32.totalorder %s82, %s83
      %p92 = scmp.eq.s32.totalorder %s18, 0
      %p93 = por %p91, %p92
      %p94 = scmp.ne.s32.totalorder %s82, %s83
      %p95 = scmp.eq.s32.totalorder %s19, 3
      %p96 = por %p94, %p95
      %p98 = scmp.ne.s32.totalorder %s83, %s97
      %p99 = scmp.eq.s32.totalorder %s19, 0
      %p100 = por %p98, %p99
      %s102 = sadd.s32 %s101, 1
      %p105 = scmp.eq.s32.totalorder %s13, 3
      %p106 = scmp.ne.s32.totalorder %s101, %s103
      %p107 = scmp.eq.s32.totalorder %s13, 0
      %p108 = por %p106, %p107
      %p109 = scmp.ne.s32.totalorder %s101, %s103
      %p110 = scmp.eq.s32.totalorder %s18, 3
      %p111 = por %p109, %p110
      %p112 = scmp.ne.s32.totalorder %s103, %s104
      %p113 = scmp.eq.s32.totalorder %s18, 0
      %p114 = por %p112, %p113
      %p115 = scmp.ne.s32.totalorder %s103, %s104
      %p116 = scmp.eq.s32.totalorder %s19, 3
      %p117 = por %p115, %p116
      %p119 = scmp.ne.s32.totalorder %s104, %s118
      %p120 = scmp.eq.s32.totalorder %s19, 0
      %p121 = por %p119, %p120
      %s122 = ssub.s32 %s20, %s32
      %s123 = ssub.s32 %s21, %s28
      %s124 = sor.u32 %s122, %s123
      %p125 = scmp.eq.s32.totalorder %s124, 0
      %s127 = sadd.s32 %s126, 1
      %s128 = scalar_select %p125, %s126, %s127
      %p131 = pneg %p125
      %p132 = scmp.eq.s32.totalorder %s13, 3
      %p133 = por %p131, %p132
      %p134 = scmp.ne.s32.totalorder %s126, %s129
      %p135 = scmp.eq.s32.totalorder %s13, 0
      %p136 = por %p134, %p135
      %p137 = scmp.ne.s32.totalorder %s126, %s129
      %p138 = scmp.eq.s32.totalorder %s18, 3
      %p139 = por %p137, %p138
      %p140 = scmp.ne.s32.totalorder %s129, %s130
      %p141 = scmp.eq.s32.totalorder %s18, 0
      %p142 = por %p140, %p141
      %p143 = scmp.ne.s32.totalorder %s129, %s130
      %p144 = scmp.eq.s32.totalorder %s19, 3
      %p145 = por %p143, %p144
      %p147 = scmp.ne.s32.totalorder %s130, %s146
      %p148 = scmp.eq.s32.totalorder %s19, 0
      %p149 = por %p147, %p148
      %p150 = scmp.le.s32.totalorder 1, %s13
      %p151 = scmp.lt.s32.totalorder %s13, 5
      %p152 = pnand %p150, %p151
      %p153 = pneg %p152
      // Predicated region
      $region9: #{double_conv.1} parent=5 // pred_check
        _
      $region10: #{double_conv.1} parent=5 // pred_check_branch
        %155 = sbr.rel (%p152) target = $region12
      $region11: #{double_conv.1} parent=5 // pred_region
        %s156 = ssub.s32 %s13, 1
        // Predicated region
        $region13: #{double_conv.1} parent=11 // pred_check
          %p157 = pneg %p72
        $region14: #{double_conv.1} parent=11 // pred_check_branch
          %159 = sbr.rel (%p157) target = $region16
        $region15: #{double_conv.1} parent=11 // pred_region
          _
        $region16: #{double_conv.1} parent=11 // pred_fallthru
          _
        // Predicated region
        $region17: #{double_conv.1} parent=11 // pred_check
          %p160 = pneg %p93
        $region18: #{double_conv.1} parent=11 // pred_check_branch
          %162 = sbr.rel (%p160) target = $region20
        $region19: #{double_conv.1} parent=11 // pred_region
          _
        $region20: #{double_conv.1} parent=11 // pred_fallthru
          _
        // Predicated region
        $region21: #{double_conv.1} parent=11 // pred_check
          %p163 = pneg %p114
        $region22: #{double_conv.1} parent=11 // pred_check_branch
          %165 = sbr.rel (%p163) target = $region24
        $region23: #{double_conv.1} parent=11 // pred_region
          _
        $region24: #{double_conv.1} parent=11 // pred_fallthru
          _
      $region12: #{double_conv.1} parent=5 // pred_fallthru
        _
      %p166 = scmp.lt.s32.totalorder %s13, 4
      // Predicated region
      $region25: #{double_conv.1} parent=5 // pred_check
        %p167 = pneg %p166
      $region26: #{double_conv.1} parent=5 // pred_check_branch
        %169 = sbr.rel (%p167) target = $region28
      $region27: #{double_conv.1} parent=5 // pred_region
        // Predicated region
        $region29: #{double_conv.1} parent=27 // pred_check
          %p170 = pneg %p45
        $region30: #{double_conv.1} parent=27 // pred_check_branch
          %172 = sbr.rel (%p170) target = $region32
        $region31: #{double_conv.1} parent=27 // pred_region
          %p173 = scmp.lt.s32.totalorder %s20, 1
          %s174 = scalar_select %p173, %s20, 1
          %s175 = smul.addr %s174, 60
          %s176 = smul.addr %s175, 4
          %s177 = scalar_lea.vmem %s0, %s176
        $region32: #{double_conv.1} parent=27 // pred_fallthru
          _
      $region28: #{double_conv.1} parent=5 // pred_fallthru
        _
      %p178 = scmp.le.s32.totalorder 1, %s13
      %p179 = scmp.lt.s32.totalorder %s13, 5
      %p180 = pnand %p178, %p179
      %p181 = pneg %p180
      // Predicated region
      $region33: #{double_conv.1} parent=5 // pred_check
        _
      $region34: #{double_conv.1} parent=5 // pred_check_branch
        %183 = sbr.rel (%p180) target = $region36
      $region35: #{double_conv.1} parent=5 // pred_region
        %s184 = ssub.s32 %s13, 1
        %p185 = scmp.lt.s32.totalorder %s22, 1
        %s186 = scalar_select %p185, %s22, 1
        %s187 = smul.addr %s186, 60
        %s188 = smul.addr %s187, 4
        %s189 = scalar_lea.vmem %s0, %s188
        %p190 = pneg %p51
        %p191 = pneg %p48
        %p192 = pneg %p72
        %p193 = pneg %p69
        %p194 = pneg %p93
        %p195 = pneg %p90
        %p196 = pneg %p114
        %p197 = pneg %p111
        %p198 = pneg %p142
        %p199 = pneg %p139
        %s200 = sand.u32 %s129, 1
        %s201 = scalar_lea.sflag [#allocation4], %s200
        %s202 = sand.u32 %s129, 1
        %s203 = smul.addr %s202, 128
        %s204 = scalar_lea.vmem [#allocation3], %s203
        %p205 = scmp.lt.s32.totalorder %s22, 1
        %s206 = scalar_select %p205, %s22, 1
        %s207 = smul.addr %s206, 60
        %s208 = smul.addr %s207, 4
        %s209 = scalar_lea.vmem %s0, %s208
        %s210 = smul.u32 16, %s23
        %s212 = smul.u32 %s23, 8
        %v213 = vld [vmem:[%s3] sm:$0x3f]
        %s214 = smul.u32 %s212, 3
        %s215 = smul.addr %s214, 4
        %s216 = scalar_lea.vmem %s209, %s215
        %v217 = vld [vmem:[%s216] sm:$0xf]
        %v218 = vld [vmem:[%s216 + $0x4] sm:$0xf]
        %v219 = vld [vmem:[%s216 + $0xc] sm:$0xf]
        %v220 = vld [vmem:[%s216 + $0x10] sm:$0xf]
        %v221 = vld [vmem:[%s216 + $0x18] sm:$0xf]
        %v222 = vld [vmem:[%s216 + $0x1c] sm:$0xf]
        %v223 = vld [vmem:[%s216 + $0x24] sm:$0xf]
        %v224 = vld [vmem:[%s216 + $0x28] sm:$0xf]
        %v225 = vld [vmem:[%s216 + $0x30] sm:$0xf]
        %v226 = vld [vmem:[%s216 + $0x34] sm:$0xf]
        %v227 = vld [vmem:[%s216 + $0x3c] sm:$0xf]
        %v228 = vld [vmem:[%s216 + $0x40] sm:$0xf]
        %v229 = vld [vmem:[%s216 + $0x48] sm:$0xf]
        %v230 = vld [vmem:[%s216 + $0x4c] sm:$0xf]
        %v231 = vld [vmem:[%s216 + $0x54] sm:$0xf]
        %v232 = vld [vmem:[%s216 + $0x58] sm:$0xf]
        %v233 = vld [vmem:[%s216 + $0x60] sm:$0xf]
        %v234 = vld [vmem:[%s216 + $0x64] sm:$0xf]
        %v235 = vld [vmem:[%s216 + $0x6c] sm:$0xf]
        %v236 = vld [vmem:[%s216 + $0x70] sm:$0xf]
        %v237 = vld [vmem:[%s1] sm:$0xf]
        %v238 = vld [vmem:[%s216 + $0x8] sm:$0x1]
        %v239 = vld [vmem:[%s216 + $0x14] sm:$0x1]
        %v240 = vld [vmem:[%s216 + $0x20] sm:$0x1]
        %v241 = vld [vmem:[%s216 + $0x2c] sm:$0x1]
        %v242 = vld [vmem:[%s216 + $0x38] sm:$0x1]
        %v243 = vld [vmem:[%s216 + $0x44] sm:$0x1]
        %v244 = vld [vmem:[%s216 + $0x50] sm:$0x1]
        %v245 = vld [vmem:[%s216 + $0x5c] sm:$0x1]
        %v246 = vld [vmem:[%s216 + $0x68] sm:$0x1]
        %v247 = vld [vmem:[%s216 + $0x74] sm:$0x1]
        %vm248 = vsmask.f32 3328
        %vm249 = vsmask.f32 7440
        %vm250 = vmor %vm248, %vm249
        %v252 = vshrl.u32 %v217, 16
        %v254 = vrot.slane %v252, 4
        %v255 = vshll.u32 %v217, 16
        %v257 = vrot.slane %v255, 5
        %v258 = vor.u32 %v254, %v257
        %v259 = vrot.slane %v258, 4
        %v261 = vshll.u32 %v218, 16
        %v263 = vrot.slane %v261, 5
        %v264 = vsel %vm250, %v259, %v263
        %v265 = vshrl.u32 %v218, 16
        %v267 = vrot.slane %v265, 4
        %v268 = vor.u32 %v267, %v263
        %v269 = vrot.slane %v268, 4
        %v271 = vshll.u32 %v238, 16
        %v273 = vrot.slane %v271, 5
        %v274 = vsel %vm250, %v269, %v273
        %v276 = vshrl.u32 %v219, 16
        %v278 = vrot.slane %v276, 4
        %v279 = vshll.u32 %v219, 16
        %v281 = vrot.slane %v279, 5
        %v282 = vor.u32 %v278, %v281
        %v283 = vrot.slane %v282, 4
        %v285 = vshll.u32 %v220, 16
        %v287 = vrot.slane %v285, 5
        %v288 = vsel %vm250, %v283, %v287
        %v289 = vshrl.u32 %v220, 16
        %v291 = vrot.slane %v289, 4
        %v292 = vor.u32 %v291, %v287
        %v293 = vrot.slane %v292, 4
        %v295 = vshll.u32 %v239, 16
        %v297 = vrot.slane %v295, 5
        %v298 = vsel %vm250, %v293, %v297
        %v300 = vshrl.u32 %v221, 16
        %v302 = vrot.slane %v300, 4
        %v303 = vshll.u32 %v221, 16
        %v305 = vrot.slane %v303, 5
        %v306 = vor.u32 %v302, %v305
        %v307 = vrot.slane %v306, 4
        %v309 = vshll.u32 %v222, 16
        %v311 = vrot.slane %v309, 5
        %v312 = vsel %vm250, %v307, %v311
        %v313 = vshrl.u32 %v222, 16
        %v315 = vrot.slane %v313, 4
        %v316 = vor.u32 %v315, %v311
        %v317 = vrot.slane %v316, 4
        %v319 = vshll.u32 %v240, 16
        %v321 = vrot.slane %v319, 5
        %v322 = vsel %vm250, %v317, %v321
        %v324 = vshrl.u32 %v223, 16
        %v326 = vrot.slane %v324, 4
        %v327 = vshll.u32 %v223, 16
        %v329 = vrot.slane %v327, 5
        %v330 = vor.u32 %v326, %v329
        %v331 = vrot.slane %v330, 4
        %v333 = vshll.u32 %v224, 16
        %v335 = vrot.slane %v333, 5
        %v336 = vsel %vm250, %v331, %v335
        %v337 = vshrl.u32 %v224, 16
        %v339 = vrot.slane %v337, 4
        %v340 = vor.u32 %v339, %v335
        %v341 = vrot.slane %v340, 4
        %v343 = vshll.u32 %v241, 16
        %v345 = vrot.slane %v343, 5
        %v346 = vsel %vm250, %v341, %v345
        %v348 = vshrl.u32 %v225, 16
        %v350 = vrot.slane %v348, 4
        %v351 = vshll.u32 %v225, 16
        %v353 = vrot.slane %v351, 5
        %v354 = vor.u32 %v350, %v353
        %v355 = vrot.slane %v354, 4
        %v357 = vshll.u32 %v226, 16
        %v359 = vrot.slane %v357, 5
        %v360 = vsel %vm250, %v355, %v359
        %v361 = vshrl.u32 %v226, 16
        %v363 = vrot.slane %v361, 4
        %v364 = vor.u32 %v363, %v359
        %v365 = vrot.slane %v364, 4
        %v367 = vshll.u32 %v242, 16
        %v369 = vrot.slane %v367, 5
        %v370 = vsel %vm250, %v365, %v369
        %v372 = vshrl.u32 %v227, 16
        %v374 = vrot.slane %v372, 4
        %v375 = vshll.u32 %v227, 16
        %v377 = vrot.slane %v375, 5
        %v378 = vor.u32 %v374, %v377
        %v379 = vrot.slane %v378, 4
        %v381 = vshll.u32 %v228, 16
        %v383 = vrot.slane %v381, 5
        %v384 = vsel %vm250, %v379, %v383
        %v385 = vshrl.u32 %v228, 16
        %v387 = vrot.slane %v385, 4
        %v388 = vor.u32 %v387, %v383
        %v389 = vrot.slane %v388, 4
        %v391 = vshll.u32 %v243, 16
        %v393 = vrot.slane %v391, 5
        %v394 = vsel %vm250, %v389, %v393
        %v396 = vshrl.u32 %v229, 16
        %v398 = vrot.slane %v396, 4
        %v399 = vshll.u32 %v229, 16
        %v401 = vrot.slane %v399, 5
        %v402 = vor.u32 %v398, %v401
        %v403 = vrot.slane %v402, 4
        %v405 = vshll.u32 %v230, 16
        %v407 = vrot.slane %v405, 5
        %v408 = vsel %vm250, %v403, %v407
        %v409 = vshrl.u32 %v230, 16
        %v411 = vrot.slane %v409, 4
        %v412 = vor.u32 %v411, %v407
        %v413 = vrot.slane %v412, 4
        %v415 = vshll.u32 %v244, 16
        %v417 = vrot.slane %v415, 5
        %v418 = vsel %vm250, %v413, %v417
        %v420 = vshrl.u32 %v231, 16
        %v422 = vrot.slane %v420, 4
        %v423 = vshll.u32 %v231, 16
        %v425 = vrot.slane %v423, 5
        %v426 = vor.u32 %v422, %v425
        %v427 = vrot.slane %v426, 4
        %v429 = vshll.u32 %v232, 16
        %v431 = vrot.slane %v429, 5
        %v432 = vsel %vm250, %v427, %v431
        %v433 = vshrl.u32 %v232, 16
        %v435 = vrot.slane %v433, 4
        %v436 = vor.u32 %v435, %v431
        %v437 = vrot.slane %v436, 4
        %v439 = vshll.u32 %v245, 16
        %v441 = vrot.slane %v439, 5
        %v442 = vsel %vm250, %v437, %v441
        %v444 = vshrl.u32 %v233, 16
        %v446 = vrot.slane %v444, 4
        %v447 = vshll.u32 %v233, 16
        %v449 = vrot.slane %v447, 5
        %v450 = vor.u32 %v446, %v449
        %v451 = vrot.slane %v450, 4
        %v453 = vshll.u32 %v234, 16
        %v455 = vrot.slane %v453, 5
        %v456 = vsel %vm250, %v451, %v455
        %v457 = vshrl.u32 %v234, 16
        %v459 = vrot.slane %v457, 4
        %v460 = vor.u32 %v459, %v455
        %v461 = vrot.slane %v460, 4
        %v463 = vshll.u32 %v246, 16
        %v465 = vrot.slane %v463, 5
        %v466 = vsel %vm250, %v461, %v465
        %v468 = vshrl.u32 %v235, 16
        %v470 = vrot.slane %v468, 4
        %v471 = vshll.u32 %v235, 16
        %v473 = vrot.slane %v471, 5
        %v474 = vor.u32 %v470, %v473
        %v475 = vrot.slane %v474, 4
        %v477 = vshll.u32 %v236, 16
        %v479 = vrot.slane %v477, 5
        %v480 = vsel %vm250, %v475, %v479
        %v481 = vshrl.u32 %v236, 16
        %v483 = vrot.slane %v481, 4
        %v484 = vor.u32 %v483, %v479
        %v485 = vrot.slane %v484, 4
        %v487 = vshll.u32 %v247, 16
        %v489 = vrot.slane %v487, 5
        %v490 = vsel %vm250, %v485, %v489
        %s491 = scalar_lea.vmem %s1, 4
        %v492 = vld [vmem:[%s491] sm:$0xf]
        %v493 = vunpack.c.l.b16 %v264
        %v494 = vunpack.c.l.b16 %v274
        %v495 = vunpack.c.l.b16 %v288
        %v496 = vunpack.c.l.b16 %v298
        %v497 = vunpack.c.l.b16 %v312
        %v498 = vunpack.c.l.b16 %v322
        %v499 = vunpack.c.l.b16 %v336
        %v500 = vunpack.c.l.b16 %v346
        %v501 = vunpack.c.l.b16 %v360
        %v502 = vunpack.c.l.b16 %v370
        %v503 = vunpack.c.l.b16 %v384
        %v504 = vunpack.c.l.b16 %v394
        %v505 = vunpack.c.l.b16 %v408
        %v506 = vunpack.c.l.b16 %v418
        %v507 = vunpack.c.l.b16 %v432
        %v508 = vunpack.c.l.b16 %v442
        %v509 = vunpack.c.l.b16 %v456
        %v510 = vunpack.c.l.b16 %v466
        %v511 = vunpack.c.l.b16 %v480
        %v512 = vunpack.c.l.b16 %v490
        %v513 = vpack.c.b16 %v494, %v493
        %v514 = vpack.c.b16 %v496, %v495
        %v515 = vpack.c.b16 %v498, %v497
        %v516 = vpack.c.b16 %v500, %v499
        %v517 = vpack.c.b16 %v502, %v501
        %v518 = vpack.c.b16 %v504, %v503
        %v519 = vpack.c.b16 %v506, %v505
        %v520 = vpack.c.b16 %v508, %v507
        %v521 = vpack.c.b16 %v510, %v509
        %v522 = vpack.c.b16 %v512, %v511
        %vm523 = vcmask 64512
        %v525 = vsel %vm523, %v513, 0
        %v528 = vsel %vm523, %v514, 0
        %v531 = vsel %vm523, %v515, 0
        %v534 = vsel %vm523, %v516, 0
        %v537 = vsel %vm523, %v517, 0
        %v540 = vsel %vm523, %v518, 0
        %v543 = vsel %vm523, %v519, 0
        %v546 = vsel %vm523, %v520, 0
        %v549 = vsel %vm523, %v521, 0
        %v552 = vsel %vm523, %v522, 0
        %vm554 = vcmask 1043456
        %v556 = vsel %vm554, %v492, 0
        %558 = vmatprep.subr.bf16.mxu0 0
        %559 = vmatpush1.bf16.msra.mxu0 0
        %560 = vmatprep.subr.bf16.mxu0 0
        %561 = vmatpush1.bf16.msra.mxu0 0
        %562 = vmatprep.subr.bf16.mxu0 0
        %563 = vmatpush1.bf16.msra.mxu0 0
        %564 = vmatprep.subr.bf16.mxu0 0
        %565 = vmatpush1.bf16.msra.mxu0 0
        %566 = vmatprep.subr.bf16.mxu0 0
        %567 = vmatpush1.bf16.msra.mxu0 0
        %568 = vmatprep.subr.bf16.mxu0 0
        %569 = vmatpush1.bf16.msra.mxu0 0
        %570 = vmatprep.subr.bf16.mxu0 0
        %571 = vmatpush1.bf16.msra.mxu0 0
        %572 = vmatprep.subr.bf16.mxu0 0
        %573 = vmatpush1.bf16.msra.mxu0 %v556
        %574 = vmatprep.subr.bf16.mxu0 0
        %575 = vmatpush2.bf16.msra.mxu0 0
        %576 = vmatprep.subr.bf16.mxu0 0
        %577 = vmatpush2.bf16.msra.mxu0 0
        %578 = vmatprep.subr.bf16.mxu0 0
        %579 = vmatpush2.bf16.msra.mxu0 0
        %580 = vmatprep.subr.bf16.mxu0 0
        %581 = vmatpush2.bf16.msra.mxu0 0
        %582 = vmatprep.subr.bf16.mxu0 0
        %583 = vmatpush2.bf16.msra.mxu0 0
        %584 = vmatprep.subr.bf16.mxu0 0
        %585 = vmatpush2.bf16.msra.mxu0 0
        %586 = vmatprep.subr.bf16.mxu0 0
        %587 = vmatpush2.bf16.msra.mxu0 0
        %588 = vmatprep.subr.bf16.mxu0 0
        %589 = vmatpush2.bf16.msra.mxu0 0
        %590 = vmatprep.mubr.bf16.mxu0 0
        %591 = vmatmul.mubr.bf16.gmra.mxu0 %v525
        %v592 = vpop.f32.mrf.mxu0
        %v593 = vadd.f32 0.0, %v592
        %v594 = vpop.f32.mrf.mxu0
        %v595 = vpop.f32.mrf.mxu0
        %v596 = vadd.f32 0.0, %v595
        %v597 = vpop.f32.mrf.mxu0
        %598 = vmatprep.mubr.bf16.mxu0 0
        %599 = vmatmul.mubr.bf16.gmra.mxu0 %v528
        %v600 = vpop.f32.mrf.mxu0
        %v601 = vadd.f32 0.0, %v600
        %v602 = vpop.f32.mrf.mxu0
        %v603 = vpop.f32.mrf.mxu0
        %v604 = vadd.f32 0.0, %v603
        %v605 = vpop.f32.mrf.mxu0
        %606 = vmatprep.mubr.bf16.mxu0 0
        %607 = vmatmul.mubr.bf16.gmra.mxu0 %v531
        %v608 = vpop.f32.mrf.mxu0
        %v609 = vadd.f32 0.0, %v608
        %v610 = vpop.f32.mrf.mxu0
        %v611 = vpop.f32.mrf.mxu0
        %v612 = vadd.f32 0.0, %v611
        %v613 = vpop.f32.mrf.mxu0
        %614 = vmatprep.mubr.bf16.mxu0 0
        %615 = vmatmul.mubr.bf16.gmra.mxu0 %v534
        %v616 = vpop.f32.mrf.mxu0
        %v617 = vadd.f32 0.0, %v616
        %v618 = vpop.f32.mrf.mxu0
        %v619 = vpop.f32.mrf.mxu0
        %v620 = vadd.f32 0.0, %v619
        %v621 = vpop.f32.mrf.mxu0
        %622 = vmatprep.mubr.bf16.mxu0 0
        %623 = vmatmul.mubr.bf16.gmra.mxu0 %v537
        %v624 = vpop.f32.mrf.mxu0
        %v625 = vadd.f32 0.0, %v624
        %v626 = vpop.f32.mrf.mxu0
        %v627 = vpop.f32.mrf.mxu0
        %v628 = vadd.f32 0.0, %v627
        %v629 = vpop.f32.mrf.mxu0
        %630 = vmatprep.mubr.bf16.mxu0 0
        %631 = vmatmul.mubr.bf16.gmra.mxu0 %v540
        %v632 = vpop.f32.mrf.mxu0
        %v633 = vadd.f32 0.0, %v632
        %v634 = vpop.f32.mrf.mxu0
        %v635 = vpop.f32.mrf.mxu0
        %v636 = vadd.f32 0.0, %v635
        %v637 = vpop.f32.mrf.mxu0
        %638 = vmatprep.mubr.bf16.mxu0 0
        %639 = vmatmul.mubr.bf16.gmra.mxu0 %v543
        %v640 = vpop.f32.mrf.mxu0
        %v641 = vadd.f32 0.0, %v640
        %v642 = vpop.f32.mrf.mxu0
        %v643 = vpop.f32.mrf.mxu0
        %v644 = vadd.f32 0.0, %v643
        %v645 = vpop.f32.mrf.mxu0
        %646 = vmatprep.mubr.bf16.mxu0 0
        %647 = vmatmul.mubr.bf16.gmra.mxu0 %v546
        %v648 = vpop.f32.mrf.mxu0
        %v649 = vadd.f32 0.0, %v648
        %v650 = vpop.f32.mrf.mxu0
        %v651 = vpop.f32.mrf.mxu0
        %v652 = vadd.f32 0.0, %v651
        %v653 = vpop.f32.mrf.mxu0
        %654 = vmatprep.mubr.bf16.mxu0 0
        %655 = vmatmul.mubr.bf16.gmra.mxu0 %v549
        %v656 = vpop.f32.mrf.mxu0
        %v657 = vadd.f32 0.0, %v656
        %v658 = vpop.f32.mrf.mxu0
        %v659 = vpop.f32.mrf.mxu0
        %v660 = vadd.f32 0.0, %v659
        %v661 = vpop.f32.mrf.mxu0
        %662 = vmatprep.mubr.bf16.mxu0 0
        %663 = vmatmul.mubr.bf16.gmra.mxu0 %v552
        %v664 = vpop.f32.mrf.mxu0
        %v665 = vadd.f32 0.0, %v664
        %v666 = vpop.f32.mrf.mxu0
        %v667 = vpop.f32.mrf.mxu0
        %v668 = vadd.f32 0.0, %v667
        %v669 = vpop.f32.mrf.mxu0
        %670 = vdwg.mxu0
        %v691 = vunpack.c.l.b16 %v217
        %v692 = vunpack.c.l.b16 %v218
        %v693 = vunpack.c.l.b16 %v219
        %v694 = vunpack.c.l.b16 %v220
        %v695 = vunpack.c.l.b16 %v221
        %v696 = vunpack.c.l.b16 %v222
        %v697 = vunpack.c.l.b16 %v223
        %v698 = vunpack.c.l.b16 %v224
        %v699 = vunpack.c.l.b16 %v225
        %v700 = vunpack.c.l.b16 %v226
        %v701 = vunpack.c.l.b16 %v227
        %v702 = vunpack.c.l.b16 %v228
        %v703 = vunpack.c.l.b16 %v229
        %v704 = vunpack.c.l.b16 %v230
        %v705 = vunpack.c.l.b16 %v231
        %v706 = vunpack.c.l.b16 %v232
        %v707 = vunpack.c.l.b16 %v233
        %v708 = vunpack.c.l.b16 %v234
        %v709 = vunpack.c.l.b16 %v235
        %v710 = vunpack.c.l.b16 %v236
        %v711 = vpack.c.b16 %v692, %v691
        %v712 = vpack.c.b16 %v694, %v693
        %v713 = vpack.c.b16 %v696, %v695
        %v714 = vpack.c.b16 %v698, %v697
        %v715 = vpack.c.b16 %v700, %v699
        %v716 = vpack.c.b16 %v702, %v701
        %v717 = vpack.c.b16 %v704, %v703
        %v718 = vpack.c.b16 %v706, %v705
        %v719 = vpack.c.b16 %v708, %v707
        %v720 = vpack.c.b16 %v710, %v709
        %v722 = vsel %vm523, %v711, 0
        %v725 = vsel %vm523, %v712, 0
        %v728 = vsel %vm523, %v713, 0
        %v731 = vsel %vm523, %v714, 0
        %v734 = vsel %vm523, %v715, 0
        %v737 = vsel %vm523, %v716, 0
        %v740 = vsel %vm523, %v717, 0
        %v743 = vsel %vm523, %v718, 0
        %v746 = vsel %vm523, %v719, 0
        %v749 = vsel %vm523, %v720, 0
        %v752 = vsel %vm554, %v237, 0
        %754 = vmatprep.subr.bf16.mxu0 0
        %755 = vmatpush1.bf16.msra.mxu0 0
        %756 = vmatprep.subr.bf16.mxu0 0
        %757 = vmatpush1.bf16.msra.mxu0 0
        %758 = vmatprep.subr.bf16.mxu0 0
        %759 = vmatpush1.bf16.msra.mxu0 0
        %760 = vmatprep.subr.bf16.mxu0 0
        %761 = vmatpush1.bf16.msra.mxu0 0
        %762 = vmatprep.subr.bf16.mxu0 0
        %763 = vmatpush1.bf16.msra.mxu0 0
        %764 = vmatprep.subr.bf16.mxu0 0
        %765 = vmatpush1.bf16.msra.mxu0 0
        %766 = vmatprep.subr.bf16.mxu0 0
        %767 = vmatpush1.bf16.msra.mxu0 0
        %768 = vmatprep.subr.bf16.mxu0 0
        %769 = vmatpush1.bf16.msra.mxu0 %v752
        %770 = vmatprep.subr.bf16.mxu0 0
        %771 = vmatpush2.bf16.msra.mxu0 0
        %772 = vmatprep.subr.bf16.mxu0 0
        %773 = vmatpush2.bf16.msra.mxu0 0
        %774 = vmatprep.subr.bf16.mxu0 0
        %775 = vmatpush2.bf16.msra.mxu0 0
        %776 = vmatprep.subr.bf16.mxu0 0
        %777 = vmatpush2.bf16.msra.mxu0 0
        %778 = vmatprep.subr.bf16.mxu0 0
        %779 = vmatpush2.bf16.msra.mxu0 0
        %780 = vmatprep.subr.bf16.mxu0 0
        %781 = vmatpush2.bf16.msra.mxu0 0
        %782 = vmatprep.subr.bf16.mxu0 0
        %783 = vmatpush2.bf16.msra.mxu0 0
        %784 = vmatprep.subr.bf16.mxu0 0
        %785 = vmatpush2.bf16.msra.mxu0 0
        %786 = vmatprep.mubr.bf16.mxu0 0
        %787 = vmatmul.mubr.bf16.gmra.mxu0 %v722
        %v788 = vpop.f32.mrf.mxu0
        %v789 = vadd.f32 %v593, %v788
        %v790 = vpop.f32.mrf.mxu0
        %v791 = vpop.f32.mrf.mxu0
        %v792 = vadd.f32 %v596, %v791
        %v793 = vpop.f32.mrf.mxu0
        %794 = vmatprep.mubr.bf16.mxu0 0
        %795 = vmatmul.mubr.bf16.gmra.mxu0 %v725
        %v796 = vpop.f32.mrf.mxu0
        %v797 = vadd.f32 %v601, %v796
        %v798 = vpop.f32.mrf.mxu0
        %v799 = vpop.f32.mrf.mxu0
        %v800 = vadd.f32 %v604, %v799
        %v801 = vpop.f32.mrf.mxu0
        %802 = vmatprep.mubr.bf16.mxu0 0
        %803 = vmatmul.mubr.bf16.gmra.mxu0 %v728
        %v804 = vpop.f32.mrf.mxu0
        %v805 = vadd.f32 %v609, %v804
        %v806 = vpop.f32.mrf.mxu0
        %v807 = vpop.f32.mrf.mxu0
        %v808 = vadd.f32 %v612, %v807
        %v809 = vpop.f32.mrf.mxu0
        %810 = vmatprep.mubr.bf16.mxu0 0
        %811 = vmatmul.mubr.bf16.gmra.mxu0 %v731
        %v812 = vpop.f32.mrf.mxu0
        %v813 = vadd.f32 %v617, %v812
        %v814 = vpop.f32.mrf.mxu0
        %v815 = vpop.f32.mrf.mxu0
        %v816 = vadd.f32 %v620, %v815
        %v817 = vpop.f32.mrf.mxu0
        %818 = vmatprep.mubr.bf16.mxu0 0
        %819 = vmatmul.mubr.bf16.gmra.mxu0 %v734
        %v820 = vpop.f32.mrf.mxu0
        %v821 = vadd.f32 %v625, %v820
        %v822 = vpop.f32.mrf.mxu0
        %v823 = vpop.f32.mrf.mxu0
        %v824 = vadd.f32 %v628, %v823
        %v825 = vpop.f32.mrf.mxu0
        %826 = vmatprep.mubr.bf16.mxu0 0
        %827 = vmatmul.mubr.bf16.gmra.mxu0 %v737
        %v828 = vpop.f32.mrf.mxu0
        %v829 = vadd.f32 %v633, %v828
        %v830 = vpop.f32.mrf.mxu0
        %v831 = vpop.f32.mrf.mxu0
        %v832 = vadd.f32 %v636, %v831
        %v833 = vpop.f32.mrf.mxu0
        %834 = vmatprep.mubr.bf16.mxu0 0
        %835 = vmatmul.mubr.bf16.gmra.mxu0 %v740
        %v836 = vpop.f32.mrf.mxu0
        %v837 = vadd.f32 %v641, %v836
        %v838 = vpop.f32.mrf.mxu0
        %v839 = vpop.f32.mrf.mxu0
        %v840 = vadd.f32 %v644, %v839
        %v841 = vpop.f32.mrf.mxu0
        %842 = vmatprep.mubr.bf16.mxu0 0
        %843 = vmatmul.mubr.bf16.gmra.mxu0 %v743
        %v844 = vpop.f32.mrf.mxu0
        %v845 = vadd.f32 %v649, %v844
        %v846 = vpop.f32.mrf.mxu0
        %v847 = vpop.f32.mrf.mxu0
        %v848 = vadd.f32 %v652, %v847
        %v849 = vpop.f32.mrf.mxu0
        %850 = vmatprep.mubr.bf16.mxu0 0
        %851 = vmatmul.mubr.bf16.gmra.mxu0 %v746
        %v852 = vpop.f32.mrf.mxu0
        %v853 = vadd.f32 %v657, %v852
        %v854 = vpop.f32.mrf.mxu0
        %v855 = vpop.f32.mrf.mxu0
        %v856 = vadd.f32 %v660, %v855
        %v857 = vpop.f32.mrf.mxu0
        %858 = vmatprep.mubr.bf16.mxu0 0
        %859 = vmatmul.mubr.bf16.gmra.mxu0 %v749
        %v860 = vpop.f32.mrf.mxu0
        %v861 = vadd.f32 %v665, %v860
        %v862 = vpop.f32.mrf.mxu0
        %v863 = vpop.f32.mrf.mxu0
        %v864 = vadd.f32 %v668, %v863
        %v865 = vpop.f32.mrf.mxu0
        %866 = vdwg.mxu0
        %v867 = vld [vmem:[%s216] sm:$0xe]
        %v868 = vld [vmem:[%s216 + $0xc] sm:$0xe]
        %v869 = vld [vmem:[%s216 + $0x18] sm:$0xe]
        %v870 = vld [vmem:[%s216 + $0x24] sm:$0xe]
        %v871 = vld [vmem:[%s216 + $0x30] sm:$0xe]
        %v872 = vld [vmem:[%s216 + $0x3c] sm:$0xe]
        %v873 = vld [vmem:[%s216 + $0x48] sm:$0xe]
        %v874 = vld [vmem:[%s216 + $0x54] sm:$0xe]
        %v875 = vld [vmem:[%s216 + $0x60] sm:$0xe]
        %v876 = vld [vmem:[%s216 + $0x6c] sm:$0xe]
        %vm897 = vcmask 1042432
        %vm898 = vcmask 1046532
        %vm899 = vmor %vm897, %vm898
        %v900 = vrot.slane %v867, 5
        %v901 = vrot.slane %v900, 4
        %v902 = vrot.slane %v218, 5
        %v903 = vsel %vm899, %v901, %v902
        %v904 = vrot.slane %v902, 4
        %v905 = vrot.slane %v238, 5
        %v906 = vsel %vm899, %v904, %v905
        %v907 = vrot.slane %v868, 5
        %v908 = vrot.slane %v907, 4
        %v909 = vrot.slane %v220, 5
        %v910 = vsel %vm899, %v908, %v909
        %v911 = vrot.slane %v909, 4
        %v912 = vrot.slane %v239, 5
        %v913 = vsel %vm899, %v911, %v912
        %v914 = vrot.slane %v869, 5
        %v915 = vrot.slane %v914, 4
        %v916 = vrot.slane %v222, 5
        %v917 = vsel %vm899, %v915, %v916
        %v918 = vrot.slane %v916, 4
        %v919 = vrot.slane %v240, 5
        %v920 = vsel %vm899, %v918, %v919
        %v921 = vrot.slane %v870, 5
        %v922 = vrot.slane %v921, 4
        %v923 = vrot.slane %v224, 5
        %v924 = vsel %vm899, %v922, %v923
        %v925 = vrot.slane %v923, 4
        %v926 = vrot.slane %v241, 5
        %v927 = vsel %vm899, %v925, %v926
        %v928 = vrot.slane %v871, 5
        %v929 = vrot.slane %v928, 4
        %v930 = vrot.slane %v226, 5
        %v931 = vsel %vm899, %v929, %v930
        %v932 = vrot.slane %v930, 4
        %v933 = vrot.slane %v242, 5
        %v934 = vsel %vm899, %v932, %v933
        %v935 = vrot.slane %v872, 5
        %v936 = vrot.slane %v935, 4
        %v937 = vrot.slane %v228, 5
        %v938 = vsel %vm899, %v936, %v937
        %v939 = vrot.slane %v937, 4
        %v940 = vrot.slane %v243, 5
        %v941 = vsel %vm899, %v939, %v940
        %v942 = vrot.slane %v873, 5
        %v943 = vrot.slane %v942, 4
        %v944 = vrot.slane %v230, 5
        %v945 = vsel %vm899, %v943, %v944
        %v946 = vrot.slane %v944, 4
        %v947 = vrot.slane %v244, 5
        %v948 = vsel %vm899, %v946, %v947
        %v949 = vrot.slane %v874, 5
        %v950 = vrot.slane %v949, 4
        %v951 = vrot.slane %v232, 5
        %v952 = vsel %vm899, %v950, %v951
        %v953 = vrot.slane %v951, 4
        %v954 = vrot.slane %v245, 5
        %v955 = vsel %vm899, %v953, %v954
        %v956 = vrot.slane %v875, 5
        %v957 = vrot.slane %v956, 4
        %v958 = vrot.slane %v234, 5
        %v959 = vsel %vm899, %v957, %v958
        %v960 = vrot.slane %v958, 4
        %v961 = vrot.slane %v246, 5
        %v962 = vsel %vm899, %v960, %v961
        %v963 = vrot.slane %v876, 5
        %v964 = vrot.slane %v963, 4
        %v965 = vrot.slane %v236, 5
        %v966 = vsel %vm899, %v964, %v965
        %v967 = vrot.slane %v965, 4
        %v968 = vrot.slane %v247, 5
        %v969 = vsel %vm899, %v967, %v968
        %s970 = scalar_lea.vmem %s1, 8
        %v971 = vld [vmem:[%s970] sm:$0xf]
        %v972 = vunpack.c.l.b16 %v903
        %v973 = vunpack.c.l.b16 %v906
        %v974 = vunpack.c.l.b16 %v910
        %v975 = vunpack.c.l.b16 %v913
        %v976 = vunpack.c.l.b16 %v917
        %v977 = vunpack.c.l.b16 %v920
        %v978 = vunpack.c.l.b16 %v924
        %v979 = vunpack.c.l.b16 %v927
        %v980 = vunpack.c.l.b16 %v931
        %v981 = vunpack.c.l.b16 %v934
        %v982 = vunpack.c.l.b16 %v938
        %v983 = vunpack.c.l.b16 %v941
        %v984 = vunpack.c.l.b16 %v945
        %v985 = vunpack.c.l.b16 %v948
        %v986 = vunpack.c.l.b16 %v952
        %v987 = vunpack.c.l.b16 %v955
        %v988 = vunpack.c.l.b16 %v959
        %v989 = vunpack.c.l.b16 %v962
        %v990 = vunpack.c.l.b16 %v966
        %v991 = vunpack.c.l.b16 %v969
        %v992 = vpack.c.b16 %v973, %v972
        %v993 = vpack.c.b16 %v975, %v974
        %v994 = vpack.c.b16 %v977, %v976
        %v995 = vpack.c.b16 %v979, %v978
        %v996 = vpack.c.b16 %v981, %v980
        %v997 = vpack.c.b16 %v983, %v982
        %v998 = vpack.c.b16 %v985, %v984
        %v999 = vpack.c.b16 %v987, %v986
        %v1000 = vpack.c.b16 %v989, %v988
        %v1001 = vpack.c.b16 %v991, %v990
        %v1003 = vsel %vm523, %v992, 0
        %v1006 = vsel %vm523, %v993, 0
        %v1009 = vsel %vm523, %v994, 0
        %v1012 = vsel %vm523, %v995, 0
        %v1015 = vsel %vm523, %v996, 0
        %v1018 = vsel %vm523, %v997, 0
        %v1021 = vsel %vm523, %v998, 0
        %v1024 = vsel %vm523, %v999, 0
        %v1027 = vsel %vm523, %v1000, 0
        %v1030 = vsel %vm523, %v1001, 0
        %v1033 = vsel %vm554, %v971, 0
        %1035 = vmatprep.subr.bf16.mxu0 0
        %1036 = vmatpush1.bf16.msra.mxu0 0
        %1037 = vmatprep.subr.bf16.mxu0 0
        %1038 = vmatpush1.bf16.msra.mxu0 0
        %1039 = vmatprep.subr.bf16.mxu0 0
        %1040 = vmatpush1.bf16.msra.mxu0 0
        %1041 = vmatprep.subr.bf16.mxu0 0
        %1042 = vmatpush1.bf16.msra.mxu0 0
        %1043 = vmatprep.subr.bf16.mxu0 0
        %1044 = vmatpush1.bf16.msra.mxu0 0
        %1045 = vmatprep.subr.bf16.mxu0 0
        %1046 = vmatpush1.bf16.msra.mxu0 0
        %1047 = vmatprep.subr.bf16.mxu0 0
        %1048 = vmatpush1.bf16.msra.mxu0 0
        %1049 = vmatprep.subr.bf16.mxu0 0
        %1050 = vmatpush1.bf16.msra.mxu0 %v1033
        %1051 = vmatprep.subr.bf16.mxu0 0
        %1052 = vmatpush2.bf16.msra.mxu0 0
        %1053 = vmatprep.subr.bf16.mxu0 0
        %1054 = vmatpush2.bf16.msra.mxu0 0
        %1055 = vmatprep.subr.bf16.mxu0 0
        %1056 = vmatpush2.bf16.msra.mxu0 0
        %1057 = vmatprep.subr.bf16.mxu0 0
        %1058 = vmatpush2.bf16.msra.mxu0 0
        %1059 = vmatprep.subr.bf16.mxu0 0
        %1060 = vmatpush2.bf16.msra.mxu0 0
        %1061 = vmatprep.subr.bf16.mxu0 0
        %1062 = vmatpush2.bf16.msra.mxu0 0
        %1063 = vmatprep.subr.bf16.mxu0 0
        %1064 = vmatpush2.bf16.msra.mxu0 0
        %1065 = vmatprep.subr.bf16.mxu0 0
        %1066 = vmatpush2.bf16.msra.mxu0 0
        %1067 = vmatprep.mubr.bf16.mxu0 0
        %1068 = vmatmul.mubr.bf16.gmra.mxu0 %v1003
        %v1069 = vpop.f32.mrf.mxu0
        %v1070 = vadd.f32 0.0, %v1069
        %v1071 = vpop.f32.mrf.mxu0
        %v1072 = vpop.f32.mrf.mxu0
        %v1073 = vadd.f32 0.0, %v1072
        %v1074 = vpop.f32.mrf.mxu0
        %1075 = vmatprep.mubr.bf16.mxu0 0
        %1076 = vmatmul.mubr.bf16.gmra.mxu0 %v1006
        %v1077 = vpop.f32.mrf.mxu0
        %v1078 = vadd.f32 0.0, %v1077
        %v1079 = vpop.f32.mrf.mxu0
        %v1080 = vpop.f32.mrf.mxu0
        %v1081 = vadd.f32 0.0, %v1080
        %v1082 = vpop.f32.mrf.mxu0
        %1083 = vmatprep.mubr.bf16.mxu0 0
        %1084 = vmatmul.mubr.bf16.gmra.mxu0 %v1009
        %v1085 = vpop.f32.mrf.mxu0
        %v1086 = vadd.f32 0.0, %v1085
        %v1087 = vpop.f32.mrf.mxu0
        %v1088 = vpop.f32.mrf.mxu0
        %v1089 = vadd.f32 0.0, %v1088
        %v1090 = vpop.f32.mrf.mxu0
        %1091 = vmatprep.mubr.bf16.mxu0 0
        %1092 = vmatmul.mubr.bf16.gmra.mxu0 %v1012
        %v1093 = vpop.f32.mrf.mxu0
        %v1094 = vadd.f32 0.0, %v1093
        %v1095 = vpop.f32.mrf.mxu0
        %v1096 = vpop.f32.mrf.mxu0
        %v1097 = vadd.f32 0.0, %v1096
        %v1098 = vpop.f32.mrf.mxu0
        %1099 = vmatprep.mubr.bf16.mxu0 0
        %1100 = vmatmul.mubr.bf16.gmra.mxu0 %v1015
        %v1101 = vpop.f32.mrf.mxu0
        %v1102 = vadd.f32 0.0, %v1101
        %v1103 = vpop.f32.mrf.mxu0
        %v1104 = vpop.f32.mrf.mxu0
        %v1105 = vadd.f32 0.0, %v1104
        %v1106 = vpop.f32.mrf.mxu0
        %1107 = vmatprep.mubr.bf16.mxu0 0
        %1108 = vmatmul.mubr.bf16.gmra.mxu0 %v1018
        %v1109 = vpop.f32.mrf.mxu0
        %v1110 = vadd.f32 0.0, %v1109
        %v1111 = vpop.f32.mrf.mxu0
        %v1112 = vpop.f32.mrf.mxu0
        %v1113 = vadd.f32 0.0, %v1112
        %v1114 = vpop.f32.mrf.mxu0
        %1115 = vmatprep.mubr.bf16.mxu0 0
        %1116 = vmatmul.mubr.bf16.gmra.mxu0 %v1021
        %v1117 = vpop.f32.mrf.mxu0
        %v1118 = vadd.f32 0.0, %v1117
        %v1119 = vpop.f32.mrf.mxu0
        %v1120 = vpop.f32.mrf.mxu0
        %v1121 = vadd.f32 0.0, %v1120
        %v1122 = vpop.f32.mrf.mxu0
        %1123 = vmatprep.mubr.bf16.mxu0 0
        %1124 = vmatmul.mubr.bf16.gmra.mxu0 %v1024
        %v1125 = vpop.f32.mrf.mxu0
        %v1126 = vadd.f32 0.0, %v1125
        %v1127 = vpop.f32.mrf.mxu0
        %v1128 = vpop.f32.mrf.mxu0
        %v1129 = vadd.f32 0.0, %v1128
        %v1130 = vpop.f32.mrf.mxu0
        %1131 = vmatprep.mubr.bf16.mxu0 0
        %1132 = vmatmul.mubr.bf16.gmra.mxu0 %v1027
        %v1133 = vpop.f32.mrf.mxu0
        %v1134 = vadd.f32 0.0, %v1133
        %v1135 = vpop.f32.mrf.mxu0
        %v1136 = vpop.f32.mrf.mxu0
        %v1137 = vadd.f32 0.0, %v1136
        %v1138 = vpop.f32.mrf.mxu0
        %1139 = vmatprep.mubr.bf16.mxu0 0
        %1140 = vmatmul.mubr.bf16.gmra.mxu0 %v1030
        %v1141 = vpop.f32.mrf.mxu0
        %v1142 = vadd.f32 0.0, %v1141
        %v1143 = vpop.f32.mrf.mxu0
        %v1144 = vpop.f32.mrf.mxu0
        %v1145 = vadd.f32 0.0, %v1144
        %v1146 = vpop.f32.mrf.mxu0
        %1147 = vdwg.mxu0
        %v1148 = vadd.f32 %v789, %v1070
        %v1149 = vadd.f32 %v792, %v1073
        %v1150 = vadd.f32 %v797, %v1078
        %v1151 = vadd.f32 %v800, %v1081
        %v1152 = vadd.f32 %v805, %v1086
        %v1153 = vadd.f32 %v808, %v1089
        %v1154 = vadd.f32 %v813, %v1094
        %v1155 = vadd.f32 %v816, %v1097
        %v1156 = vadd.f32 %v821, %v1102
        %v1157 = vadd.f32 %v824, %v1105
        %v1158 = vadd.f32 %v829, %v1110
        %v1159 = vadd.f32 %v832, %v1113
        %v1160 = vadd.f32 %v837, %v1118
        %v1161 = vadd.f32 %v840, %v1121
        %v1162 = vadd.f32 %v845, %v1126
        %v1163 = vadd.f32 %v848, %v1129
        %v1164 = vadd.f32 %v853, %v1134
        %v1165 = vadd.f32 %v856, %v1137
        %v1166 = vadd.f32 %v861, %v1142
        %v1167 = vadd.f32 %v864, %v1145
        %s1168 = sadd.s32 %s212, 1
        %s1169 = smul.u32 %s1168, 3
        %s1170 = smul.addr %s1169, 4
        %s1171 = scalar_lea.vmem %s209, %s1170
        %v1172 = vld [vmem:[%s1171] sm:$0xf]
        %v1173 = vld [vmem:[%s1171 + $0x4] sm:$0xf]
        %v1174 = vld [vmem:[%s1171 + $0xc] sm:$0xf]
        %v1175 = vld [vmem:[%s1171 + $0x10] sm:$0xf]
        %v1176 = vld [vmem:[%s1171 + $0x18] sm:$0xf]
        %v1177 = vld [vmem:[%s1171 + $0x1c] sm:$0xf]
        %v1178 = vld [vmem:[%s1171 + $0x24] sm:$0xf]
        %v1179 = vld [vmem:[%s1171 + $0x28] sm:$0xf]
        %v1180 = vld [vmem:[%s1171 + $0x30] sm:$0xf]
        %v1181 = vld [vmem:[%s1171 + $0x34] sm:$0xf]
        %v1182 = vld [vmem:[%s1171 + $0x3c] sm:$0xf]
        %v1183 = vld [vmem:[%s1171 + $0x40] sm:$0xf]
        %v1184 = vld [vmem:[%s1171 + $0x48] sm:$0xf]
        %v1185 = vld [vmem:[%s1171 + $0x4c] sm:$0xf]
        %v1186 = vld [vmem:[%s1171 + $0x54] sm:$0xf]
        %v1187 = vld [vmem:[%s1171 + $0x58] sm:$0xf]
        %v1188 = vld [vmem:[%s1171 + $0x60] sm:$0xf]
        %v1189 = vld [vmem:[%s1171 + $0x64] sm:$0xf]
        %v1190 = vld [vmem:[%s1171 + $0x6c] sm:$0xf]
        %v1191 = vld [vmem:[%s1171 + $0x70] sm:$0xf]
        %s1192 = scalar_lea.vmem %s1, 12
        %v1193 = vld [vmem:[%s1192] sm:$0xf]
        %v1214 = vunpack.c.l.b16 %v1172
        %v1215 = vunpack.c.l.b16 %v1173
        %v1216 = vunpack.c.l.b16 %v1174
        %v1217 = vunpack.c.l.b16 %v1175
        %v1218 = vunpack.c.l.b16 %v1176
        %v1219 = vunpack.c.l.b16 %v1177
        %v1220 = vunpack.c.l.b16 %v1178
        %v1221 = vunpack.c.l.b16 %v1179
        %v1222 = vunpack.c.l.b16 %v1180
        %v1223 = vunpack.c.l.b16 %v1181
        %v1224 = vunpack.c.l.b16 %v1182
        %v1225 = vunpack.c.l.b16 %v1183
        %v1226 = vunpack.c.l.b16 %v1184
        %v1227 = vunpack.c.l.b16 %v1185
        %v1228 = vunpack.c.l.b16 %v1186
        %v1229 = vunpack.c.l.b16 %v1187
        %v1230 = vunpack.c.l.b16 %v1188
        %v1231 = vunpack.c.l.b16 %v1189
        %v1232 = vunpack.c.l.b16 %v1190
        %v1233 = vunpack.c.l.b16 %v1191
        %v1234 = vpack.c.b16 %v1215, %v1214
        %v1235 = vpack.c.b16 %v1217, %v1216
        %v1236 = vpack.c.b16 %v1219, %v1218
        %v1237 = vpack.c.b16 %v1221, %v1220
        %v1238 = vpack.c.b16 %v1223, %v1222
        %v1239 = vpack.c.b16 %v1225, %v1224
        %v1240 = vpack.c.b16 %v1227, %v1226
        %v1241 = vpack.c.b16 %v1229, %v1228
        %v1242 = vpack.c.b16 %v1231, %v1230
        %v1243 = vpack.c.b16 %v1233, %v1232
        %v1245 = vsel %vm523, %v1234, 0
        %v1248 = vsel %vm523, %v1235, 0
        %v1251 = vsel %vm523, %v1236, 0
        %v1254 = vsel %vm523, %v1237, 0
        %v1257 = vsel %vm523, %v1238, 0
        %v1260 = vsel %vm523, %v1239, 0
        %v1263 = vsel %vm523, %v1240, 0
        %v1266 = vsel %vm523, %v1241, 0
        %v1269 = vsel %vm523, %v1242, 0
        %v1272 = vsel %vm523, %v1243, 0
        %v1275 = vsel %vm554, %v1193, 0
        %1277 = vmatprep.subr.bf16.mxu0 0
        %1278 = vmatpush1.bf16.msra.mxu0 0
        %1279 = vmatprep.subr.bf16.mxu0 0
        %1280 = vmatpush1.bf16.msra.mxu0 0
        %1281 = vmatprep.subr.bf16.mxu0 0
        %1282 = vmatpush1.bf16.msra.mxu0 0
        %1283 = vmatprep.subr.bf16.mxu0 0
        %1284 = vmatpush1.bf16.msra.mxu0 0
        %1285 = vmatprep.subr.bf16.mxu0 0
        %1286 = vmatpush1.bf16.msra.mxu0 0
        %1287 = vmatprep.subr.bf16.mxu0 0
        %1288 = vmatpush1.bf16.msra.mxu0 0
        %1289 = vmatprep.subr.bf16.mxu0 0
        %1290 = vmatpush1.bf16.msra.mxu0 0
        %1291 = vmatprep.subr.bf16.mxu0 0
        %1292 = vmatpush1.bf16.msra.mxu0 %v1275
        %1293 = vmatprep.subr.bf16.mxu0 0
        %1294 = vmatpush2.bf16.msra.mxu0 0
        %1295 = vmatprep.subr.bf16.mxu0 0
        %1296 = vmatpush2.bf16.msra.mxu0 0
        %1297 = vmatprep.subr.bf16.mxu0 0
        %1298 = vmatpush2.bf16.msra.mxu0 0
        %1299 = vmatprep.subr.bf16.mxu0 0
        %1300 = vmatpush2.bf16.msra.mxu0 0
        %1301 = vmatprep.subr.bf16.mxu0 0
        %1302 = vmatpush2.bf16.msra.mxu0 0
        %1303 = vmatprep.subr.bf16.mxu0 0
        %1304 = vmatpush2.bf16.msra.mxu0 0
        %1305 = vmatprep.subr.bf16.mxu0 0
        %1306 = vmatpush2.bf16.msra.mxu0 0
        %1307 = vmatprep.subr.bf16.mxu0 0
        %1308 = vmatpush2.bf16.msra.mxu0 0
        %1309 = vmatprep.mubr.bf16.mxu0 0
        %1310 = vmatmul.mubr.bf16.gmra.mxu0 %v1245
        %v1311 = vpop.f32.mrf.mxu0
        %v1312 = vadd.f32 0.0, %v1311
        %v1313 = vpop.f32.mrf.mxu0
        %v1314 = vpop.f32.mrf.mxu0
        %v1315 = vadd.f32 0.0, %v1314
        %v1316 = vpop.f32.mrf.mxu0
        %1317 = vmatprep.mubr.bf16.mxu0 0
        %1318 = vmatmul.mubr.bf16.gmra.mxu0 %v1248
        %v1319 = vpop.f32.mrf.mxu0
        %v1320 = vadd.f32 0.0, %v1319
        %v1321 = vpop.f32.mrf.mxu0
        %v1322 = vpop.f32.mrf.mxu0
        %v1323 = vadd.f32 0.0, %v1322
        %v1324 = vpop.f32.mrf.mxu0
        %1325 = vmatprep.mubr.bf16.mxu0 0
        %1326 = vmatmul.mubr.bf16.gmra.mxu0 %v1251
        %v1327 = vpop.f32.mrf.mxu0
        %v1328 = vadd.f32 0.0, %v1327
        %v1329 = vpop.f32.mrf.mxu0
        %v1330 = vpop.f32.mrf.mxu0
        %v1331 = vadd.f32 0.0, %v1330
        %v1332 = vpop.f32.mrf.mxu0
        %1333 = vmatprep.mubr.bf16.mxu0 0
        %1334 = vmatmul.mubr.bf16.gmra.mxu0 %v1254
        %v1335 = vpop.f32.mrf.mxu0
        %v1336 = vadd.f32 0.0, %v1335
        %v1337 = vpop.f32.mrf.mxu0
        %v1338 = vpop.f32.mrf.mxu0
        %v1339 = vadd.f32 0.0, %v1338
        %v1340 = vpop.f32.mrf.mxu0
        %1341 = vmatprep.mubr.bf16.mxu0 0
        %1342 = vmatmul.mubr.bf16.gmra.mxu0 %v1257
        %v1343 = vpop.f32.mrf.mxu0
        %v1344 = vadd.f32 0.0, %v1343
        %v1345 = vpop.f32.mrf.mxu0
        %v1346 = vpop.f32.mrf.mxu0
        %v1347 = vadd.f32 0.0, %v1346
        %v1348 = vpop.f32.mrf.mxu0
        %1349 = vmatprep.mubr.bf16.mxu0 0
        %1350 = vmatmul.mubr.bf16.gmra.mxu0 %v1260
        %v1351 = vpop.f32.mrf.mxu0
        %v1352 = vadd.f32 0.0, %v1351
        %v1353 = vpop.f32.mrf.mxu0
        %v1354 = vpop.f32.mrf.mxu0
        %v1355 = vadd.f32 0.0, %v1354
        %v1356 = vpop.f32.mrf.mxu0
        %1357 = vmatprep.mubr.bf16.mxu0 0
        %1358 = vmatmul.mubr.bf16.gmra.mxu0 %v1263
        %v1359 = vpop.f32.mrf.mxu0
        %v1360 = vadd.f32 0.0, %v1359
        %v1361 = vpop.f32.mrf.mxu0
        %v1362 = vpop.f32.mrf.mxu0
        %v1363 = vadd.f32 0.0, %v1362
        %v1364 = vpop.f32.mrf.mxu0
        %1365 = vmatprep.mubr.bf16.mxu0 0
        %1366 = vmatmul.mubr.bf16.gmra.mxu0 %v1266
        %v1367 = vpop.f32.mrf.mxu0
        %v1368 = vadd.f32 0.0, %v1367
        %v1369 = vpop.f32.mrf.mxu0
        %v1370 = vpop.f32.mrf.mxu0
        %v1371 = vadd.f32 0.0, %v1370
        %v1372 = vpop.f32.mrf.mxu0
        %1373 = vmatprep.mubr.bf16.mxu0 0
        %1374 = vmatmul.mubr.bf16.gmra.mxu0 %v1269
        %v1375 = vpop.f32.mrf.mxu0
        %v1376 = vadd.f32 0.0, %v1375
        %v1377 = vpop.f32.mrf.mxu0
        %v1378 = vpop.f32.mrf.mxu0
        %v1379 = vadd.f32 0.0, %v1378
        %v1380 = vpop.f32.mrf.mxu0
        %1381 = vmatprep.mubr.bf16.mxu0 0
        %1382 = vmatmul.mubr.bf16.gmra.mxu0 %v1272
        %v1383 = vpop.f32.mrf.mxu0
        %v1384 = vadd.f32 0.0, %v1383
        %v1385 = vpop.f32.mrf.mxu0
        %v1386 = vpop.f32.mrf.mxu0
        %v1387 = vadd.f32 0.0, %v1386
        %v1388 = vpop.f32.mrf.mxu0
        %1389 = vdwg.mxu0
        %v1390 = vadd.f32 %v1148, %v1312
        %v1391 = vadd.f32 %v1149, %v1315
        %v1392 = vadd.f32 %v1150, %v1320
        %v1393 = vadd.f32 %v1151, %v1323
        %v1394 = vadd.f32 %v1152, %v1328
        %v1395 = vadd.f32 %v1153, %v1331
        %v1396 = vadd.f32 %v1154, %v1336
        %v1397 = vadd.f32 %v1155, %v1339
        %v1398 = vadd.f32 %v1156, %v1344
        %v1399 = vadd.f32 %v1157, %v1347
        %v1400 = vadd.f32 %v1158, %v1352
        %v1401 = vadd.f32 %v1159, %v1355
        %v1402 = vadd.f32 %v1160, %v1360
        %v1403 = vadd.f32 %v1161, %v1363
        %v1404 = vadd.f32 %v1162, %v1368
        %v1405 = vadd.f32 %v1163, %v1371
        %v1406 = vadd.f32 %v1164, %v1376
        %v1407 = vadd.f32 %v1165, %v1379
        %v1408 = vadd.f32 %v1166, %v1384
        %v1409 = vadd.f32 %v1167, %v1387
        %v1410 = vld [vmem:[%s1171] sm:$0xf]
        %v1411 = vld [vmem:[%s1171 + $0x4] sm:$0xf]
        %v1412 = vld [vmem:[%s1171 + $0x8] sm:$0x1]
        %v1413 = vld [vmem:[%s1171 + $0xc] sm:$0xf]
        %v1414 = vld [vmem:[%s1171 + $0x10] sm:$0xf]
        %v1415 = vld [vmem:[%s1171 + $0x14] sm:$0x1]
        %v1416 = vld [vmem:[%s1171 + $0x18] sm:$0xf]
        %v1417 = vld [vmem:[%s1171 + $0x1c] sm:$0xf]
        %v1418 = vld [vmem:[%s1171 + $0x20] sm:$0x1]
        %v1419 = vld [vmem:[%s1171 + $0x24] sm:$0xf]
        %v1420 = vld [vmem:[%s1171 + $0x28] sm:$0xf]
        %v1421 = vld [vmem:[%s1171 + $0x2c] sm:$0x1]
        %v1422 = vld [vmem:[%s1171 + $0x30] sm:$0xf]
        %v1423 = vld [vmem:[%s1171 + $0x34] sm:$0xf]
        %v1424 = vld [vmem:[%s1171 + $0x38] sm:$0x1]
        %v1425 = vld [vmem:[%s1171 + $0x3c] sm:$0xf]
        %v1426 = vld [vmem:[%s1171 + $0x40] sm:$0xf]
        %v1427 = vld [vmem:[%s1171 + $0x44] sm:$0x1]
        %v1428 = vld [vmem:[%s1171 + $0x48] sm:$0xf]
        %v1429 = vld [vmem:[%s1171 + $0x4c] sm:$0xf]
        %v1430 = vld [vmem:[%s1171 + $0x50] sm:$0x1]
        %v1431 = vld [vmem:[%s1171 + $0x54] sm:$0xf]
        %v1432 = vld [vmem:[%s1171 + $0x58] sm:$0xf]
        %v1433 = vld [vmem:[%s1171 + $0x5c] sm:$0x1]
        %v1434 = vld [vmem:[%s1171 + $0x60] sm:$0xf]
        %v1435 = vld [vmem:[%s1171 + $0x64] sm:$0xf]
        %v1436 = vld [vmem:[%s1171 + $0x68] sm:$0x1]
        %v1437 = vld [vmem:[%s1171 + $0x6c] sm:$0xf]
        %v1438 = vld [vmem:[%s1171 + $0x70] sm:$0xf]
        %v1439 = vld [vmem:[%s1171 + $0x74] sm:$0x1]
        %v1441 = vshrl.u32 %v1410, 16
        %v1443 = vrot.slane %v1441, 4
        %v1444 = vshll.u32 %v1410, 16
        %v1446 = vrot.slane %v1444, 5
        %v1447 = vor.u32 %v1443, %v1446
        %v1448 = vrot.slane %v1447, 4
        %v1450 = vshll.u32 %v1411, 16
        %v1452 = vrot.slane %v1450, 5
        %v1453 = vsel %vm250, %v1448, %v1452
        %v1454 = vshrl.u32 %v1411, 16
        %v1456 = vrot.slane %v1454, 4
        %v1457 = vor.u32 %v1456, %v1452
        %v1458 = vrot.slane %v1457, 4
        %v1460 = vshll.u32 %v1412, 16
        %v1462 = vrot.slane %v1460, 5
        %v1463 = vsel %vm250, %v1458, %v1462
        %v1465 = vshrl.u32 %v1413, 16
        %v1467 = vrot.slane %v1465, 4
        %v1468 = vshll.u32 %v1413, 16
        %v1470 = vrot.slane %v1468, 5
        %v1471 = vor.u32 %v1467, %v1470
        %v1472 = vrot.slane %v1471, 4
        %v1474 = vshll.u32 %v1414, 16
        %v1476 = vrot.slane %v1474, 5
        %v1477 = vsel %vm250, %v1472, %v1476
        %v1478 = vshrl.u32 %v1414, 16
        %v1480 = vrot.slane %v1478, 4
        %v1481 = vor.u32 %v1480, %v1476
        %v1482 = vrot.slane %v1481, 4
        %v1484 = vshll.u32 %v1415, 16
        %v1486 = vrot.slane %v1484, 5
        %v1487 = vsel %vm250, %v1482, %v1486
        %v1489 = vshrl.u32 %v1416, 16
        %v1491 = vrot.slane %v1489, 4
        %v1492 = vshll.u32 %v1416, 16
        %v1494 = vrot.slane %v1492, 5
        %v1495 = vor.u32 %v1491, %v1494
        %v1496 = vrot.slane %v1495, 4
        %v1498 = vshll.u32 %v1417, 16
        %v1500 = vrot.slane %v1498, 5
        %v1501 = vsel %vm250, %v1496, %v1500
        %v1502 = vshrl.u32 %v1417, 16
        %v1504 = vrot.slane %v1502, 4
        %v1505 = vor.u32 %v1504, %v1500
        %v1506 = vrot.slane %v1505, 4
        %v1508 = vshll.u32 %v1418, 16
        %v1510 = vrot.slane %v1508, 5
        %v1511 = vsel %vm250, %v1506, %v1510
        %v1513 = vshrl.u32 %v1419, 16
        %v1515 = vrot.slane %v1513, 4
        %v1516 = vshll.u32 %v1419, 16
        %v1518 = vrot.slane %v1516, 5
        %v1519 = vor.u32 %v1515, %v1518
        %v1520 = vrot.slane %v1519, 4
        %v1522 = vshll.u32 %v1420, 16
        %v1524 = vrot.slane %v1522, 5
        %v1525 = vsel %vm250, %v1520, %v1524
        %v1526 = vshrl.u32 %v1420, 16
        %v1528 = vrot.slane %v1526, 4
        %v1529 = vor.u32 %v1528, %v1524
        %v1530 = vrot.slane %v1529, 4
        %v1532 = vshll.u32 %v1421, 16
        %v1534 = vrot.slane %v1532, 5
        %v1535 = vsel %vm250, %v1530, %v1534
        %v1537 = vshrl.u32 %v1422, 16
        %v1539 = vrot.slane %v1537, 4
        %v1540 = vshll.u32 %v1422, 16
        %v1542 = vrot.slane %v1540, 5
        %v1543 = vor.u32 %v1539, %v1542
        %v1544 = vrot.slane %v1543, 4
        %v1546 = vshll.u32 %v1423, 16
        %v1548 = vrot.slane %v1546, 5
        %v1549 = vsel %vm250, %v1544, %v1548
        %v1550 = vshrl.u32 %v1423, 16
        %v1552 = vrot.slane %v1550, 4
        %v1553 = vor.u32 %v1552, %v1548
        %v1554 = vrot.slane %v1553, 4
        %v1556 = vshll.u32 %v1424, 16
        %v1558 = vrot.slane %v1556, 5
        %v1559 = vsel %vm250, %v1554, %v1558
        %v1561 = vshrl.u32 %v1425, 16
        %v1563 = vrot.slane %v1561, 4
        %v1564 = vshll.u32 %v1425, 16
        %v1566 = vrot.slane %v1564, 5
        %v1567 = vor.u32 %v1563, %v1566
        %v1568 = vrot.slane %v1567, 4
        %v1570 = vshll.u32 %v1426, 16
        %v1572 = vrot.slane %v1570, 5
        %v1573 = vsel %vm250, %v1568, %v1572
        %v1574 = vshrl.u32 %v1426, 16
        %v1576 = vrot.slane %v1574, 4
        %v1577 = vor.u32 %v1576, %v1572
        %v1578 = vrot.slane %v1577, 4
        %v1580 = vshll.u32 %v1427, 16
        %v1582 = vrot.slane %v1580, 5
        %v1583 = vsel %vm250, %v1578, %v1582
        %v1585 = vshrl.u32 %v1428, 16
        %v1587 = vrot.slane %v1585, 4
        %v1588 = vshll.u32 %v1428, 16
        %v1590 = vrot.slane %v1588, 5
        %v1591 = vor.u32 %v1587, %v1590
        %v1592 = vrot.slane %v1591, 4
        %v1594 = vshll.u32 %v1429, 16
        %v1596 = vrot.slane %v1594, 5
        %v1597 = vsel %vm250, %v1592, %v1596
        %v1598 = vshrl.u32 %v1429, 16
        %v1600 = vrot.slane %v1598, 4
        %v1601 = vor.u32 %v1600, %v1596
        %v1602 = vrot.slane %v1601, 4
        %v1604 = vshll.u32 %v1430, 16
        %v1606 = vrot.slane %v1604, 5
        %v1607 = vsel %vm250, %v1602, %v1606
        %v1609 = vshrl.u32 %v1431, 16
        %v1611 = vrot.slane %v1609, 4
        %v1612 = vshll.u32 %v1431, 16
        %v1614 = vrot.slane %v1612, 5
        %v1615 = vor.u32 %v1611, %v1614
        %v1616 = vrot.slane %v1615, 4
        %v1618 = vshll.u32 %v1432, 16
        %v1620 = vrot.slane %v1618, 5
        %v1621 = vsel %vm250, %v1616, %v1620
        %v1622 = vshrl.u32 %v1432, 16
        %v1624 = vrot.slane %v1622, 4
        %v1625 = vor.u32 %v1624, %v1620
        %v1626 = vrot.slane %v1625, 4
        %v1628 = vshll.u32 %v1433, 16
        %v1630 = vrot.slane %v1628, 5
        %v1631 = vsel %vm250, %v1626, %v1630
        %v1633 = vshrl.u32 %v1434, 16
        %v1635 = vrot.slane %v1633, 4
        %v1636 = vshll.u32 %v1434, 16
        %v1638 = vrot.slane %v1636, 5
        %v1639 = vor.u32 %v1635, %v1638
        %v1640 = vrot.slane %v1639, 4
        %v1642 = vshll.u32 %v1435, 16
        %v1644 = vrot.slane %v1642, 5
        %v1645 = vsel %vm250, %v1640, %v1644
        %v1646 = vshrl.u32 %v1435, 16
        %v1648 = vrot.slane %v1646, 4
        %v1649 = vor.u32 %v1648, %v1644
        %v1650 = vrot.slane %v1649, 4
        %v1652 = vshll.u32 %v1436, 16
        %v1654 = vrot.slane %v1652, 5
        %v1655 = vsel %vm250, %v1650, %v1654
        %v1657 = vshrl.u32 %v1437, 16
        %v1659 = vrot.slane %v1657, 4
        %v1660 = vshll.u32 %v1437, 16
        %v1662 = vrot.slane %v1660, 5
        %v1663 = vor.u32 %v1659, %v1662
        %v1664 = vrot.slane %v1663, 4
        %v1666 = vshll.u32 %v1438, 16
        %v1668 = vrot.slane %v1666, 5
        %v1669 = vsel %vm250, %v1664, %v1668
        %v1670 = vshrl.u32 %v1438, 16
        %v1672 = vrot.slane %v1670, 4
        %v1673 = vor.u32 %v1672, %v1668
        %v1674 = vrot.slane %v1673, 4
        %v1676 = vshll.u32 %v1439, 16
        %v1678 = vrot.slane %v1676, 5
        %v1679 = vsel %vm250, %v1674, %v1678
        %s1680 = scalar_lea.vmem %s1, 16
        %v1681 = vld [vmem:[%s1680] sm:$0xf]
        %v1682 = vunpack.c.l.b16 %v1453
        %v1683 = vunpack.c.l.b16 %v1463
        %v1684 = vunpack.c.l.b16 %v1477
        %v1685 = vunpack.c.l.b16 %v1487
        %v1686 = vunpack.c.l.b16 %v1501
        %v1687 = vunpack.c.l.b16 %v1511
        %v1688 = vunpack.c.l.b16 %v1525
        %v1689 = vunpack.c.l.b16 %v1535
        %v1690 = vunpack.c.l.b16 %v1549
        %v1691 = vunpack.c.l.b16 %v1559
        %v1692 = vunpack.c.l.b16 %v1573
        %v1693 = vunpack.c.l.b16 %v1583
        %v1694 = vunpack.c.l.b16 %v1597
        %v1695 = vunpack.c.l.b16 %v1607
        %v1696 = vunpack.c.l.b16 %v1621
        %v1697 = vunpack.c.l.b16 %v1631
        %v1698 = vunpack.c.l.b16 %v1645
        %v1699 = vunpack.c.l.b16 %v1655
        %v1700 = vunpack.c.l.b16 %v1669
        %v1701 = vunpack.c.l.b16 %v1679
        %v1702 = vpack.c.b16 %v1683, %v1682
        %v1703 = vpack.c.b16 %v1685, %v1684
        %v1704 = vpack.c.b16 %v1687, %v1686
        %v1705 = vpack.c.b16 %v1689, %v1688
        %v1706 = vpack.c.b16 %v1691, %v1690
        %v1707 = vpack.c.b16 %v1693, %v1692
        %v1708 = vpack.c.b16 %v1695, %v1694
        %v1709 = vpack.c.b16 %v1697, %v1696
        %v1710 = vpack.c.b16 %v1699, %v1698
        %v1711 = vpack.c.b16 %v1701, %v1700
        %v1713 = vsel %vm523, %v1702, 0
        %v1716 = vsel %vm523, %v1703, 0
        %v1719 = vsel %vm523, %v1704, 0
        %v1722 = vsel %vm523, %v1705, 0
        %v1725 = vsel %vm523, %v1706, 0
        %v1728 = vsel %vm523, %v1707, 0
        %v1731 = vsel %vm523, %v1708, 0
        %v1734 = vsel %vm523, %v1709, 0
        %v1737 = vsel %vm523, %v1710, 0
        %v1740 = vsel %vm523, %v1711, 0
        %v1743 = vsel %vm554, %v1681, 0
        %1745 = vmatprep.subr.bf16.mxu0 0
        %1746 = vmatpush1.bf16.msra.mxu0 0
        %1747 = vmatprep.subr.bf16.mxu0 0
        %1748 = vmatpush1.bf16.msra.mxu0 0
        %1749 = vmatprep.subr.bf16.mxu0 0
        %1750 = vmatpush1.bf16.msra.mxu0 0
        %1751 = vmatprep.subr.bf16.mxu0 0
        %1752 = vmatpush1.bf16.msra.mxu0 0
        %1753 = vmatprep.subr.bf16.mxu0 0
        %1754 = vmatpush1.bf16.msra.mxu0 0
        %1755 = vmatprep.subr.bf16.mxu0 0
        %1756 = vmatpush1.bf16.msra.mxu0 0
        %1757 = vmatprep.subr.bf16.mxu0 0
        %1758 = vmatpush1.bf16.msra.mxu0 0
        %1759 = vmatprep.subr.bf16.mxu0 0
        %1760 = vmatpush1.bf16.msra.mxu0 %v1743
        %1761 = vmatprep.subr.bf16.mxu0 0
        %1762 = vmatpush2.bf16.msra.mxu0 0
        %1763 = vmatprep.subr.bf16.mxu0 0
        %1764 = vmatpush2.bf16.msra.mxu0 0
        %1765 = vmatprep.subr.bf16.mxu0 0
        %1766 = vmatpush2.bf16.msra.mxu0 0
        %1767 = vmatprep.subr.bf16.mxu0 0
        %1768 = vmatpush2.bf16.msra.mxu0 0
        %1769 = vmatprep.subr.bf16.mxu0 0
        %1770 = vmatpush2.bf16.msra.mxu0 0
        %1771 = vmatprep.subr.bf16.mxu0 0
        %1772 = vmatpush2.bf16.msra.mxu0 0
        %1773 = vmatprep.subr.bf16.mxu0 0
        %1774 = vmatpush2.bf16.msra.mxu0 0
        %1775 = vmatprep.subr.bf16.mxu0 0
        %1776 = vmatpush2.bf16.msra.mxu0 0
        %1777 = vmatprep.mubr.bf16.mxu0 0
        %1778 = vmatmul.mubr.bf16.gmra.mxu0 %v1713
        %v1779 = vpop.f32.mrf.mxu0
        %v1780 = vadd.f32 0.0, %v1779
        %v1781 = vpop.f32.mrf.mxu0
        %v1782 = vpop.f32.mrf.mxu0
        %v1783 = vadd.f32 0.0, %v1782
        %v1784 = vpop.f32.mrf.mxu0
        %1785 = vmatprep.mubr.bf16.mxu0 0
        %1786 = vmatmul.mubr.bf16.gmra.mxu0 %v1716
        %v1787 = vpop.f32.mrf.mxu0
        %v1788 = vadd.f32 0.0, %v1787
        %v1789 = vpop.f32.mrf.mxu0
        %v1790 = vpop.f32.mrf.mxu0
        %v1791 = vadd.f32 0.0, %v1790
        %v1792 = vpop.f32.mrf.mxu0
        %1793 = vmatprep.mubr.bf16.mxu0 0
        %1794 = vmatmul.mubr.bf16.gmra.mxu0 %v1719
        %v1795 = vpop.f32.mrf.mxu0
        %v1796 = vadd.f32 0.0, %v1795
        %v1797 = vpop.f32.mrf.mxu0
        %v1798 = vpop.f32.mrf.mxu0
        %v1799 = vadd.f32 0.0, %v1798
        %v1800 = vpop.f32.mrf.mxu0
        %1801 = vmatprep.mubr.bf16.mxu0 0
        %1802 = vmatmul.mubr.bf16.gmra.mxu0 %v1722
        %v1803 = vpop.f32.mrf.mxu0
        %v1804 = vadd.f32 0.0, %v1803
        %v1805 = vpop.f32.mrf.mxu0
        %v1806 = vpop.f32.mrf.mxu0
        %v1807 = vadd.f32 0.0, %v1806
        %v1808 = vpop.f32.mrf.mxu0
        %1809 = vmatprep.mubr.bf16.mxu0 0
        %1810 = vmatmul.mubr.bf16.gmra.mxu0 %v1725
        %v1811 = vpop.f32.mrf.mxu0
        %v1812 = vadd.f32 0.0, %v1811
        %v1813 = vpop.f32.mrf.mxu0
        %v1814 = vpop.f32.mrf.mxu0
        %v1815 = vadd.f32 0.0, %v1814
        %v1816 = vpop.f32.mrf.mxu0
        %1817 = vmatprep.mubr.bf16.mxu0 0
        %1818 = vmatmul.mubr.bf16.gmra.mxu0 %v1728
        %v1819 = vpop.f32.mrf.mxu0
        %v1820 = vadd.f32 0.0, %v1819
        %v1821 = vpop.f32.mrf.mxu0
        %v1822 = vpop.f32.mrf.mxu0
        %v1823 = vadd.f32 0.0, %v1822
        %v1824 = vpop.f32.mrf.mxu0
        %1825 = vmatprep.mubr.bf16.mxu0 0
        %1826 = vmatmul.mubr.bf16.gmra.mxu0 %v1731
        %v1827 = vpop.f32.mrf.mxu0
        %v1828 = vadd.f32 0.0, %v1827
        %v1829 = vpop.f32.mrf.mxu0
        %v1830 = vpop.f32.mrf.mxu0
        %v1831 = vadd.f32 0.0, %v1830
        %v1832 = vpop.f32.mrf.mxu0
        %1833 = vmatprep.mubr.bf16.mxu0 0
        %1834 = vmatmul.mubr.bf16.gmra.mxu0 %v1734
        %v1835 = vpop.f32.mrf.mxu0
        %v1836 = vadd.f32 0.0, %v1835
        %v1837 = vpop.f32.mrf.mxu0
        %v1838 = vpop.f32.mrf.mxu0
        %v1839 = vadd.f32 0.0, %v1838
        %v1840 = vpop.f32.mrf.mxu0
        %1841 = vmatprep.mubr.bf16.mxu0 0
        %1842 = vmatmul.mubr.bf16.gmra.mxu0 %v1737
        %v1843 = vpop.f32.mrf.mxu0
        %v1844 = vadd.f32 0.0, %v1843
        %v1845 = vpop.f32.mrf.mxu0
        %v1846 = vpop.f32.mrf.mxu0
        %v1847 = vadd.f32 0.0, %v1846
        %v1848 = vpop.f32.mrf.mxu0
        %1849 = vmatprep.mubr.bf16.mxu0 0
        %1850 = vmatmul.mubr.bf16.gmra.mxu0 %v1740
        %v1851 = vpop.f32.mrf.mxu0
        %v1852 = vadd.f32 0.0, %v1851
        %v1853 = vpop.f32.mrf.mxu0
        %v1854 = vpop.f32.mrf.mxu0
        %v1855 = vadd.f32 0.0, %v1854
        %v1856 = vpop.f32.mrf.mxu0
        %1857 = vdwg.mxu0
        %v1858 = vadd.f32 %v1390, %v1780
        %v1859 = vadd.f32 %v1391, %v1783
        %v1860 = vadd.f32 %v1392, %v1788
        %v1861 = vadd.f32 %v1393, %v1791
        %v1862 = vadd.f32 %v1394, %v1796
        %v1863 = vadd.f32 %v1395, %v1799
        %v1864 = vadd.f32 %v1396, %v1804
        %v1865 = vadd.f32 %v1397, %v1807
        %v1866 = vadd.f32 %v1398, %v1812
        %v1867 = vadd.f32 %v1399, %v1815
        %v1868 = vadd.f32 %v1400, %v1820
        %v1869 = vadd.f32 %v1401, %v1823
        %v1870 = vadd.f32 %v1402, %v1828
        %v1871 = vadd.f32 %v1403, %v1831
        %v1872 = vadd.f32 %v1404, %v1836
        %v1873 = vadd.f32 %v1405, %v1839
        %v1874 = vadd.f32 %v1406, %v1844
        %v1875 = vadd.f32 %v1407, %v1847
        %v1876 = vadd.f32 %v1408, %v1852
        %v1877 = vadd.f32 %v1409, %v1855
        %v1878 = vld [vmem:[%s1171] sm:$0xe]
        %v1879 = vld [vmem:[%s1171 + $0xc] sm:$0xe]
        %v1880 = vld [vmem:[%s1171 + $0x18] sm:$0xe]
        %v1881 = vld [vmem:[%s1171 + $0x24] sm:$0xe]
        %v1882 = vld [vmem:[%s1171 + $0x30] sm:$0xe]
        %v1883 = vld [vmem:[%s1171 + $0x3c] sm:$0xe]
        %v1884 = vld [vmem:[%s1171 + $0x48] sm:$0xe]
        %v1885 = vld [vmem:[%s1171 + $0x54] sm:$0xe]
        %v1886 = vld [vmem:[%s1171 + $0x60] sm:$0xe]
        %v1887 = vld [vmem:[%s1171 + $0x6c] sm:$0xe]
        %v1918 = vrot.slane %v1878, 5
        %v1919 = vrot.slane %v1918, 4
        %v1920 = vrot.slane %v1411, 5
        %v1921 = vsel %vm899, %v1919, %v1920
        %v1922 = vrot.slane %v1920, 4
        %v1923 = vrot.slane %v1412, 5
        %v1924 = vsel %vm899, %v1922, %v1923
        %v1925 = vrot.slane %v1879, 5
        %v1926 = vrot.slane %v1925, 4
        %v1927 = vrot.slane %v1414, 5
        %v1928 = vsel %vm899, %v1926, %v1927
        %v1929 = vrot.slane %v1927, 4
        %v1930 = vrot.slane %v1415, 5
        %v1931 = vsel %vm899, %v1929, %v1930
        %v1932 = vrot.slane %v1880, 5
        %v1933 = vrot.slane %v1932, 4
        %v1934 = vrot.slane %v1417, 5
        %v1935 = vsel %vm899, %v1933, %v1934
        %v1936 = vrot.slane %v1934, 4
        %v1937 = vrot.slane %v1418, 5
        %v1938 = vsel %vm899, %v1936, %v1937
        %v1939 = vrot.slane %v1881, 5
        %v1940 = vrot.slane %v1939, 4
        %v1941 = vrot.slane %v1420, 5
        %v1942 = vsel %vm899, %v1940, %v1941
        %v1943 = vrot.slane %v1941, 4
        %v1944 = vrot.slane %v1421, 5
        %v1945 = vsel %vm899, %v1943, %v1944
        %v1946 = vrot.slane %v1882, 5
        %v1947 = vrot.slane %v1946, 4
        %v1948 = vrot.slane %v1423, 5
        %v1949 = vsel %vm899, %v1947, %v1948
        %v1950 = vrot.slane %v1948, 4
        %v1951 = vrot.slane %v1424, 5
        %v1952 = vsel %vm899, %v1950, %v1951
        %v1953 = vrot.slane %v1883, 5
        %v1954 = vrot.slane %v1953, 4
        %v1955 = vrot.slane %v1426, 5
        %v1956 = vsel %vm899, %v1954, %v1955
        %v1957 = vrot.slane %v1955, 4
        %v1958 = vrot.slane %v1427, 5
        %v1959 = vsel %vm899, %v1957, %v1958
        %v1960 = vrot.slane %v1884, 5
        %v1961 = vrot.slane %v1960, 4
        %v1962 = vrot.slane %v1429, 5
        %v1963 = vsel %vm899, %v1961, %v1962
        %v1964 = vrot.slane %v1962, 4
        %v1965 = vrot.slane %v1430, 5
        %v1966 = vsel %vm899, %v1964, %v1965
        %v1967 = vrot.slane %v1885, 5
        %v1968 = vrot.slane %v1967, 4
        %v1969 = vrot.slane %v1432, 5
        %v1970 = vsel %vm899, %v1968, %v1969
        %v1971 = vrot.slane %v1969, 4
        %v1972 = vrot.slane %v1433, 5
        %v1973 = vsel %vm899, %v1971, %v1972
        %v1974 = vrot.slane %v1886, 5
        %v1975 = vrot.slane %v1974, 4
        %v1976 = vrot.slane %v1435, 5
        %v1977 = vsel %vm899, %v1975, %v1976
        %v1978 = vrot.slane %v1976, 4
        %v1979 = vrot.slane %v1436, 5
        %v1980 = vsel %vm899, %v1978, %v1979
        %v1981 = vrot.slane %v1887, 5
        %v1982 = vrot.slane %v1981, 4
        %v1983 = vrot.slane %v1438, 5
        %v1984 = vsel %vm899, %v1982, %v1983
        %v1985 = vrot.slane %v1983, 4
        %v1986 = vrot.slane %v1439, 5
        %v1987 = vsel %vm899, %v1985, %v1986
        %s1988 = scalar_lea.vmem %s1, 20
        %v1989 = vld [vmem:[%s1988] sm:$0xf]
        %v1990 = vunpack.c.l.b16 %v1921
        %v1991 = vunpack.c.l.b16 %v1924
        %v1992 = vunpack.c.l.b16 %v1928
        %v1993 = vunpack.c.l.b16 %v1931
        %v1994 = vunpack.c.l.b16 %v1935
        %v1995 = vunpack.c.l.b16 %v1938
        %v1996 = vunpack.c.l.b16 %v1942
        %v1997 = vunpack.c.l.b16 %v1945
        %v1998 = vunpack.c.l.b16 %v1949
        %v1999 = vunpack.c.l.b16 %v1952
        %v2000 = vunpack.c.l.b16 %v1956
        %v2001 = vunpack.c.l.b16 %v1959
        %v2002 = vunpack.c.l.b16 %v1963
        %v2003 = vunpack.c.l.b16 %v1966
        %v2004 = vunpack.c.l.b16 %v1970
        %v2005 = vunpack.c.l.b16 %v1973
        %v2006 = vunpack.c.l.b16 %v1977
        %v2007 = vunpack.c.l.b16 %v1980
        %v2008 = vunpack.c.l.b16 %v1984
        %v2009 = vunpack.c.l.b16 %v1987
        %v2010 = vpack.c.b16 %v1991, %v1990
        %v2011 = vpack.c.b16 %v1993, %v1992
        %v2012 = vpack.c.b16 %v1995, %v1994
        %v2013 = vpack.c.b16 %v1997, %v1996
        %v2014 = vpack.c.b16 %v1999, %v1998
        %v2015 = vpack.c.b16 %v2001, %v2000
        %v2016 = vpack.c.b16 %v2003, %v2002
        %v2017 = vpack.c.b16 %v2005, %v2004
        %v2018 = vpack.c.b16 %v2007, %v2006
        %v2019 = vpack.c.b16 %v2009, %v2008
        %v2021 = vsel %vm523, %v2010, 0
        %v2024 = vsel %vm523, %v2011, 0
        %v2027 = vsel %vm523, %v2012, 0
        %v2030 = vsel %vm523, %v2013, 0
        %v2033 = vsel %vm523, %v2014, 0
        %v2036 = vsel %vm523, %v2015, 0
        %v2039 = vsel %vm523, %v2016, 0
        %v2042 = vsel %vm523, %v2017, 0
        %v2045 = vsel %vm523, %v2018, 0
        %v2048 = vsel %vm523, %v2019, 0
        %v2051 = vsel %vm554, %v1989, 0
        %2053 = vmatprep.subr.bf16.mxu0 0
        %2054 = vmatpush1.bf16.msra.mxu0 0
        %2055 = vmatprep.subr.bf16.mxu0 0
        %2056 = vmatpush1.bf16.msra.mxu0 0
        %2057 = vmatprep.subr.bf16.mxu0 0
        %2058 = vmatpush1.bf16.msra.mxu0 0
        %2059 = vmatprep.subr.bf16.mxu0 0
        %2060 = vmatpush1.bf16.msra.mxu0 0
        %2061 = vmatprep.subr.bf16.mxu0 0
        %2062 = vmatpush1.bf16.msra.mxu0 0
        %2063 = vmatprep.subr.bf16.mxu0 0
        %2064 = vmatpush1.bf16.msra.mxu0 0
        %2065 = vmatprep.subr.bf16.mxu0 0
        %2066 = vmatpush1.bf16.msra.mxu0 0
        %2067 = vmatprep.subr.bf16.mxu0 0
        %2068 = vmatpush1.bf16.msra.mxu0 %v2051
        %2069 = vmatprep.subr.bf16.mxu0 0
        %2070 = vmatpush2.bf16.msra.mxu0 0
        %2071 = vmatprep.subr.bf16.mxu0 0
        %2072 = vmatpush2.bf16.msra.mxu0 0
        %2073 = vmatprep.subr.bf16.mxu0 0
        %2074 = vmatpush2.bf16.msra.mxu0 0
        %2075 = vmatprep.subr.bf16.mxu0 0
        %2076 = vmatpush2.bf16.msra.mxu0 0
        %2077 = vmatprep.subr.bf16.mxu0 0
        %2078 = vmatpush2.bf16.msra.mxu0 0
        %2079 = vmatprep.subr.bf16.mxu0 0
        %2080 = vmatpush2.bf16.msra.mxu0 0
        %2081 = vmatprep.subr.bf16.mxu0 0
        %2082 = vmatpush2.bf16.msra.mxu0 0
        %2083 = vmatprep.subr.bf16.mxu0 0
        %2084 = vmatpush2.bf16.msra.mxu0 0
        %2085 = vmatprep.mubr.bf16.mxu0 0
        %2086 = vmatmul.mubr.bf16.gmra.mxu0 %v2021
        %v2087 = vpop.f32.mrf.mxu0
        %v2088 = vadd.f32 0.0, %v2087
        %v2089 = vpop.f32.mrf.mxu0
        %v2090 = vpop.f32.mrf.mxu0
        %v2091 = vadd.f32 0.0, %v2090
        %v2092 = vpop.f32.mrf.mxu0
        %2093 = vmatprep.mubr.bf16.mxu0 0
        %2094 = vmatmul.mubr.bf16.gmra.mxu0 %v2024
        %v2095 = vpop.f32.mrf.mxu0
        %v2096 = vadd.f32 0.0, %v2095
        %v2097 = vpop.f32.mrf.mxu0
        %v2098 = vpop.f32.mrf.mxu0
        %v2099 = vadd.f32 0.0, %v2098
        %v2100 = vpop.f32.mrf.mxu0
        %2101 = vmatprep.mubr.bf16.mxu0 0
        %2102 = vmatmul.mubr.bf16.gmra.mxu0 %v2027
        %v2103 = vpop.f32.mrf.mxu0
        %v2104 = vadd.f32 0.0, %v2103
        %v2105 = vpop.f32.mrf.mxu0
        %v2106 = vpop.f32.mrf.mxu0
        %v2107 = vadd.f32 0.0, %v2106
        %v2108 = vpop.f32.mrf.mxu0
        %2109 = vmatprep.mubr.bf16.mxu0 0
        %2110 = vmatmul.mubr.bf16.gmra.mxu0 %v2030
        %v2111 = vpop.f32.mrf.mxu0
        %v2112 = vadd.f32 0.0, %v2111
        %v2113 = vpop.f32.mrf.mxu0
        %v2114 = vpop.f32.mrf.mxu0
        %v2115 = vadd.f32 0.0, %v2114
        %v2116 = vpop.f32.mrf.mxu0
        %2117 = vmatprep.mubr.bf16.mxu0 0
        %2118 = vmatmul.mubr.bf16.gmra.mxu0 %v2033
        %v2119 = vpop.f32.mrf.mxu0
        %v2120 = vadd.f32 0.0, %v2119
        %v2121 = vpop.f32.mrf.mxu0
        %v2122 = vpop.f32.mrf.mxu0
        %v2123 = vadd.f32 0.0, %v2122
        %v2124 = vpop.f32.mrf.mxu0
        %2125 = vmatprep.mubr.bf16.mxu0 0
        %2126 = vmatmul.mubr.bf16.gmra.mxu0 %v2036
        %v2127 = vpop.f32.mrf.mxu0
        %v2128 = vadd.f32 0.0, %v2127
        %v2129 = vpop.f32.mrf.mxu0
        %v2130 = vpop.f32.mrf.mxu0
        %v2131 = vadd.f32 0.0, %v2130
        %v2132 = vpop.f32.mrf.mxu0
        %2133 = vmatprep.mubr.bf16.mxu0 0
        %2134 = vmatmul.mubr.bf16.gmra.mxu0 %v2039
        %v2135 = vpop.f32.mrf.mxu0
        %v2136 = vadd.f32 0.0, %v2135
        %v2137 = vpop.f32.mrf.mxu0
        %v2138 = vpop.f32.mrf.mxu0
        %v2139 = vadd.f32 0.0, %v2138
        %v2140 = vpop.f32.mrf.mxu0
        %2141 = vmatprep.mubr.bf16.mxu0 0
        %2142 = vmatmul.mubr.bf16.gmra.mxu0 %v2042
        %v2143 = vpop.f32.mrf.mxu0
        %v2144 = vadd.f32 0.0, %v2143
        %v2145 = vpop.f32.mrf.mxu0
        %v2146 = vpop.f32.mrf.mxu0
        %v2147 = vadd.f32 0.0, %v2146
        %v2148 = vpop.f32.mrf.mxu0
        %2149 = vmatprep.mubr.bf16.mxu0 0
        %2150 = vmatmul.mubr.bf16.gmra.mxu0 %v2045
        %v2151 = vpop.f32.mrf.mxu0
        %v2152 = vadd.f32 0.0, %v2151
        %v2153 = vpop.f32.mrf.mxu0
        %v2154 = vpop.f32.mrf.mxu0
        %v2155 = vadd.f32 0.0, %v2154
        %v2156 = vpop.f32.mrf.mxu0
        %2157 = vmatprep.mubr.bf16.mxu0 0
        %2158 = vmatmul.mubr.bf16.gmra.mxu0 %v2048
        %v2159 = vpop.f32.mrf.mxu0
        %v2160 = vadd.f32 0.0, %v2159
        %v2161 = vpop.f32.mrf.mxu0
        %v2162 = vpop.f32.mrf.mxu0
        %v2163 = vadd.f32 0.0, %v2162
        %v2164 = vpop.f32.mrf.mxu0
        %2165 = vdwg.mxu0
        %v2166 = vadd.f32 %v1858, %v2088
        %v2167 = vadd.f32 %v1859, %v2091
        %v2168 = vadd.f32 %v1860, %v2096
        %v2169 = vadd.f32 %v1861, %v2099
        %v2170 = vadd.f32 %v1862, %v2104
        %v2171 = vadd.f32 %v1863, %v2107
        %v2172 = vadd.f32 %v1864, %v2112
        %v2173 = vadd.f32 %v1865, %v2115
        %v2174 = vadd.f32 %v1866, %v2120
        %v2175 = vadd.f32 %v1867, %v2123
        %v2176 = vadd.f32 %v1868, %v2128
        %v2177 = vadd.f32 %v1869, %v2131
        %v2178 = vadd.f32 %v1870, %v2136
        %v2179 = vadd.f32 %v1871, %v2139
        %v2180 = vadd.f32 %v1872, %v2144
        %v2181 = vadd.f32 %v1873, %v2147
        %v2182 = vadd.f32 %v1874, %v2152
        %v2183 = vadd.f32 %v1875, %v2155
        %v2184 = vadd.f32 %v1876, %v2160
        %v2185 = vadd.f32 %v1877, %v2163
        %s2186 = sadd.s32 %s212, 2
        %s2187 = smul.u32 %s2186, 3
        %s2188 = smul.addr %s2187, 4
        %s2189 = scalar_lea.vmem %s209, %s2188
        %v2190 = vld [vmem:[%s2189] sm:$0xf]
        %v2191 = vld [vmem:[%s2189 + $0x4] sm:$0xf]
        %v2192 = vld [vmem:[%s2189 + $0xc] sm:$0xf]
        %v2193 = vld [vmem:[%s2189 + $0x10] sm:$0xf]
        %v2194 = vld [vmem:[%s2189 + $0x18] sm:$0xf]
        %v2195 = vld [vmem:[%s2189 + $0x1c] sm:$0xf]
        %v2196 = vld [vmem:[%s2189 + $0x24] sm:$0xf]
        %v2197 = vld [vmem:[%s2189 + $0x28] sm:$0xf]
        %v2198 = vld [vmem:[%s2189 + $0x30] sm:$0xf]
        %v2199 = vld [vmem:[%s2189 + $0x34] sm:$0xf]
        %v2200 = vld [vmem:[%s2189 + $0x3c] sm:$0xf]
        %v2201 = vld [vmem:[%s2189 + $0x40] sm:$0xf]
        %v2202 = vld [vmem:[%s2189 + $0x48] sm:$0xf]
        %v2203 = vld [vmem:[%s2189 + $0x4c] sm:$0xf]
        %v2204 = vld [vmem:[%s2189 + $0x54] sm:$0xf]
        %v2205 = vld [vmem:[%s2189 + $0x58] sm:$0xf]
        %v2206 = vld [vmem:[%s2189 + $0x60] sm:$0xf]
        %v2207 = vld [vmem:[%s2189 + $0x64] sm:$0xf]
        %v2208 = vld [vmem:[%s2189 + $0x6c] sm:$0xf]
        %v2209 = vld [vmem:[%s2189 + $0x70] sm:$0xf]
        %s2210 = scalar_lea.vmem %s1, 24
        %v2211 = vld [vmem:[%s2210] sm:$0xf]
        %v2232 = vunpack.c.l.b16 %v2190
        %v2233 = vunpack.c.l.b16 %v2191
        %v2234 = vunpack.c.l.b16 %v2192
        %v2235 = vunpack.c.l.b16 %v2193
        %v2236 = vunpack.c.l.b16 %v2194
        %v2237 = vunpack.c.l.b16 %v2195
        %v2238 = vunpack.c.l.b16 %v2196
        %v2239 = vunpack.c.l.b16 %v2197
        %v2240 = vunpack.c.l.b16 %v2198
        %v2241 = vunpack.c.l.b16 %v2199
        %v2242 = vunpack.c.l.b16 %v2200
        %v2243 = vunpack.c.l.b16 %v2201
        %v2244 = vunpack.c.l.b16 %v2202
        %v2245 = vunpack.c.l.b16 %v2203
        %v2246 = vunpack.c.l.b16 %v2204
        %v2247 = vunpack.c.l.b16 %v2205
        %v2248 = vunpack.c.l.b16 %v2206
        %v2249 = vunpack.c.l.b16 %v2207
        %v2250 = vunpack.c.l.b16 %v2208
        %v2251 = vunpack.c.l.b16 %v2209
        %v2252 = vpack.c.b16 %v2233, %v2232
        %v2253 = vpack.c.b16 %v2235, %v2234
        %v2254 = vpack.c.b16 %v2237, %v2236
        %v2255 = vpack.c.b16 %v2239, %v2238
        %v2256 = vpack.c.b16 %v2241, %v2240
        %v2257 = vpack.c.b16 %v2243, %v2242
        %v2258 = vpack.c.b16 %v2245, %v2244
        %v2259 = vpack.c.b16 %v2247, %v2246
        %v2260 = vpack.c.b16 %v2249, %v2248
        %v2261 = vpack.c.b16 %v2251, %v2250
        %v2263 = vsel %vm523, %v2252, 0
        %v2266 = vsel %vm523, %v2253, 0
        %v2269 = vsel %vm523, %v2254, 0
        %v2272 = vsel %vm523, %v2255, 0
        %v2275 = vsel %vm523, %v2256, 0
        %v2278 = vsel %vm523, %v2257, 0
        %v2281 = vsel %vm523, %v2258, 0
        %v2284 = vsel %vm523, %v2259, 0
        %v2287 = vsel %vm523, %v2260, 0
        %v2290 = vsel %vm523, %v2261, 0
        %v2293 = vsel %vm554, %v2211, 0
        %2295 = vmatprep.subr.bf16.mxu0 0
        %2296 = vmatpush1.bf16.msra.mxu0 0
        %2297 = vmatprep.subr.bf16.mxu0 0
        %2298 = vmatpush1.bf16.msra.mxu0 0
        %2299 = vmatprep.subr.bf16.mxu0 0
        %2300 = vmatpush1.bf16.msra.mxu0 0
        %2301 = vmatprep.subr.bf16.mxu0 0
        %2302 = vmatpush1.bf16.msra.mxu0 0
        %2303 = vmatprep.subr.bf16.mxu0 0
        %2304 = vmatpush1.bf16.msra.mxu0 0
        %2305 = vmatprep.subr.bf16.mxu0 0
        %2306 = vmatpush1.bf16.msra.mxu0 0
        %2307 = vmatprep.subr.bf16.mxu0 0
        %2308 = vmatpush1.bf16.msra.mxu0 0
        %2309 = vmatprep.subr.bf16.mxu0 0
        %2310 = vmatpush1.bf16.msra.mxu0 %v2293
        %2311 = vmatprep.subr.bf16.mxu0 0
        %2312 = vmatpush2.bf16.msra.mxu0 0
        %2313 = vmatprep.subr.bf16.mxu0 0
        %2314 = vmatpush2.bf16.msra.mxu0 0
        %2315 = vmatprep.subr.bf16.mxu0 0
        %2316 = vmatpush2.bf16.msra.mxu0 0
        %2317 = vmatprep.subr.bf16.mxu0 0
        %2318 = vmatpush2.bf16.msra.mxu0 0
        %2319 = vmatprep.subr.bf16.mxu0 0
        %2320 = vmatpush2.bf16.msra.mxu0 0
        %2321 = vmatprep.subr.bf16.mxu0 0
        %2322 = vmatpush2.bf16.msra.mxu0 0
        %2323 = vmatprep.subr.bf16.mxu0 0
        %2324 = vmatpush2.bf16.msra.mxu0 0
        %2325 = vmatprep.subr.bf16.mxu0 0
        %2326 = vmatpush2.bf16.msra.mxu0 0
        %2327 = vmatprep.mubr.bf16.mxu0 0
        %2328 = vmatmul.mubr.bf16.gmra.mxu0 %v2263
        %v2329 = vpop.f32.mrf.mxu0
        %v2330 = vadd.f32 0.0, %v2329
        %v2331 = vpop.f32.mrf.mxu0
        %v2332 = vpop.f32.mrf.mxu0
        %v2333 = vadd.f32 0.0, %v2332
        %v2334 = vpop.f32.mrf.mxu0
        %2335 = vmatprep.mubr.bf16.mxu0 0
        %2336 = vmatmul.mubr.bf16.gmra.mxu0 %v2266
        %v2337 = vpop.f32.mrf.mxu0
        %v2338 = vadd.f32 0.0, %v2337
        %v2339 = vpop.f32.mrf.mxu0
        %v2340 = vpop.f32.mrf.mxu0
        %v2341 = vadd.f32 0.0, %v2340
        %v2342 = vpop.f32.mrf.mxu0
        %2343 = vmatprep.mubr.bf16.mxu0 0
        %2344 = vmatmul.mubr.bf16.gmra.mxu0 %v2269
        %v2345 = vpop.f32.mrf.mxu0
        %v2346 = vadd.f32 0.0, %v2345
        %v2347 = vpop.f32.mrf.mxu0
        %v2348 = vpop.f32.mrf.mxu0
        %v2349 = vadd.f32 0.0, %v2348
        %v2350 = vpop.f32.mrf.mxu0
        %2351 = vmatprep.mubr.bf16.mxu0 0
        %2352 = vmatmul.mubr.bf16.gmra.mxu0 %v2272
        %v2353 = vpop.f32.mrf.mxu0
        %v2354 = vadd.f32 0.0, %v2353
        %v2355 = vpop.f32.mrf.mxu0
        %v2356 = vpop.f32.mrf.mxu0
        %v2357 = vadd.f32 0.0, %v2356
        %v2358 = vpop.f32.mrf.mxu0
        %2359 = vmatprep.mubr.bf16.mxu0 0
        %2360 = vmatmul.mubr.bf16.gmra.mxu0 %v2275
        %v2361 = vpop.f32.mrf.mxu0
        %v2362 = vadd.f32 0.0, %v2361
        %v2363 = vpop.f32.mrf.mxu0
        %v2364 = vpop.f32.mrf.mxu0
        %v2365 = vadd.f32 0.0, %v2364
        %v2366 = vpop.f32.mrf.mxu0
        %2367 = vmatprep.mubr.bf16.mxu0 0
        %2368 = vmatmul.mubr.bf16.gmra.mxu0 %v2278
        %v2369 = vpop.f32.mrf.mxu0
        %v2370 = vadd.f32 0.0, %v2369
        %v2371 = vpop.f32.mrf.mxu0
        %v2372 = vpop.f32.mrf.mxu0
        %v2373 = vadd.f32 0.0, %v2372
        %v2374 = vpop.f32.mrf.mxu0
        %2375 = vmatprep.mubr.bf16.mxu0 0
        %2376 = vmatmul.mubr.bf16.gmra.mxu0 %v2281
        %v2377 = vpop.f32.mrf.mxu0
        %v2378 = vadd.f32 0.0, %v2377
        %v2379 = vpop.f32.mrf.mxu0
        %v2380 = vpop.f32.mrf.mxu0
        %v2381 = vadd.f32 0.0, %v2380
        %v2382 = vpop.f32.mrf.mxu0
        %2383 = vmatprep.mubr.bf16.mxu0 0
        %2384 = vmatmul.mubr.bf16.gmra.mxu0 %v2284
        %v2385 = vpop.f32.mrf.mxu0
        %v2386 = vadd.f32 0.0, %v2385
        %v2387 = vpop.f32.mrf.mxu0
        %v2388 = vpop.f32.mrf.mxu0
        %v2389 = vadd.f32 0.0, %v2388
        %v2390 = vpop.f32.mrf.mxu0
        %2391 = vmatprep.mubr.bf16.mxu0 0
        %2392 = vmatmul.mubr.bf16.gmra.mxu0 %v2287
        %v2393 = vpop.f32.mrf.mxu0
        %v2394 = vadd.f32 0.0, %v2393
        %v2395 = vpop.f32.mrf.mxu0
        %v2396 = vpop.f32.mrf.mxu0
        %v2397 = vadd.f32 0.0, %v2396
        %v2398 = vpop.f32.mrf.mxu0
        %2399 = vmatprep.mubr.bf16.mxu0 0
        %2400 = vmatmul.mubr.bf16.gmra.mxu0 %v2290
        %v2401 = vpop.f32.mrf.mxu0
        %v2402 = vadd.f32 0.0, %v2401
        %v2403 = vpop.f32.mrf.mxu0
        %v2404 = vpop.f32.mrf.mxu0
        %v2405 = vadd.f32 0.0, %v2404
        %v2406 = vpop.f32.mrf.mxu0
        %2407 = vdwg.mxu0
        %v2408 = vadd.f32 %v2166, %v2330
        %v2409 = vadd.f32 %v2167, %v2333
        %v2410 = vadd.f32 %v2168, %v2338
        %v2411 = vadd.f32 %v2169, %v2341
        %v2412 = vadd.f32 %v2170, %v2346
        %v2413 = vadd.f32 %v2171, %v2349
        %v2414 = vadd.f32 %v2172, %v2354
        %v2415 = vadd.f32 %v2173, %v2357
        %v2416 = vadd.f32 %v2174, %v2362
        %v2417 = vadd.f32 %v2175, %v2365
        %v2418 = vadd.f32 %v2176, %v2370
        %v2419 = vadd.f32 %v2177, %v2373
        %v2420 = vadd.f32 %v2178, %v2378
        %v2421 = vadd.f32 %v2179, %v2381
        %v2422 = vadd.f32 %v2180, %v2386
        %v2423 = vadd.f32 %v2181, %v2389
        %v2424 = vadd.f32 %v2182, %v2394
        %v2425 = vadd.f32 %v2183, %v2397
        %v2426 = vadd.f32 %v2184, %v2402
        %v2427 = vadd.f32 %v2185, %v2405
        %v2428 = vld [vmem:[%s2189] sm:$0xf]
        %v2429 = vld [vmem:[%s2189 + $0x4] sm:$0xf]
        %v2430 = vld [vmem:[%s2189 + $0x8] sm:$0x1]
        %v2431 = vld [vmem:[%s2189 + $0xc] sm:$0xf]
        %v2432 = vld [vmem:[%s2189 + $0x10] sm:$0xf]
        %v2433 = vld [vmem:[%s2189 + $0x14] sm:$0x1]
        %v2434 = vld [vmem:[%s2189 + $0x18] sm:$0xf]
        %v2435 = vld [vmem:[%s2189 + $0x1c] sm:$0xf]
        %v2436 = vld [vmem:[%s2189 + $0x20] sm:$0x1]
        %v2437 = vld [vmem:[%s2189 + $0x24] sm:$0xf]
        %v2438 = vld [vmem:[%s2189 + $0x28] sm:$0xf]
        %v2439 = vld [vmem:[%s2189 + $0x2c] sm:$0x1]
        %v2440 = vld [vmem:[%s2189 + $0x30] sm:$0xf]
        %v2441 = vld [vmem:[%s2189 + $0x34] sm:$0xf]
        %v2442 = vld [vmem:[%s2189 + $0x38] sm:$0x1]
        %v2443 = vld [vmem:[%s2189 + $0x3c] sm:$0xf]
        %v2444 = vld [vmem:[%s2189 + $0x40] sm:$0xf]
        %v2445 = vld [vmem:[%s2189 + $0x44] sm:$0x1]
        %v2446 = vld [vmem:[%s2189 + $0x48] sm:$0xf]
        %v2447 = vld [vmem:[%s2189 + $0x4c] sm:$0xf]
        %v2448 = vld [vmem:[%s2189 + $0x50] sm:$0x1]
        %v2449 = vld [vmem:[%s2189 + $0x54] sm:$0xf]
        %v2450 = vld [vmem:[%s2189 + $0x58] sm:$0xf]
        %v2451 = vld [vmem:[%s2189 + $0x5c] sm:$0x1]
        %v2452 = vld [vmem:[%s2189 + $0x60] sm:$0xf]
        %v2453 = vld [vmem:[%s2189 + $0x64] sm:$0xf]
        %v2454 = vld [vmem:[%s2189 + $0x68] sm:$0x1]
        %v2455 = vld [vmem:[%s2189 + $0x6c] sm:$0xf]
        %v2456 = vld [vmem:[%s2189 + $0x70] sm:$0xf]
        %v2457 = vld [vmem:[%s2189 + $0x74] sm:$0x1]
        %v2459 = vshrl.u32 %v2428, 16
        %v2461 = vrot.slane %v2459, 4
        %v2462 = vshll.u32 %v2428, 16
        %v2464 = vrot.slane %v2462, 5
        %v2465 = vor.u32 %v2461, %v2464
        %v2466 = vrot.slane %v2465, 4
        %v2468 = vshll.u32 %v2429, 16
        %v2470 = vrot.slane %v2468, 5
        %v2471 = vsel %vm250, %v2466, %v2470
        %v2472 = vshrl.u32 %v2429, 16
        %v2474 = vrot.slane %v2472, 4
        %v2475 = vor.u32 %v2474, %v2470
        %v2476 = vrot.slane %v2475, 4
        %v2478 = vshll.u32 %v2430, 16
        %v2480 = vrot.slane %v2478, 5
        %v2481 = vsel %vm250, %v2476, %v2480
        %v2483 = vshrl.u32 %v2431, 16
        %v2485 = vrot.slane %v2483, 4
        %v2486 = vshll.u32 %v2431, 16
        %v2488 = vrot.slane %v2486, 5
        %v2489 = vor.u32 %v2485, %v2488
        %v2490 = vrot.slane %v2489, 4
        %v2492 = vshll.u32 %v2432, 16
        %v2494 = vrot.slane %v2492, 5
        %v2495 = vsel %vm250, %v2490, %v2494
        %v2496 = vshrl.u32 %v2432, 16
        %v2498 = vrot.slane %v2496, 4
        %v2499 = vor.u32 %v2498, %v2494
        %v2500 = vrot.slane %v2499, 4
        %v2502 = vshll.u32 %v2433, 16
        %v2504 = vrot.slane %v2502, 5
        %v2505 = vsel %vm250, %v2500, %v2504
        %v2507 = vshrl.u32 %v2434, 16
        %v2509 = vrot.slane %v2507, 4
        %v2510 = vshll.u32 %v2434, 16
        %v2512 = vrot.slane %v2510, 5
        %v2513 = vor.u32 %v2509, %v2512
        %v2514 = vrot.slane %v2513, 4
        %v2516 = vshll.u32 %v2435, 16
        %v2518 = vrot.slane %v2516, 5
        %v2519 = vsel %vm250, %v2514, %v2518
        %v2520 = vshrl.u32 %v2435, 16
        %v2522 = vrot.slane %v2520, 4
        %v2523 = vor.u32 %v2522, %v2518
        %v2524 = vrot.slane %v2523, 4
        %v2526 = vshll.u32 %v2436, 16
        %v2528 = vrot.slane %v2526, 5
        %v2529 = vsel %vm250, %v2524, %v2528
        %v2531 = vshrl.u32 %v2437, 16
        %v2533 = vrot.slane %v2531, 4
        %v2534 = vshll.u32 %v2437, 16
        %v2536 = vrot.slane %v2534, 5
        %v2537 = vor.u32 %v2533, %v2536
        %v2538 = vrot.slane %v2537, 4
        %v2540 = vshll.u32 %v2438, 16
        %v2542 = vrot.slane %v2540, 5
        %v2543 = vsel %vm250, %v2538, %v2542
        %v2544 = vshrl.u32 %v2438, 16
        %v2546 = vrot.slane %v2544, 4
        %v2547 = vor.u32 %v2546, %v2542
        %v2548 = vrot.slane %v2547, 4
        %v2550 = vshll.u32 %v2439, 16
        %v2552 = vrot.slane %v2550, 5
        %v2553 = vsel %vm250, %v2548, %v2552
        %v2555 = vshrl.u32 %v2440, 16
        %v2557 = vrot.slane %v2555, 4
        %v2558 = vshll.u32 %v2440, 16
        %v2560 = vrot.slane %v2558, 5
        %v2561 = vor.u32 %v2557, %v2560
        %v2562 = vrot.slane %v2561, 4
        %v2564 = vshll.u32 %v2441, 16
        %v2566 = vrot.slane %v2564, 5
        %v2567 = vsel %vm250, %v2562, %v2566
        %v2568 = vshrl.u32 %v2441, 16
        %v2570 = vrot.slane %v2568, 4
        %v2571 = vor.u32 %v2570, %v2566
        %v2572 = vrot.slane %v2571, 4
        %v2574 = vshll.u32 %v2442, 16
        %v2576 = vrot.slane %v2574, 5
        %v2577 = vsel %vm250, %v2572, %v2576
        %v2579 = vshrl.u32 %v2443, 16
        %v2581 = vrot.slane %v2579, 4
        %v2582 = vshll.u32 %v2443, 16
        %v2584 = vrot.slane %v2582, 5
        %v2585 = vor.u32 %v2581, %v2584
        %v2586 = vrot.slane %v2585, 4
        %v2588 = vshll.u32 %v2444, 16
        %v2590 = vrot.slane %v2588, 5
        %v2591 = vsel %vm250, %v2586, %v2590
        %v2592 = vshrl.u32 %v2444, 16
        %v2594 = vrot.slane %v2592, 4
        %v2595 = vor.u32 %v2594, %v2590
        %v2596 = vrot.slane %v2595, 4
        %v2598 = vshll.u32 %v2445, 16
        %v2600 = vrot.slane %v2598, 5
        %v2601 = vsel %vm250, %v2596, %v2600
        %v2603 = vshrl.u32 %v2446, 16
        %v2605 = vrot.slane %v2603, 4
        %v2606 = vshll.u32 %v2446, 16
        %v2608 = vrot.slane %v2606, 5
        %v2609 = vor.u32 %v2605, %v2608
        %v2610 = vrot.slane %v2609, 4
        %v2612 = vshll.u32 %v2447, 16
        %v2614 = vrot.slane %v2612, 5
        %v2615 = vsel %vm250, %v2610, %v2614
        %v2616 = vshrl.u32 %v2447, 16
        %v2618 = vrot.slane %v2616, 4
        %v2619 = vor.u32 %v2618, %v2614
        %v2620 = vrot.slane %v2619, 4
        %v2622 = vshll.u32 %v2448, 16
        %v2624 = vrot.slane %v2622, 5
        %v2625 = vsel %vm250, %v2620, %v2624
        %v2627 = vshrl.u32 %v2449, 16
        %v2629 = vrot.slane %v2627, 4
        %v2630 = vshll.u32 %v2449, 16
        %v2632 = vrot.slane %v2630, 5
        %v2633 = vor.u32 %v2629, %v2632
        %v2634 = vrot.slane %v2633, 4
        %v2636 = vshll.u32 %v2450, 16
        %v2638 = vrot.slane %v2636, 5
        %v2639 = vsel %vm250, %v2634, %v2638
        %v2640 = vshrl.u32 %v2450, 16
        %v2642 = vrot.slane %v2640, 4
        %v2643 = vor.u32 %v2642, %v2638
        %v2644 = vrot.slane %v2643, 4
        %v2646 = vshll.u32 %v2451, 16
        %v2648 = vrot.slane %v2646, 5
        %v2649 = vsel %vm250, %v2644, %v2648
        %v2651 = vshrl.u32 %v2452, 16
        %v2653 = vrot.slane %v2651, 4
        %v2654 = vshll.u32 %v2452, 16
        %v2656 = vrot.slane %v2654, 5
        %v2657 = vor.u32 %v2653, %v2656
        %v2658 = vrot.slane %v2657, 4
        %v2660 = vshll.u32 %v2453, 16
        %v2662 = vrot.slane %v2660, 5
        %v2663 = vsel %vm250, %v2658, %v2662
        %v2664 = vshrl.u32 %v2453, 16
        %v2666 = vrot.slane %v2664, 4
        %v2667 = vor.u32 %v2666, %v2662
        %v2668 = vrot.slane %v2667, 4
        %v2670 = vshll.u32 %v2454, 16
        %v2672 = vrot.slane %v2670, 5
        %v2673 = vsel %vm250, %v2668, %v2672
        %v2675 = vshrl.u32 %v2455, 16
        %v2677 = vrot.slane %v2675, 4
        %v2678 = vshll.u32 %v2455, 16
        %v2680 = vrot.slane %v2678, 5
        %v2681 = vor.u32 %v2677, %v2680
        %v2682 = vrot.slane %v2681, 4
        %v2684 = vshll.u32 %v2456, 16
        %v2686 = vrot.slane %v2684, 5
        %v2687 = vsel %vm250, %v2682, %v2686
        %v2688 = vshrl.u32 %v2456, 16
        %v2690 = vrot.slane %v2688, 4
        %v2691 = vor.u32 %v2690, %v2686
        %v2692 = vrot.slane %v2691, 4
        %v2694 = vshll.u32 %v2457, 16
        %v2696 = vrot.slane %v2694, 5
        %v2697 = vsel %vm250, %v2692, %v2696
        %s2698 = scalar_lea.vmem %s1, 28
        %v2699 = vld [vmem:[%s2698] sm:$0xf]
        %v2700 = vunpack.c.l.b16 %v2471
        %v2701 = vunpack.c.l.b16 %v2481
        %v2702 = vunpack.c.l.b16 %v2495
        %v2703 = vunpack.c.l.b16 %v2505
        %v2704 = vunpack.c.l.b16 %v2519
        %v2705 = vunpack.c.l.b16 %v2529
        %v2706 = vunpack.c.l.b16 %v2543
        %v2707 = vunpack.c.l.b16 %v2553
        %v2708 = vunpack.c.l.b16 %v2567
        %v2709 = vunpack.c.l.b16 %v2577
        %v2710 = vunpack.c.l.b16 %v2591
        %v2711 = vunpack.c.l.b16 %v2601
        %v2712 = vunpack.c.l.b16 %v2615
        %v2713 = vunpack.c.l.b16 %v2625
        %v2714 = vunpack.c.l.b16 %v2639
        %v2715 = vunpack.c.l.b16 %v2649
        %v2716 = vunpack.c.l.b16 %v2663
        %v2717 = vunpack.c.l.b16 %v2673
        %v2718 = vunpack.c.l.b16 %v2687
        %v2719 = vunpack.c.l.b16 %v2697
        %v2720 = vpack.c.b16 %v2701, %v2700
        %v2721 = vpack.c.b16 %v2703, %v2702
        %v2722 = vpack.c.b16 %v2705, %v2704
        %v2723 = vpack.c.b16 %v2707, %v2706
        %v2724 = vpack.c.b16 %v2709, %v2708
        %v2725 = vpack.c.b16 %v2711, %v2710
        %v2726 = vpack.c.b16 %v2713, %v2712
        %v2727 = vpack.c.b16 %v2715, %v2714
        %v2728 = vpack.c.b16 %v2717, %v2716
        %v2729 = vpack.c.b16 %v2719, %v2718
        %v2731 = vsel %vm523, %v2720, 0
        %v2734 = vsel %vm523, %v2721, 0
        %v2737 = vsel %vm523, %v2722, 0
        %v2740 = vsel %vm523, %v2723, 0
        %v2743 = vsel %vm523, %v2724, 0
        %v2746 = vsel %vm523, %v2725, 0
        %v2749 = vsel %vm523, %v2726, 0
        %v2752 = vsel %vm523, %v2727, 0
        %v2755 = vsel %vm523, %v2728, 0
        %v2758 = vsel %vm523, %v2729, 0
        %v2761 = vsel %vm554, %v2699, 0
        %2763 = vmatprep.subr.bf16.mxu0 0
        %2764 = vmatpush1.bf16.msra.mxu0 0
        %2765 = vmatprep.subr.bf16.mxu0 0
        %2766 = vmatpush1.bf16.msra.mxu0 0
        %2767 = vmatprep.subr.bf16.mxu0 0
        %2768 = vmatpush1.bf16.msra.mxu0 0
        %2769 = vmatprep.subr.bf16.mxu0 0
        %2770 = vmatpush1.bf16.msra.mxu0 0
        %2771 = vmatprep.subr.bf16.mxu0 0
        %2772 = vmatpush1.bf16.msra.mxu0 0
        %2773 = vmatprep.subr.bf16.mxu0 0
        %2774 = vmatpush1.bf16.msra.mxu0 0
        %2775 = vmatprep.subr.bf16.mxu0 0
        %2776 = vmatpush1.bf16.msra.mxu0 0
        %2777 = vmatprep.subr.bf16.mxu0 0
        %2778 = vmatpush1.bf16.msra.mxu0 %v2761
        %2779 = vmatprep.subr.bf16.mxu0 0
        %2780 = vmatpush2.bf16.msra.mxu0 0
        %2781 = vmatprep.subr.bf16.mxu0 0
        %2782 = vmatpush2.bf16.msra.mxu0 0
        %2783 = vmatprep.subr.bf16.mxu0 0
        %2784 = vmatpush2.bf16.msra.mxu0 0
        %2785 = vmatprep.subr.bf16.mxu0 0
        %2786 = vmatpush2.bf16.msra.mxu0 0
        %2787 = vmatprep.subr.bf16.mxu0 0
        %2788 = vmatpush2.bf16.msra.mxu0 0
        %2789 = vmatprep.subr.bf16.mxu0 0
        %2790 = vmatpush2.bf16.msra.mxu0 0
        %2791 = vmatprep.subr.bf16.mxu0 0
        %2792 = vmatpush2.bf16.msra.mxu0 0
        %2793 = vmatprep.subr.bf16.mxu0 0
        %2794 = vmatpush2.bf16.msra.mxu0 0
        %2795 = vmatprep.mubr.bf16.mxu0 0
        %2796 = vmatmul.mubr.bf16.gmra.mxu0 %v2731
        %v2797 = vpop.f32.mrf.mxu0
        %v2798 = vadd.f32 0.0, %v2797
        %v2799 = vpop.f32.mrf.mxu0
        %v2800 = vpop.f32.mrf.mxu0
        %v2801 = vadd.f32 0.0, %v2800
        %v2802 = vpop.f32.mrf.mxu0
        %2803 = vmatprep.mubr.bf16.mxu0 0
        %2804 = vmatmul.mubr.bf16.gmra.mxu0 %v2734
        %v2805 = vpop.f32.mrf.mxu0
        %v2806 = vadd.f32 0.0, %v2805
        %v2807 = vpop.f32.mrf.mxu0
        %v2808 = vpop.f32.mrf.mxu0
        %v2809 = vadd.f32 0.0, %v2808
        %v2810 = vpop.f32.mrf.mxu0
        %2811 = vmatprep.mubr.bf16.mxu0 0
        %2812 = vmatmul.mubr.bf16.gmra.mxu0 %v2737
        %v2813 = vpop.f32.mrf.mxu0
        %v2814 = vadd.f32 0.0, %v2813
        %v2815 = vpop.f32.mrf.mxu0
        %v2816 = vpop.f32.mrf.mxu0
        %v2817 = vadd.f32 0.0, %v2816
        %v2818 = vpop.f32.mrf.mxu0
        %2819 = vmatprep.mubr.bf16.mxu0 0
        %2820 = vmatmul.mubr.bf16.gmra.mxu0 %v2740
        %v2821 = vpop.f32.mrf.mxu0
        %v2822 = vadd.f32 0.0, %v2821
        %v2823 = vpop.f32.mrf.mxu0
        %v2824 = vpop.f32.mrf.mxu0
        %v2825 = vadd.f32 0.0, %v2824
        %v2826 = vpop.f32.mrf.mxu0
        %2827 = vmatprep.mubr.bf16.mxu0 0
        %2828 = vmatmul.mubr.bf16.gmra.mxu0 %v2743
        %v2829 = vpop.f32.mrf.mxu0
        %v2830 = vadd.f32 0.0, %v2829
        %v2831 = vpop.f32.mrf.mxu0
        %v2832 = vpop.f32.mrf.mxu0
        %v2833 = vadd.f32 0.0, %v2832
        %v2834 = vpop.f32.mrf.mxu0
        %2835 = vmatprep.mubr.bf16.mxu0 0
        %2836 = vmatmul.mubr.bf16.gmra.mxu0 %v2746
        %v2837 = vpop.f32.mrf.mxu0
        %v2838 = vadd.f32 0.0, %v2837
        %v2839 = vpop.f32.mrf.mxu0
        %v2840 = vpop.f32.mrf.mxu0
        %v2841 = vadd.f32 0.0, %v2840
        %v2842 = vpop.f32.mrf.mxu0
        %2843 = vmatprep.mubr.bf16.mxu0 0
        %2844 = vmatmul.mubr.bf16.gmra.mxu0 %v2749
        %v2845 = vpop.f32.mrf.mxu0
        %v2846 = vadd.f32 0.0, %v2845
        %v2847 = vpop.f32.mrf.mxu0
        %v2848 = vpop.f32.mrf.mxu0
        %v2849 = vadd.f32 0.0, %v2848
        %v2850 = vpop.f32.mrf.mxu0
        %2851 = vmatprep.mubr.bf16.mxu0 0
        %2852 = vmatmul.mubr.bf16.gmra.mxu0 %v2752
        %v2853 = vpop.f32.mrf.mxu0
        %v2854 = vadd.f32 0.0, %v2853
        %v2855 = vpop.f32.mrf.mxu0
        %v2856 = vpop.f32.mrf.mxu0
        %v2857 = vadd.f32 0.0, %v2856
        %v2858 = vpop.f32.mrf.mxu0
        %2859 = vmatprep.mubr.bf16.mxu0 0
        %2860 = vmatmul.mubr.bf16.gmra.mxu0 %v2755
        %v2861 = vpop.f32.mrf.mxu0
        %v2862 = vadd.f32 0.0, %v2861
        %v2863 = vpop.f32.mrf.mxu0
        %v2864 = vpop.f32.mrf.mxu0
        %v2865 = vadd.f32 0.0, %v2864
        %v2866 = vpop.f32.mrf.mxu0
        %2867 = vmatprep.mubr.bf16.mxu0 0
        %2868 = vmatmul.mubr.bf16.gmra.mxu0 %v2758
        %v2869 = vpop.f32.mrf.mxu0
        %v2870 = vadd.f32 0.0, %v2869
        %v2871 = vpop.f32.mrf.mxu0
        %v2872 = vpop.f32.mrf.mxu0
        %v2873 = vadd.f32 0.0, %v2872
        %v2874 = vpop.f32.mrf.mxu0
        %2875 = vdwg.mxu0
        %v2876 = vadd.f32 %v2408, %v2798
        %v2877 = vadd.f32 %v2409, %v2801
        %v2878 = vadd.f32 %v2410, %v2806
        %v2879 = vadd.f32 %v2411, %v2809
        %v2880 = vadd.f32 %v2412, %v2814
        %v2881 = vadd.f32 %v2413, %v2817
        %v2882 = vadd.f32 %v2414, %v2822
        %v2883 = vadd.f32 %v2415, %v2825
        %v2884 = vadd.f32 %v2416, %v2830
        %v2885 = vadd.f32 %v2417, %v2833
        %v2886 = vadd.f32 %v2418, %v2838
        %v2887 = vadd.f32 %v2419, %v2841
        %v2888 = vadd.f32 %v2420, %v2846
        %v2889 = vadd.f32 %v2421, %v2849
        %v2890 = vadd.f32 %v2422, %v2854
        %v2891 = vadd.f32 %v2423, %v2857
        %v2892 = vadd.f32 %v2424, %v2862
        %v2893 = vadd.f32 %v2425, %v2865
        %v2894 = vadd.f32 %v2426, %v2870
        %v2895 = vadd.f32 %v2427, %v2873
        %v2896 = vld [vmem:[%s2189] sm:$0xe]
        %v2897 = vld [vmem:[%s2189 + $0xc] sm:$0xe]
        %v2898 = vld [vmem:[%s2189 + $0x18] sm:$0xe]
        %v2899 = vld [vmem:[%s2189 + $0x24] sm:$0xe]
        %v2900 = vld [vmem:[%s2189 + $0x30] sm:$0xe]
        %v2901 = vld [vmem:[%s2189 + $0x3c] sm:$0xe]
        %v2902 = vld [vmem:[%s2189 + $0x48] sm:$0xe]
        %v2903 = vld [vmem:[%s2189 + $0x54] sm:$0xe]
        %v2904 = vld [vmem:[%s2189 + $0x60] sm:$0xe]
        %v2905 = vld [vmem:[%s2189 + $0x6c] sm:$0xe]
        %v2936 = vrot.slane %v2896, 5
        %v2937 = vrot.slane %v2936, 4
        %v2938 = vrot.slane %v2429, 5
        %v2939 = vsel %vm899, %v2937, %v2938
        %v2940 = vrot.slane %v2938, 4
        %v2941 = vrot.slane %v2430, 5
        %v2942 = vsel %vm899, %v2940, %v2941
        %v2943 = vrot.slane %v2897, 5
        %v2944 = vrot.slane %v2943, 4
        %v2945 = vrot.slane %v2432, 5
        %v2946 = vsel %vm899, %v2944, %v2945
        %v2947 = vrot.slane %v2945, 4
        %v2948 = vrot.slane %v2433, 5
        %v2949 = vsel %vm899, %v2947, %v2948
        %v2950 = vrot.slane %v2898, 5
        %v2951 = vrot.slane %v2950, 4
        %v2952 = vrot.slane %v2435, 5
        %v2953 = vsel %vm899, %v2951, %v2952
        %v2954 = vrot.slane %v2952, 4
        %v2955 = vrot.slane %v2436, 5
        %v2956 = vsel %vm899, %v2954, %v2955
        %v2957 = vrot.slane %v2899, 5
        %v2958 = vrot.slane %v2957, 4
        %v2959 = vrot.slane %v2438, 5
        %v2960 = vsel %vm899, %v2958, %v2959
        %v2961 = vrot.slane %v2959, 4
        %v2962 = vrot.slane %v2439, 5
        %v2963 = vsel %vm899, %v2961, %v2962
        %v2964 = vrot.slane %v2900, 5
        %v2965 = vrot.slane %v2964, 4
        %v2966 = vrot.slane %v2441, 5
        %v2967 = vsel %vm899, %v2965, %v2966
        %v2968 = vrot.slane %v2966, 4
        %v2969 = vrot.slane %v2442, 5
        %v2970 = vsel %vm899, %v2968, %v2969
        %v2971 = vrot.slane %v2901, 5
        %v2972 = vrot.slane %v2971, 4
        %v2973 = vrot.slane %v2444, 5
        %v2974 = vsel %vm899, %v2972, %v2973
        %v2975 = vrot.slane %v2973, 4
        %v2976 = vrot.slane %v2445, 5
        %v2977 = vsel %vm899, %v2975, %v2976
        %v2978 = vrot.slane %v2902, 5
        %v2979 = vrot.slane %v2978, 4
        %v2980 = vrot.slane %v2447, 5
        %v2981 = vsel %vm899, %v2979, %v2980
        %v2982 = vrot.slane %v2980, 4
        %v2983 = vrot.slane %v2448, 5
        %v2984 = vsel %vm899, %v2982, %v2983
        %v2985 = vrot.slane %v2903, 5
        %v2986 = vrot.slane %v2985, 4
        %v2987 = vrot.slane %v2450, 5
        %v2988 = vsel %vm899, %v2986, %v2987
        %v2989 = vrot.slane %v2987, 4
        %v2990 = vrot.slane %v2451, 5
        %v2991 = vsel %vm899, %v2989, %v2990
        %v2992 = vrot.slane %v2904, 5
        %v2993 = vrot.slane %v2992, 4
        %v2994 = vrot.slane %v2453, 5
        %v2995 = vsel %vm899, %v2993, %v2994
        %v2996 = vrot.slane %v2994, 4
        %v2997 = vrot.slane %v2454, 5
        %v2998 = vsel %vm899, %v2996, %v2997
        %v2999 = vrot.slane %v2905, 5
        %v3000 = vrot.slane %v2999, 4
        %v3001 = vrot.slane %v2456, 5
        %v3002 = vsel %vm899, %v3000, %v3001
        %v3003 = vrot.slane %v3001, 4
        %v3004 = vrot.slane %v2457, 5
        %v3005 = vsel %vm899, %v3003, %v3004
        %s3006 = scalar_lea.vmem %s1, 32
        %v3007 = vld [vmem:[%s3006] sm:$0xf]
        %v3008 = vunpack.c.l.b16 %v2939
        %v3009 = vunpack.c.l.b16 %v2942
        %v3010 = vunpack.c.l.b16 %v2946
        %v3011 = vunpack.c.l.b16 %v2949
        %v3012 = vunpack.c.l.b16 %v2953
        %v3013 = vunpack.c.l.b16 %v2956
        %v3014 = vunpack.c.l.b16 %v2960
        %v3015 = vunpack.c.l.b16 %v2963
        %v3016 = vunpack.c.l.b16 %v2967
        %v3017 = vunpack.c.l.b16 %v2970
        %v3018 = vunpack.c.l.b16 %v2974
        %v3019 = vunpack.c.l.b16 %v2977
        %v3020 = vunpack.c.l.b16 %v2981
        %v3021 = vunpack.c.l.b16 %v2984
        %v3022 = vunpack.c.l.b16 %v2988
        %v3023 = vunpack.c.l.b16 %v2991
        %v3024 = vunpack.c.l.b16 %v2995
        %v3025 = vunpack.c.l.b16 %v2998
        %v3026 = vunpack.c.l.b16 %v3002
        %v3027 = vunpack.c.l.b16 %v3005
        %v3028 = vpack.c.b16 %v3009, %v3008
        %v3029 = vpack.c.b16 %v3011, %v3010
        %v3030 = vpack.c.b16 %v3013, %v3012
        %v3031 = vpack.c.b16 %v3015, %v3014
        %v3032 = vpack.c.b16 %v3017, %v3016
        %v3033 = vpack.c.b16 %v3019, %v3018
        %v3034 = vpack.c.b16 %v3021, %v3020
        %v3035 = vpack.c.b16 %v3023, %v3022
        %v3036 = vpack.c.b16 %v3025, %v3024
        %v3037 = vpack.c.b16 %v3027, %v3026
        %v3039 = vsel %vm523, %v3028, 0
        %v3042 = vsel %vm523, %v3029, 0
        %v3045 = vsel %vm523, %v3030, 0
        %v3048 = vsel %vm523, %v3031, 0
        %v3051 = vsel %vm523, %v3032, 0
        %v3054 = vsel %vm523, %v3033, 0
        %v3057 = vsel %vm523, %v3034, 0
        %v3060 = vsel %vm523, %v3035, 0
        %v3063 = vsel %vm523, %v3036, 0
        %v3066 = vsel %vm523, %v3037, 0
        %v3069 = vsel %vm554, %v3007, 0
        %3071 = vmatprep.subr.bf16.mxu0 0
        %3072 = vmatpush1.bf16.msra.mxu0 0
        %3073 = vmatprep.subr.bf16.mxu0 0
        %3074 = vmatpush1.bf16.msra.mxu0 0
        %3075 = vmatprep.subr.bf16.mxu0 0
        %3076 = vmatpush1.bf16.msra.mxu0 0
        %3077 = vmatprep.subr.bf16.mxu0 0
        %3078 = vmatpush1.bf16.msra.mxu0 0
        %3079 = vmatprep.subr.bf16.mxu0 0
        %3080 = vmatpush1.bf16.msra.mxu0 0
        %3081 = vmatprep.subr.bf16.mxu0 0
        %3082 = vmatpush1.bf16.msra.mxu0 0
        %3083 = vmatprep.subr.bf16.mxu0 0
        %3084 = vmatpush1.bf16.msra.mxu0 0
        %3085 = vmatprep.subr.bf16.mxu0 0
        %3086 = vmatpush1.bf16.msra.mxu0 %v3069
        %3087 = vmatprep.subr.bf16.mxu0 0
        %3088 = vmatpush2.bf16.msra.mxu0 0
        %3089 = vmatprep.subr.bf16.mxu0 0
        %3090 = vmatpush2.bf16.msra.mxu0 0
        %3091 = vmatprep.subr.bf16.mxu0 0
        %3092 = vmatpush2.bf16.msra.mxu0 0
        %3093 = vmatprep.subr.bf16.mxu0 0
        %3094 = vmatpush2.bf16.msra.mxu0 0
        %3095 = vmatprep.subr.bf16.mxu0 0
        %3096 = vmatpush2.bf16.msra.mxu0 0
        %3097 = vmatprep.subr.bf16.mxu0 0
        %3098 = vmatpush2.bf16.msra.mxu0 0
        %3099 = vmatprep.subr.bf16.mxu0 0
        %3100 = vmatpush2.bf16.msra.mxu0 0
        %3101 = vmatprep.subr.bf16.mxu0 0
        %3102 = vmatpush2.bf16.msra.mxu0 0
        %3103 = vmatprep.mubr.bf16.mxu0 0
        %3104 = vmatmul.mubr.bf16.gmra.mxu0 %v3039
        %v3105 = vpop.f32.mrf.mxu0
        %v3106 = vadd.f32 0.0, %v3105
        %v3107 = vpop.f32.mrf.mxu0
        %v3108 = vpop.f32.mrf.mxu0
        %v3109 = vadd.f32 0.0, %v3108
        %v3110 = vpop.f32.mrf.mxu0
        %3111 = vmatprep.mubr.bf16.mxu0 0
        %3112 = vmatmul.mubr.bf16.gmra.mxu0 %v3042
        %v3113 = vpop.f32.mrf.mxu0
        %v3114 = vadd.f32 0.0, %v3113
        %v3115 = vpop.f32.mrf.mxu0
        %v3116 = vpop.f32.mrf.mxu0
        %v3117 = vadd.f32 0.0, %v3116
        %v3118 = vpop.f32.mrf.mxu0
        %3119 = vmatprep.mubr.bf16.mxu0 0
        %3120 = vmatmul.mubr.bf16.gmra.mxu0 %v3045
        %v3121 = vpop.f32.mrf.mxu0
        %v3122 = vadd.f32 0.0, %v3121
        %v3123 = vpop.f32.mrf.mxu0
        %v3124 = vpop.f32.mrf.mxu0
        %v3125 = vadd.f32 0.0, %v3124
        %v3126 = vpop.f32.mrf.mxu0
        %3127 = vmatprep.mubr.bf16.mxu0 0
        %3128 = vmatmul.mubr.bf16.gmra.mxu0 %v3048
        %v3129 = vpop.f32.mrf.mxu0
        %v3130 = vadd.f32 0.0, %v3129
        %v3131 = vpop.f32.mrf.mxu0
        %v3132 = vpop.f32.mrf.mxu0
        %v3133 = vadd.f32 0.0, %v3132
        %v3134 = vpop.f32.mrf.mxu0
        %3135 = vmatprep.mubr.bf16.mxu0 0
        %3136 = vmatmul.mubr.bf16.gmra.mxu0 %v3051
        %v3137 = vpop.f32.mrf.mxu0
        %v3138 = vadd.f32 0.0, %v3137
        %v3139 = vpop.f32.mrf.mxu0
        %v3140 = vpop.f32.mrf.mxu0
        %v3141 = vadd.f32 0.0, %v3140
        %v3142 = vpop.f32.mrf.mxu0
        %3143 = vmatprep.mubr.bf16.mxu0 0
        %3144 = vmatmul.mubr.bf16.gmra.mxu0 %v3054
        %v3145 = vpop.f32.mrf.mxu0
        %v3146 = vadd.f32 0.0, %v3145
        %v3147 = vpop.f32.mrf.mxu0
        %v3148 = vpop.f32.mrf.mxu0
        %v3149 = vadd.f32 0.0, %v3148
        %v3150 = vpop.f32.mrf.mxu0
        %3151 = vmatprep.mubr.bf16.mxu0 0
        %3152 = vmatmul.mubr.bf16.gmra.mxu0 %v3057
        %v3153 = vpop.f32.mrf.mxu0
        %v3154 = vadd.f32 0.0, %v3153
        %v3155 = vpop.f32.mrf.mxu0
        %v3156 = vpop.f32.mrf.mxu0
        %v3157 = vadd.f32 0.0, %v3156
        %v3158 = vpop.f32.mrf.mxu0
        %3159 = vmatprep.mubr.bf16.mxu0 0
        %3160 = vmatmul.mubr.bf16.gmra.mxu0 %v3060
        %v3161 = vpop.f32.mrf.mxu0
        %v3162 = vadd.f32 0.0, %v3161
        %v3163 = vpop.f32.mrf.mxu0
        %v3164 = vpop.f32.mrf.mxu0
        %v3165 = vadd.f32 0.0, %v3164
        %v3166 = vpop.f32.mrf.mxu0
        %3167 = vmatprep.mubr.bf16.mxu0 0
        %3168 = vmatmul.mubr.bf16.gmra.mxu0 %v3063
        %v3169 = vpop.f32.mrf.mxu0
        %v3170 = vadd.f32 0.0, %v3169
        %v3171 = vpop.f32.mrf.mxu0
        %v3172 = vpop.f32.mrf.mxu0
        %v3173 = vadd.f32 0.0, %v3172
        %v3174 = vpop.f32.mrf.mxu0
        %3175 = vmatprep.mubr.bf16.mxu0 0
        %3176 = vmatmul.mubr.bf16.gmra.mxu0 %v3066
        %v3177 = vpop.f32.mrf.mxu0
        %v3178 = vadd.f32 0.0, %v3177
        %v3179 = vpop.f32.mrf.mxu0
        %v3180 = vpop.f32.mrf.mxu0
        %v3181 = vadd.f32 0.0, %v3180
        %v3182 = vpop.f32.mrf.mxu0
        %3183 = vdwg.mxu0
        %v3184 = vadd.f32 %v2876, %v3106
        %v3185 = vadd.f32 %v2877, %v3109
        %v3186 = vadd.f32 %v2878, %v3114
        %v3187 = vadd.f32 %v2879, %v3117
        %v3188 = vadd.f32 %v2880, %v3122
        %v3189 = vadd.f32 %v2881, %v3125
        %v3190 = vadd.f32 %v2882, %v3130
        %v3191 = vadd.f32 %v2883, %v3133
        %v3192 = vadd.f32 %v2884, %v3138
        %v3193 = vadd.f32 %v2885, %v3141
        %v3194 = vadd.f32 %v2886, %v3146
        %v3195 = vadd.f32 %v2887, %v3149
        %v3196 = vadd.f32 %v2888, %v3154
        %v3197 = vadd.f32 %v2889, %v3157
        %v3198 = vadd.f32 %v2890, %v3162
        %v3199 = vadd.f32 %v2891, %v3165
        %v3200 = vadd.f32 %v2892, %v3170
        %v3201 = vadd.f32 %v2893, %v3173
        %v3202 = vadd.f32 %v2894, %v3178
        %v3203 = vadd.f32 %v2895, %v3181
        %v3204 = vlaneseq
        %v3205 = vshrl.u32 %v3204, 7
        %v3206 = vsub.s32 0, %v3205
        %v3207 = vrot.slane %v213, %v3206
        %v3208 = vadd.f32 %v3184, %v3207
        %v3209 = vadd.f32 %v3185, %v3207
        %v3210 = vadd.f32 %v3186, %v3207
        %v3211 = vadd.f32 %v3187, %v3207
        %v3212 = vadd.f32 %v3188, %v3207
        %v3213 = vadd.f32 %v3189, %v3207
        %v3214 = vadd.f32 %v3190, %v3207
        %v3215 = vadd.f32 %v3191, %v3207
        %v3216 = vadd.f32 %v3192, %v3207
        %v3217 = vadd.f32 %v3193, %v3207
        %v3218 = vadd.f32 %v3194, %v3207
        %v3219 = vadd.f32 %v3195, %v3207
        %v3220 = vadd.f32 %v3196, %v3207
        %v3221 = vadd.f32 %v3197, %v3207
        %v3222 = vadd.f32 %v3198, %v3207
        %v3223 = vadd.f32 %v3199, %v3207
        %v3224 = vadd.f32 %v3200, %v3207
        %v3225 = vadd.f32 %v3201, %v3207
        %v3226 = vadd.f32 %v3202, %v3207
        %v3227 = vadd.f32 %v3203, %v3207
        %v3228 = vmul.f32 %v3208, 3.3333333
        %v3229 = vmul.f32 %v3209, 3.3333333
        %v3230 = vmul.f32 %v3210, 3.3333333
        %v3231 = vmul.f32 %v3211, 3.3333333
        %v3232 = vmul.f32 %v3212, 3.3333333
        %v3233 = vmul.f32 %v3213, 3.3333333
        %v3234 = vmul.f32 %v3214, 3.3333333
        %v3235 = vmul.f32 %v3215, 3.3333333
        %v3236 = vmul.f32 %v3216, 3.3333333
        %v3237 = vmul.f32 %v3217, 3.3333333
        %v3238 = vmul.f32 %v3218, 3.3333333
        %v3239 = vmul.f32 %v3219, 3.3333333
        %v3240 = vmul.f32 %v3220, 3.3333333
        %v3241 = vmul.f32 %v3221, 3.3333333
        %v3242 = vmul.f32 %v3222, 3.3333333
        %v3243 = vmul.f32 %v3223, 3.3333333
        %v3244 = vmul.f32 %v3224, 3.3333333
        %v3245 = vmul.f32 %v3225, 3.3333333
        %v3246 = vmul.f32 %v3226, 3.3333333
        %v3247 = vmul.f32 %v3227, 3.3333333
        %v3248 = vsub.f32 1.0, %v3208
        %v3249 = vsub.f32 1.0, %v3209
        %v3250 = vsub.f32 1.0, %v3210
        %v3251 = vsub.f32 1.0, %v3211
        %v3252 = vsub.f32 1.0, %v3212
        %v3253 = vsub.f32 1.0, %v3213
        %v3254 = vsub.f32 1.0, %v3214
        %v3255 = vsub.f32 1.0, %v3215
        %v3256 = vsub.f32 1.0, %v3216
        %v3257 = vsub.f32 1.0, %v3217
        %v3258 = vsub.f32 1.0, %v3218
        %v3259 = vsub.f32 1.0, %v3219
        %v3260 = vsub.f32 1.0, %v3220
        %v3261 = vsub.f32 1.0, %v3221
        %v3262 = vsub.f32 1.0, %v3222
        %v3263 = vsub.f32 1.0, %v3223
        %v3264 = vsub.f32 1.0, %v3224
        %v3265 = vsub.f32 1.0, %v3225
        %v3266 = vsub.f32 1.0, %v3226
        %v3267 = vsub.f32 1.0, %v3227
        %v3268 = vmul.f32 %v3248, 3.3333333
        %v3269 = vmul.f32 %v3249, 3.3333333
        %v3270 = vmul.f32 %v3250, 3.3333333
        %v3271 = vmul.f32 %v3251, 3.3333333
        %v3272 = vmul.f32 %v3252, 3.3333333
        %v3273 = vmul.f32 %v3253, 3.3333333
        %v3274 = vmul.f32 %v3254, 3.3333333
        %v3275 = vmul.f32 %v3255, 3.3333333
        %v3276 = vmul.f32 %v3256, 3.3333333
        %v3277 = vmul.f32 %v3257, 3.3333333
        %v3278 = vmul.f32 %v3258, 3.3333333
        %v3279 = vmul.f32 %v3259, 3.3333333
        %v3280 = vmul.f32 %v3260, 3.3333333
        %v3281 = vmul.f32 %v3261, 3.3333333
        %v3282 = vmul.f32 %v3262, 3.3333333
        %v3283 = vmul.f32 %v3263, 3.3333333
        %v3284 = vmul.f32 %v3264, 3.3333333
        %v3285 = vmul.f32 %v3265, 3.3333333
        %v3286 = vmul.f32 %v3266, 3.3333333
        %v3287 = vmul.f32 %v3267, 3.3333333
        %v3288 = vmin.f32 %v3228, %v3268
        %v3289 = vmin.f32 %v3229, %v3269
        %v3290 = vmin.f32 %v3230, %v3270
        %v3291 = vmin.f32 %v3231, %v3271
        %v3292 = vmin.f32 %v3232, %v3272
        %v3293 = vmin.f32 %v3233, %v3273
        %v3294 = vmin.f32 %v3234, %v3274
        %v3295 = vmin.f32 %v3235, %v3275
        %v3296 = vmin.f32 %v3236, %v3276
        %v3297 = vmin.f32 %v3237, %v3277
        %v3298 = vmin.f32 %v3238, %v3278
        %v3299 = vmin.f32 %v3239, %v3279
        %v3300 = vmin.f32 %v3240, %v3280
        %v3301 = vmin.f32 %v3241, %v3281
        %v3302 = vmin.f32 %v3242, %v3282
        %v3303 = vmin.f32 %v3243, %v3283
        %v3304 = vmin.f32 %v3244, %v3284
        %v3305 = vmin.f32 %v3245, %v3285
        %v3306 = vmin.f32 %v3246, %v3286
        %v3307 = vmin.f32 %v3247, %v3287
        %v3308 = vmax.f32 %v3288, 0.0
        %v3309 = vmax.f32 %v3289, 0.0
        %v3310 = vmax.f32 %v3290, 0.0
        %v3311 = vmax.f32 %v3291, 0.0
        %v3312 = vmax.f32 %v3292, 0.0
        %v3313 = vmax.f32 %v3293, 0.0
        %v3314 = vmax.f32 %v3294, 0.0
        %v3315 = vmax.f32 %v3295, 0.0
        %v3316 = vmax.f32 %v3296, 0.0
        %v3317 = vmax.f32 %v3297, 0.0
        %v3318 = vmax.f32 %v3298, 0.0
        %v3319 = vmax.f32 %v3299, 0.0
        %v3320 = vmax.f32 %v3300, 0.0
        %v3321 = vmax.f32 %v3301, 0.0
        %v3322 = vmax.f32 %v3302, 0.0
        %v3323 = vmax.f32 %v3303, 0.0
        %v3324 = vmax.f32 %v3304, 0.0
        %v3325 = vmax.f32 %v3305, 0.0
        %v3326 = vmax.f32 %v3306, 0.0
        %v3327 = vmax.f32 %v3307, 0.0
        %v3328 = vlaneseq
        %v3329 = vshrl.u32 %v3328, 7
        %v3330 = vsub.s32 1, %v3329
        %v3331 = vrot.slane %v213, %v3330
        %v3332 = vmul.f32 %v3308, %v3331
        %v3333 = vmul.f32 %v3309, %v3331
        %v3334 = vmul.f32 %v3310, %v3331
        %v3335 = vmul.f32 %v3311, %v3331
        %v3336 = vmul.f32 %v3312, %v3331
        %v3337 = vmul.f32 %v3313, %v3331
        %v3338 = vmul.f32 %v3314, %v3331
        %v3339 = vmul.f32 %v3315, %v3331
        %v3340 = vmul.f32 %v3316, %v3331
        %v3341 = vmul.f32 %v3317, %v3331
        %v3342 = vmul.f32 %v3318, %v3331
        %v3343 = vmul.f32 %v3319, %v3331
        %v3344 = vmul.f32 %v3320, %v3331
        %v3345 = vmul.f32 %v3321, %v3331
        %v3346 = vmul.f32 %v3322, %v3331
        %v3347 = vmul.f32 %v3323, %v3331
        %v3348 = vmul.f32 %v3324, %v3331
        %v3349 = vmul.f32 %v3325, %v3331
        %v3350 = vmul.f32 %v3326, %v3331
        %v3351 = vmul.f32 %v3327, %v3331
        %v3352 = vlaneseq
        %v3353 = vshrl.u32 %v3352, 7
        %v3354 = vsub.s32 2, %v3353
        %v3355 = vrot.slane %v213, %v3354
        %v3356 = vadd.f32 %v3332, %v3355
        %v3357 = vadd.f32 %v3333, %v3355
        %v3358 = vadd.f32 %v3334, %v3355
        %v3359 = vadd.f32 %v3335, %v3355
        %v3360 = vadd.f32 %v3336, %v3355
        %v3361 = vadd.f32 %v3337, %v3355
        %v3362 = vadd.f32 %v3338, %v3355
        %v3363 = vadd.f32 %v3339, %v3355
        %v3364 = vadd.f32 %v3340, %v3355
        %v3365 = vadd.f32 %v3341, %v3355
        %v3366 = vadd.f32 %v3342, %v3355
        %v3367 = vadd.f32 %v3343, %v3355
        %v3368 = vadd.f32 %v3344, %v3355
        %v3369 = vadd.f32 %v3345, %v3355
        %v3370 = vadd.f32 %v3346, %v3355
        %v3371 = vadd.f32 %v3347, %v3355
        %v3372 = vadd.f32 %v3348, %v3355
        %v3373 = vadd.f32 %v3349, %v3355
        %v3374 = vadd.f32 %v3350, %v3355
        %v3375 = vadd.f32 %v3351, %v3355
        %v3376 = vmax.f32 %v3356, 0.0
        %v3377 = vmax.f32 %v3357, 0.0
        %v3378 = vmax.f32 %v3358, 0.0
        %v3379 = vmax.f32 %v3359, 0.0
        %v3380 = vmax.f32 %v3360, 0.0
        %v3381 = vmax.f32 %v3361, 0.0
        %v3382 = vmax.f32 %v3362, 0.0
        %v3383 = vmax.f32 %v3363, 0.0
        %v3384 = vmax.f32 %v3364, 0.0
        %v3385 = vmax.f32 %v3365, 0.0
        %v3386 = vmax.f32 %v3366, 0.0
        %v3387 = vmax.f32 %v3367, 0.0
        %v3388 = vmax.f32 %v3368, 0.0
        %v3389 = vmax.f32 %v3369, 0.0
        %v3390 = vmax.f32 %v3370, 0.0
        %v3391 = vmax.f32 %v3371, 0.0
        %v3392 = vmax.f32 %v3372, 0.0
        %v3393 = vmax.f32 %v3373, 0.0
        %v3394 = vmax.f32 %v3374, 0.0
        %v3395 = vmax.f32 %v3375, 0.0
        %v3396 = vpack.c.bf16 %v3377, %v3376
        %v3397 = vpack.c.bf16 %v3379, %v3378
        %v3398 = vpack.c.bf16 %v3381, %v3380
        %v3399 = vpack.c.bf16 %v3383, %v3382
        %v3400 = vpack.c.bf16 %v3385, %v3384
        %v3401 = vpack.c.bf16 %v3387, %v3386
        %v3402 = vpack.c.bf16 %v3389, %v3388
        %v3403 = vpack.c.bf16 %v3391, %v3390
        %v3404 = vpack.c.bf16 %v3393, %v3392
        %v3405 = vpack.c.bf16 %v3395, %v3394
        %v3416 = vunpack.c.l.b16 %v3396
        %v3417 = vunpack.c.h.b16 %v3396
        %v3418 = vunpack.c.l.b16 %v3397
        %v3419 = vunpack.c.h.b16 %v3397
        %v3420 = vunpack.c.l.b16 %v3398
        %v3421 = vunpack.c.h.b16 %v3398
        %v3422 = vunpack.c.l.b16 %v3399
        %v3423 = vunpack.c.h.b16 %v3399
        %v3424 = vunpack.c.l.b16 %v3400
        %v3425 = vunpack.c.h.b16 %v3400
        %v3426 = vunpack.c.l.b16 %v3401
        %v3427 = vunpack.c.h.b16 %v3401
        %v3428 = vunpack.c.l.b16 %v3402
        %v3429 = vunpack.c.h.b16 %v3402
        %v3430 = vunpack.c.l.b16 %v3403
        %v3431 = vunpack.c.h.b16 %v3403
        %v3432 = vunpack.c.l.b16 %v3404
        %v3433 = vunpack.c.h.b16 %v3404
        %v3434 = vunpack.c.l.b16 %v3405
        %v3435 = vunpack.c.h.b16 %v3405
        %v3436 = vpack.c.b16 %v3416, %v3416
        %v3437 = vpack.c.b16 %v3417, %v3417
        %v3438 = vpack.c.b16 %v3418, %v3418
        %v3439 = vpack.c.b16 %v3419, %v3419
        %v3440 = vpack.c.b16 %v3420, %v3420
        %v3441 = vpack.c.b16 %v3421, %v3421
        %v3442 = vpack.c.b16 %v3422, %v3422
        %v3443 = vpack.c.b16 %v3423, %v3423
        %v3444 = vpack.c.b16 %v3424, %v3424
        %v3445 = vpack.c.b16 %v3425, %v3425
        %v3446 = vpack.c.b16 %v3426, %v3426
        %v3447 = vpack.c.b16 %v3427, %v3427
        %v3448 = vpack.c.b16 %v3428, %v3428
        %v3449 = vpack.c.b16 %v3429, %v3429
        %v3450 = vpack.c.b16 %v3430, %v3430
        %v3451 = vpack.c.b16 %v3431, %v3431
        %v3452 = vpack.c.b16 %v3432, %v3432
        %v3453 = vpack.c.b16 %v3433, %v3433
        %v3454 = vpack.c.b16 %v3434, %v3434
        %v3455 = vpack.c.b16 %v3435, %v3435
        %vm3456 = vsmask.f32 256
        %vm3457 = vsmask.f32 4368
        %vm3458 = vmor %vm3456, %vm3457
        %v3460 = vshrl.u32 %v3436, 16
        %v3462 = vrot.slane %v3460, 7
        %v3463 = vshll.u32 %v3436, 16
        %v3465 = vor.u32 %v3462, %v3463
        %v3466 = vrot.slane %v3462, 4
        %v3468 = vshrl.u32 %v3437, 16
        %v3470 = vrot.slane %v3468, 7
        %v3471 = vshll.u32 %v3437, 16
        %v3473 = vor.u32 %v3470, %v3471
        %v3474 = vsel %vm3458, %v3466, %v3473
        %v3475 = vrot.slane %v3470, 4
        %v3477 = vshrl.u32 %v3438, 16
        %v3479 = vrot.slane %v3477, 7
        %v3480 = vshll.u32 %v3438, 16
        %v3482 = vor.u32 %v3479, %v3480
        %v3483 = vrot.slane %v3479, 4
        %v3485 = vshrl.u32 %v3439, 16
        %v3487 = vrot.slane %v3485, 7
        %v3488 = vshll.u32 %v3439, 16
        %v3490 = vor.u32 %v3487, %v3488
        %v3491 = vsel %vm3458, %v3483, %v3490
        %v3492 = vrot.slane %v3487, 4
        %v3494 = vshrl.u32 %v3440, 16
        %v3496 = vrot.slane %v3494, 7
        %v3497 = vshll.u32 %v3440, 16
        %v3499 = vor.u32 %v3496, %v3497
        %v3500 = vrot.slane %v3496, 4
        %v3502 = vshrl.u32 %v3441, 16
        %v3504 = vrot.slane %v3502, 7
        %v3505 = vshll.u32 %v3441, 16
        %v3507 = vor.u32 %v3504, %v3505
        %v3508 = vsel %vm3458, %v3500, %v3507
        %v3509 = vrot.slane %v3504, 4
        %v3511 = vshrl.u32 %v3442, 16
        %v3513 = vrot.slane %v3511, 7
        %v3514 = vshll.u32 %v3442, 16
        %v3516 = vor.u32 %v3513, %v3514
        %v3517 = vrot.slane %v3513, 4
        %v3519 = vshrl.u32 %v3443, 16
        %v3521 = vrot.slane %v3519, 7
        %v3522 = vshll.u32 %v3443, 16
        %v3524 = vor.u32 %v3521, %v3522
        %v3525 = vsel %vm3458, %v3517, %v3524
        %v3526 = vrot.slane %v3521, 4
        %v3528 = vshrl.u32 %v3444, 16
        %v3530 = vrot.slane %v3528, 7
        %v3531 = vshll.u32 %v3444, 16
        %v3533 = vor.u32 %v3530, %v3531
        %v3534 = vrot.slane %v3530, 4
        %v3536 = vshrl.u32 %v3445, 16
        %v3538 = vrot.slane %v3536, 7
        %v3539 = vshll.u32 %v3445, 16
        %v3541 = vor.u32 %v3538, %v3539
        %v3542 = vsel %vm3458, %v3534, %v3541
        %v3543 = vrot.slane %v3538, 4
        %v3545 = vshrl.u32 %v3446, 16
        %v3547 = vrot.slane %v3545, 7
        %v3548 = vshll.u32 %v3446, 16
        %v3550 = vor.u32 %v3547, %v3548
        %v3551 = vrot.slane %v3547, 4
        %v3553 = vshrl.u32 %v3447, 16
        %v3555 = vrot.slane %v3553, 7
        %v3556 = vshll.u32 %v3447, 16
        %v3558 = vor.u32 %v3555, %v3556
        %v3559 = vsel %vm3458, %v3551, %v3558
        %v3560 = vrot.slane %v3555, 4
        %v3562 = vshrl.u32 %v3448, 16
        %v3564 = vrot.slane %v3562, 7
        %v3565 = vshll.u32 %v3448, 16
        %v3567 = vor.u32 %v3564, %v3565
        %v3568 = vrot.slane %v3564, 4
        %v3570 = vshrl.u32 %v3449, 16
        %v3572 = vrot.slane %v3570, 7
        %v3573 = vshll.u32 %v3449, 16
        %v3575 = vor.u32 %v3572, %v3573
        %v3576 = vsel %vm3458, %v3568, %v3575
        %v3577 = vrot.slane %v3572, 4
        %v3579 = vshrl.u32 %v3450, 16
        %v3581 = vrot.slane %v3579, 7
        %v3582 = vshll.u32 %v3450, 16
        %v3584 = vor.u32 %v3581, %v3582
        %v3585 = vrot.slane %v3581, 4
        %v3587 = vshrl.u32 %v3451, 16
        %v3589 = vrot.slane %v3587, 7
        %v3590 = vshll.u32 %v3451, 16
        %v3592 = vor.u32 %v3589, %v3590
        %v3593 = vsel %vm3458, %v3585, %v3592
        %v3594 = vrot.slane %v3589, 4
        %v3596 = vshrl.u32 %v3452, 16
        %v3598 = vrot.slane %v3596, 7
        %v3599 = vshll.u32 %v3452, 16
        %v3601 = vor.u32 %v3598, %v3599
        %v3602 = vrot.slane %v3598, 4
        %v3604 = vshrl.u32 %v3453, 16
        %v3606 = vrot.slane %v3604, 7
        %v3607 = vshll.u32 %v3453, 16
        %v3609 = vor.u32 %v3606, %v3607
        %v3610 = vsel %vm3458, %v3602, %v3609
        %v3611 = vrot.slane %v3606, 4
        %v3613 = vshrl.u32 %v3454, 16
        %v3615 = vrot.slane %v3613, 7
        %v3616 = vshll.u32 %v3454, 16
        %v3618 = vor.u32 %v3615, %v3616
        %v3619 = vrot.slane %v3615, 4
        %v3621 = vshrl.u32 %v3455, 16
        %v3623 = vrot.slane %v3621, 7
        %v3624 = vshll.u32 %v3455, 16
        %v3626 = vor.u32 %v3623, %v3624
        %v3627 = vsel %vm3458, %v3619, %v3626
        %v3628 = vrot.slane %v3623, 4
        %vm3659 = vcmask 1043456
        %vm3660 = vsmask.f32 7938
        %vm3661 = vmand %vm3659, %vm3660
        %v3662 = vld [vmem:[#allocation2] sm:$0xf]
        %v3663 = vsel %vm3661, %v3465, %v3662
        %3664 = vst [vmem:[#allocation2] sm:$0xf] %v3663
        %3665 = vst [vmem:[#allocation2 + $0x4] sm:$0xf] %v3474
        %vm3666 = vcmask 1040384
        %vm3667 = vmand %vm3666, %vm3456
        %v3668 = vld [vmem:[#allocation2 + $0x8] sm:$0x1]
        %v3669 = vsel %vm3667, %v3475, %v3668
        %3670 = vst [vmem:[#allocation2 + $0x8] sm:$0x1] %v3669
        %v3671 = vld [vmem:[#allocation2 + $0xc] sm:$0xf]
        %v3672 = vsel %vm3661, %v3482, %v3671
        %3673 = vst [vmem:[#allocation2 + $0xc] sm:$0xf] %v3672
        %3674 = vst [vmem:[#allocation2 + $0x10] sm:$0xf] %v3491
        %v3675 = vld [vmem:[#allocation2 + $0x14] sm:$0x1]
        %v3676 = vsel %vm3667, %v3492, %v3675
        %3677 = vst [vmem:[#allocation2 + $0x14] sm:$0x1] %v3676
        %v3678 = vld [vmem:[#allocation2 + $0x18] sm:$0xf]
        %v3679 = vsel %vm3661, %v3499, %v3678
        %3680 = vst [vmem:[#allocation2 + $0x18] sm:$0xf] %v3679
        %3681 = vst [vmem:[#allocation2 + $0x1c] sm:$0xf] %v3508
        %v3682 = vld [vmem:[#allocation2 + $0x20] sm:$0x1]
        %v3683 = vsel %vm3667, %v3509, %v3682
        %3684 = vst [vmem:[#allocation2 + $0x20] sm:$0x1] %v3683
        %v3685 = vld [vmem:[#allocation2 + $0x24] sm:$0xf]
        %v3686 = vsel %vm3661, %v3516, %v3685
        %3687 = vst [vmem:[#allocation2 + $0x24] sm:$0xf] %v3686
        %3688 = vst [vmem:[#allocation2 + $0x28] sm:$0xf] %v3525
        %v3689 = vld [vmem:[#allocation2 + $0x2c] sm:$0x1]
        %v3690 = vsel %vm3667, %v3526, %v3689
        %3691 = vst [vmem:[#allocation2 + $0x2c] sm:$0x1] %v3690
        %v3692 = vld [vmem:[#allocation2 + $0x30] sm:$0xf]
        %v3693 = vsel %vm3661, %v3533, %v3692
        %3694 = vst [vmem:[#allocation2 + $0x30] sm:$0xf] %v3693
        %3695 = vst [vmem:[#allocation2 + $0x34] sm:$0xf] %v3542
        %v3696 = vld [vmem:[#allocation2 + $0x38] sm:$0x1]
        %v3697 = vsel %vm3667, %v3543, %v3696
        %3698 = vst [vmem:[#allocation2 + $0x38] sm:$0x1] %v3697
        %v3699 = vld [vmem:[#allocation2 + $0x3c] sm:$0xf]
        %v3700 = vsel %vm3661, %v3550, %v3699
        %3701 = vst [vmem:[#allocation2 + $0x3c] sm:$0xf] %v3700
        %3702 = vst [vmem:[#allocation2 + $0x40] sm:$0xf] %v3559
        %v3703 = vld [vmem:[#allocation2 + $0x44] sm:$0x1]
        %v3704 = vsel %vm3667, %v3560, %v3703
        %3705 = vst [vmem:[#allocation2 + $0x44] sm:$0x1] %v3704
        %v3706 = vld [vmem:[#allocation2 + $0x48] sm:$0xf]
        %v3707 = vsel %vm3661, %v3567, %v3706
        %3708 = vst [vmem:[#allocation2 + $0x48] sm:$0xf] %v3707
        %3709 = vst [vmem:[#allocation2 + $0x4c] sm:$0xf] %v3576
        %v3710 = vld [vmem:[#allocation2 + $0x50] sm:$0x1]
        %v3711 = vsel %vm3667, %v3577, %v3710
        %3712 = vst [vmem:[#allocation2 + $0x50] sm:$0x1] %v3711
        %v3713 = vld [vmem:[#allocation2 + $0x54] sm:$0xf]
        %v3714 = vsel %vm3661, %v3584, %v3713
        %3715 = vst [vmem:[#allocation2 + $0x54] sm:$0xf] %v3714
        %3716 = vst [vmem:[#allocation2 + $0x58] sm:$0xf] %v3593
        %v3717 = vld [vmem:[#allocation2 + $0x5c] sm:$0x1]
        %v3718 = vsel %vm3667, %v3594, %v3717
        %3719 = vst [vmem:[#allocation2 + $0x5c] sm:$0x1] %v3718
        %v3720 = vld [vmem:[#allocation2 + $0x60] sm:$0xf]
        %v3721 = vsel %vm3661, %v3601, %v3720
        %3722 = vst [vmem:[#allocation2 + $0x60] sm:$0xf] %v3721
        %3723 = vst [vmem:[#allocation2 + $0x64] sm:$0xf] %v3610
        %v3724 = vld [vmem:[#allocation2 + $0x68] sm:$0x1]
        %v3725 = vsel %vm3667, %v3611, %v3724
        %3726 = vst [vmem:[#allocation2 + $0x68] sm:$0x1] %v3725
        %v3727 = vld [vmem:[#allocation2 + $0x6c] sm:$0xf]
        %v3728 = vsel %vm3661, %v3618, %v3727
        %3729 = vst [vmem:[#allocation2 + $0x6c] sm:$0xf] %v3728
        %3730 = vst [vmem:[#allocation2 + $0x70] sm:$0xf] %v3627
        %v3731 = vld [vmem:[#allocation2 + $0x74] sm:$0x1]
        %v3732 = vsel %vm3667, %v3628, %v3731
        %3733 = vst [vmem:[#allocation2 + $0x74] sm:$0x1] %v3732
        %p3734 = scmp.eq.s32.totalorder %s23, 0
        // Predicated region
        $region37: #{double_conv.1} parent=35 // pred_check
          %p3735 = pneg %p3734
        $region38: #{double_conv.1} parent=35 // pred_check_branch
          %3737 = sbr.rel (%p3735) target = $region40
        $region39: #{double_conv.1} parent=35 // pred_region
          %v3738 = vld [vmem:[#allocation2] sm:$0x1]
          %v3739 = vsel %vm3667, 0, %v3738
          %3740 = vst [vmem:[#allocation2] sm:$0x1] %v3739
          %v3741 = vld [vmem:[#allocation2 + $0xc] sm:$0x1]
          %v3742 = vsel %vm3667, 0, %v3741
          %3743 = vst [vmem:[#allocation2 + $0xc] sm:$0x1] %v3742
          %v3744 = vld [vmem:[#allocation2 + $0x18] sm:$0x1]
          %v3745 = vsel %vm3667, 0, %v3744
          %3746 = vst [vmem:[#allocation2 + $0x18] sm:$0x1] %v3745
          %v3747 = vld [vmem:[#allocation2 + $0x24] sm:$0x1]
          %v3748 = vsel %vm3667, 0, %v3747
          %3749 = vst [vmem:[#allocation2 + $0x24] sm:$0x1] %v3748
          %v3750 = vld [vmem:[#allocation2 + $0x30] sm:$0x1]
          %v3751 = vsel %vm3667, 0, %v3750
          %3752 = vst [vmem:[#allocation2 + $0x30] sm:$0x1] %v3751
          %v3753 = vld [vmem:[#allocation2 + $0x3c] sm:$0x1]
          %v3754 = vsel %vm3667, 0, %v3753
          %3755 = vst [vmem:[#allocation2 + $0x3c] sm:$0x1] %v3754
          %v3756 = vld [vmem:[#allocation2 + $0x48] sm:$0x1]
          %v3757 = vsel %vm3667, 0, %v3756
          %3758 = vst [vmem:[#allocation2 + $0x48] sm:$0x1] %v3757
          %v3759 = vld [vmem:[#allocation2 + $0x54] sm:$0x1]
          %v3760 = vsel %vm3667, 0, %v3759
          %3761 = vst [vmem:[#allocation2 + $0x54] sm:$0x1] %v3760
          %v3762 = vld [vmem:[#allocation2 + $0x60] sm:$0x1]
          %v3763 = vsel %vm3667, 0, %v3762
          %3764 = vst [vmem:[#allocation2 + $0x60] sm:$0x1] %v3763
          %v3765 = vld [vmem:[#allocation2 + $0x6c] sm:$0x1]
          %v3766 = vsel %vm3667, 0, %v3765
          %3767 = vst [vmem:[#allocation2 + $0x6c] sm:$0x1] %v3766
          %vm3768 = vmand %vm3666, %vm3660
          %v3769 = vld [vmem:[#allocation2 + $0x8] sm:$0x1]
          %v3770 = vsel %vm3768, 0, %v3769
          %3771 = vst [vmem:[#allocation2 + $0x8] sm:$0x1] %v3770
          %v3772 = vld [vmem:[#allocation2 + $0x14] sm:$0x1]
          %v3773 = vsel %vm3768, 0, %v3772
          %3774 = vst [vmem:[#allocation2 + $0x14] sm:$0x1] %v3773
          %v3775 = vld [vmem:[#allocation2 + $0x20] sm:$0x1]
          %v3776 = vsel %vm3768, 0, %v3775
          %3777 = vst [vmem:[#allocation2 + $0x20] sm:$0x1] %v3776
          %v3778 = vld [vmem:[#allocation2 + $0x2c] sm:$0x1]
          %v3779 = vsel %vm3768, 0, %v3778
          %3780 = vst [vmem:[#allocation2 + $0x2c] sm:$0x1] %v3779
          %v3781 = vld [vmem:[#allocation2 + $0x38] sm:$0x1]
          %v3782 = vsel %vm3768, 0, %v3781
          %3783 = vst [vmem:[#allocation2 + $0x38] sm:$0x1] %v3782
          %v3784 = vld [vmem:[#allocation2 + $0x44] sm:$0x1]
          %v3785 = vsel %vm3768, 0, %v3784
          %3786 = vst [vmem:[#allocation2 + $0x44] sm:$0x1] %v3785
          %v3787 = vld [vmem:[#allocation2 + $0x50] sm:$0x1]
          %v3788 = vsel %vm3768, 0, %v3787
          %3789 = vst [vmem:[#allocation2 + $0x50] sm:$0x1] %v3788
          %v3790 = vld [vmem:[#allocation2 + $0x5c] sm:$0x1]
          %v3791 = vsel %vm3768, 0, %v3790
          %3792 = vst [vmem:[#allocation2 + $0x5c] sm:$0x1] %v3791
          %v3793 = vld [vmem:[#allocation2 + $0x68] sm:$0x1]
          %v3794 = vsel %vm3768, 0, %v3793
          %3795 = vst [vmem:[#allocation2 + $0x68] sm:$0x1] %v3794
          %v3796 = vld [vmem:[#allocation2 + $0x74] sm:$0x1]
          %v3797 = vsel %vm3768, 0, %v3796
          %3798 = vst [vmem:[#allocation2 + $0x74] sm:$0x1] %v3797
          %3799 = vst [vmem:[#allocation2] sm:$0xf] 0
          %3800 = vst [vmem:[#allocation2 + $0x4] sm:$0xf] 0
          %3801 = vst [vmem:[#allocation2 + $0x8] sm:$0x1] 0
        $region40: #{double_conv.1} parent=35 // pred_fallthru
          _
        %p3802 = scmp.eq.s32.totalorder %s23, 1
        // Predicated region
        $region41: #{double_conv.1} parent=35 // pred_check
          %p3803 = pneg %p3802
        $region42: #{double_conv.1} parent=35 // pred_check_branch
          %3805 = sbr.rel (%p3803) target = $region44
        $region43: #{double_conv.1} parent=35 // pred_region
          %s3806 = scalar_lea.vmem [#allocation2], 108
          %3807 = vst [vmem:[%s3806] sm:$0xf] 0
          %3808 = vst [vmem:[%s3806 + $0x4] sm:$0xf] 0
          %3809 = vst [vmem:[%s3806 + $0x8] sm:$0x1] 0
        $region44: #{double_conv.1} parent=35 // pred_fallthru
          _
        %v3810 = vld [vmem:[#allocation2] sm:$0xf]
        %v3811 = vld [vmem:[#allocation2 + $0x4] sm:$0xf]
        %v3812 = vld [vmem:[#allocation2 + $0xc] sm:$0xf]
        %v3813 = vld [vmem:[#allocation2 + $0x10] sm:$0xf]
        %v3814 = vld [vmem:[#allocation2 + $0x18] sm:$0xf]
        %v3815 = vld [vmem:[#allocation2 + $0x1c] sm:$0xf]
        %v3816 = vld [vmem:[#allocation2 + $0x24] sm:$0xf]
        %v3817 = vld [vmem:[#allocation2 + $0x28] sm:$0xf]
        %v3818 = vld [vmem:[#allocation2 + $0x30] sm:$0xf]
        %v3819 = vld [vmem:[#allocation2 + $0x34] sm:$0xf]
        %v3820 = vld [vmem:[#allocation2 + $0x3c] sm:$0xf]
        %v3821 = vld [vmem:[#allocation2 + $0x40] sm:$0xf]
        %v3822 = vld [vmem:[#allocation2 + $0x48] sm:$0xf]
        %v3823 = vld [vmem:[#allocation2 + $0x4c] sm:$0xf]
        %v3824 = vld [vmem:[#allocation2 + $0x54] sm:$0xf]
        %v3825 = vld [vmem:[#allocation2 + $0x58] sm:$0xf]
        %v3826 = vld [vmem:[%s2] sm:$0xf]
        %v3827 = vld [vmem:[%s2 + $0x4] sm:$0xf]
        %v3828 = vld [vmem:[%s2 + $0x8] sm:$0xf]
        %v3829 = vld [vmem:[%s2 + $0xc] sm:$0xf]
        %v3830 = vld [vmem:[%s2 + $0x10] sm:$0xf]
        %v3831 = vld [vmem:[%s2 + $0x14] sm:$0xf]
        %v3832 = vld [vmem:[%s2 + $0x18] sm:$0xf]
        %v3833 = vld [vmem:[%s2 + $0x1c] sm:$0xf]
        %v3834 = vld [vmem:[%s2 + $0x20] sm:$0xf]
        %v3835 = vld [vmem:[%s2 + $0x24] sm:$0xf]
        %v3836 = vld [vmem:[%s2 + $0x28] sm:$0xf]
        %v3837 = vld [vmem:[%s2 + $0x2c] sm:$0xf]
        %v3838 = vld [vmem:[%s2 + $0x30] sm:$0xf]
        %v3839 = vld [vmem:[%s2 + $0x34] sm:$0xf]
        %v3840 = vld [vmem:[%s2 + $0x38] sm:$0xf]
        %v3841 = vld [vmem:[%s2 + $0x3c] sm:$0xf]
        %v3842 = vld [vmem:[#allocation2 + $0x8] sm:$0x1]
        %v3843 = vld [vmem:[#allocation2 + $0x14] sm:$0x1]
        %v3844 = vld [vmem:[#allocation2 + $0x20] sm:$0x1]
        %v3845 = vld [vmem:[#allocation2 + $0x2c] sm:$0x1]
        %v3846 = vld [vmem:[#allocation2 + $0x38] sm:$0x1]
        %v3847 = vld [vmem:[#allocation2 + $0x44] sm:$0x1]
        %v3848 = vld [vmem:[#allocation2 + $0x50] sm:$0x1]
        %v3849 = vld [vmem:[#allocation2 + $0x5c] sm:$0x1]
        %v3851 = vshrl.u32 %v3810, 16
        %v3853 = vrot.slane %v3851, 4
        %v3854 = vshll.u32 %v3810, 16
        %v3856 = vrot.slane %v3854, 5
        %v3857 = vor.u32 %v3853, %v3856
        %v3858 = vrot.slane %v3857, 4
        %v3860 = vshll.u32 %v3811, 16
        %v3862 = vrot.slane %v3860, 5
        %v3863 = vsel %vm250, %v3858, %v3862
        %v3864 = vshrl.u32 %v3811, 16
        %v3866 = vrot.slane %v3864, 4
        %v3867 = vor.u32 %v3866, %v3862
        %v3868 = vrot.slane %v3867, 4
        %v3870 = vshll.u32 %v3842, 16
        %v3872 = vrot.slane %v3870, 5
        %v3873 = vsel %vm250, %v3868, %v3872
        %v3875 = vshrl.u32 %v3812, 16
        %v3877 = vrot.slane %v3875, 4
        %v3878 = vshll.u32 %v3812, 16
        %v3880 = vrot.slane %v3878, 5
        %v3881 = vor.u32 %v3877, %v3880
        %v3882 = vrot.slane %v3881, 4
        %v3884 = vshll.u32 %v3813, 16
        %v3886 = vrot.slane %v3884, 5
        %v3887 = vsel %vm250, %v3882, %v3886
        %v3888 = vshrl.u32 %v3813, 16
        %v3890 = vrot.slane %v3888, 4
        %v3891 = vor.u32 %v3890, %v3886
        %v3892 = vrot.slane %v3891, 4
        %v3894 = vshll.u32 %v3843, 16
        %v3896 = vrot.slane %v3894, 5
        %v3897 = vsel %vm250, %v3892, %v3896
        %v3899 = vshrl.u32 %v3814, 16
        %v3901 = vrot.slane %v3899, 4
        %v3902 = vshll.u32 %v3814, 16
        %v3904 = vrot.slane %v3902, 5
        %v3905 = vor.u32 %v3901, %v3904
        %v3906 = vrot.slane %v3905, 4
        %v3908 = vshll.u32 %v3815, 16
        %v3910 = vrot.slane %v3908, 5
        %v3911 = vsel %vm250, %v3906, %v3910
        %v3912 = vshrl.u32 %v3815, 16
        %v3914 = vrot.slane %v3912, 4
        %v3915 = vor.u32 %v3914, %v3910
        %v3916 = vrot.slane %v3915, 4
        %v3918 = vshll.u32 %v3844, 16
        %v3920 = vrot.slane %v3918, 5
        %v3921 = vsel %vm250, %v3916, %v3920
        %v3923 = vshrl.u32 %v3816, 16
        %v3925 = vrot.slane %v3923, 4
        %v3926 = vshll.u32 %v3816, 16
        %v3928 = vrot.slane %v3926, 5
        %v3929 = vor.u32 %v3925, %v3928
        %v3930 = vrot.slane %v3929, 4
        %v3932 = vshll.u32 %v3817, 16
        %v3934 = vrot.slane %v3932, 5
        %v3935 = vsel %vm250, %v3930, %v3934
        %v3936 = vshrl.u32 %v3817, 16
        %v3938 = vrot.slane %v3936, 4
        %v3939 = vor.u32 %v3938, %v3934
        %v3940 = vrot.slane %v3939, 4
        %v3942 = vshll.u32 %v3845, 16
        %v3944 = vrot.slane %v3942, 5
        %v3945 = vsel %vm250, %v3940, %v3944
        %v3947 = vshrl.u32 %v3818, 16
        %v3949 = vrot.slane %v3947, 4
        %v3950 = vshll.u32 %v3818, 16
        %v3952 = vrot.slane %v3950, 5
        %v3953 = vor.u32 %v3949, %v3952
        %v3954 = vrot.slane %v3953, 4
        %v3956 = vshll.u32 %v3819, 16
        %v3958 = vrot.slane %v3956, 5
        %v3959 = vsel %vm250, %v3954, %v3958
        %v3960 = vshrl.u32 %v3819, 16
        %v3962 = vrot.slane %v3960, 4
        %v3963 = vor.u32 %v3962, %v3958
        %v3964 = vrot.slane %v3963, 4
        %v3966 = vshll.u32 %v3846, 16
        %v3968 = vrot.slane %v3966, 5
        %v3969 = vsel %vm250, %v3964, %v3968
        %v3971 = vshrl.u32 %v3820, 16
        %v3973 = vrot.slane %v3971, 4
        %v3974 = vshll.u32 %v3820, 16
        %v3976 = vrot.slane %v3974, 5
        %v3977 = vor.u32 %v3973, %v3976
        %v3978 = vrot.slane %v3977, 4
        %v3980 = vshll.u32 %v3821, 16
        %v3982 = vrot.slane %v3980, 5
        %v3983 = vsel %vm250, %v3978, %v3982
        %v3984 = vshrl.u32 %v3821, 16
        %v3986 = vrot.slane %v3984, 4
        %v3987 = vor.u32 %v3986, %v3982
        %v3988 = vrot.slane %v3987, 4
        %v3990 = vshll.u32 %v3847, 16
        %v3992 = vrot.slane %v3990, 5
        %v3993 = vsel %vm250, %v3988, %v3992
        %v3995 = vshrl.u32 %v3822, 16
        %v3997 = vrot.slane %v3995, 4
        %v3998 = vshll.u32 %v3822, 16
        %v4000 = vrot.slane %v3998, 5
        %v4001 = vor.u32 %v3997, %v4000
        %v4002 = vrot.slane %v4001, 4
        %v4004 = vshll.u32 %v3823, 16
        %v4006 = vrot.slane %v4004, 5
        %v4007 = vsel %vm250, %v4002, %v4006
        %v4008 = vshrl.u32 %v3823, 16
        %v4010 = vrot.slane %v4008, 4
        %v4011 = vor.u32 %v4010, %v4006
        %v4012 = vrot.slane %v4011, 4
        %v4014 = vshll.u32 %v3848, 16
        %v4016 = vrot.slane %v4014, 5
        %v4017 = vsel %vm250, %v4012, %v4016
        %v4019 = vshrl.u32 %v3824, 16
        %v4021 = vrot.slane %v4019, 4
        %v4022 = vshll.u32 %v3824, 16
        %v4024 = vrot.slane %v4022, 5
        %v4025 = vor.u32 %v4021, %v4024
        %v4026 = vrot.slane %v4025, 4
        %v4028 = vshll.u32 %v3825, 16
        %v4030 = vrot.slane %v4028, 5
        %v4031 = vsel %vm250, %v4026, %v4030
        %v4032 = vshrl.u32 %v3825, 16
        %v4034 = vrot.slane %v4032, 4
        %v4035 = vor.u32 %v4034, %v4030
        %v4036 = vrot.slane %v4035, 4
        %v4038 = vshll.u32 %v3849, 16
        %v4040 = vrot.slane %v4038, 5
        %v4041 = vsel %vm250, %v4036, %v4040
        %s4042 = scalar_lea.vmem %s2, 64
        %v4043 = vld [vmem:[%s4042] sm:$0xf]
        %v4044 = vld [vmem:[%s4042 + $0x4] sm:$0xf]
        %v4045 = vld [vmem:[%s4042 + $0x8] sm:$0xf]
        %v4046 = vld [vmem:[%s4042 + $0xc] sm:$0xf]
        %v4047 = vld [vmem:[%s4042 + $0x10] sm:$0xf]
        %v4048 = vld [vmem:[%s4042 + $0x14] sm:$0xf]
        %v4049 = vld [vmem:[%s4042 + $0x18] sm:$0xf]
        %v4050 = vld [vmem:[%s4042 + $0x1c] sm:$0xf]
        %v4051 = vld [vmem:[%s4042 + $0x20] sm:$0xf]
        %v4052 = vld [vmem:[%s4042 + $0x24] sm:$0xf]
        %v4053 = vld [vmem:[%s4042 + $0x28] sm:$0xf]
        %v4054 = vld [vmem:[%s4042 + $0x2c] sm:$0xf]
        %v4055 = vld [vmem:[%s4042 + $0x30] sm:$0xf]
        %v4056 = vld [vmem:[%s4042 + $0x34] sm:$0xf]
        %v4057 = vld [vmem:[%s4042 + $0x38] sm:$0xf]
        %v4058 = vld [vmem:[%s4042 + $0x3c] sm:$0xf]
        %v4059 = vunpack.c.l.b16 %v3863
        %v4060 = vunpack.c.l.b16 %v3873
        %v4061 = vunpack.c.l.b16 %v3887
        %v4062 = vunpack.c.l.b16 %v3897
        %v4063 = vunpack.c.l.b16 %v3911
        %v4064 = vunpack.c.l.b16 %v3921
        %v4065 = vunpack.c.l.b16 %v3935
        %v4066 = vunpack.c.l.b16 %v3945
        %v4067 = vunpack.c.l.b16 %v3959
        %v4068 = vunpack.c.l.b16 %v3969
        %v4069 = vunpack.c.l.b16 %v3983
        %v4070 = vunpack.c.l.b16 %v3993
        %v4071 = vunpack.c.l.b16 %v4007
        %v4072 = vunpack.c.l.b16 %v4017
        %v4073 = vunpack.c.l.b16 %v4031
        %v4074 = vunpack.c.l.b16 %v4041
        %v4075 = vpack.c.b16 %v4060, %v4059
        %v4076 = vpack.c.b16 %v4062, %v4061
        %v4077 = vpack.c.b16 %v4064, %v4063
        %v4078 = vpack.c.b16 %v4066, %v4065
        %v4079 = vpack.c.b16 %v4068, %v4067
        %v4080 = vpack.c.b16 %v4070, %v4069
        %v4081 = vpack.c.b16 %v4072, %v4071
        %v4082 = vpack.c.b16 %v4074, %v4073
        %v4107 = vunpack.c.l.b16 %v4043
        %v4108 = vunpack.c.l.b16 %v4044
        %v4109 = vunpack.c.l.b16 %v4045
        %v4110 = vunpack.c.l.b16 %v4046
        %v4111 = vunpack.c.l.b16 %v4047
        %v4112 = vunpack.c.l.b16 %v4048
        %v4113 = vunpack.c.l.b16 %v4049
        %v4114 = vunpack.c.l.b16 %v4050
        %v4115 = vunpack.c.l.b16 %v4051
        %v4116 = vunpack.c.l.b16 %v4052
        %v4117 = vunpack.c.l.b16 %v4053
        %v4118 = vunpack.c.l.b16 %v4054
        %v4119 = vunpack.c.l.b16 %v4055
        %v4120 = vunpack.c.l.b16 %v4056
        %v4121 = vunpack.c.l.b16 %v4057
        %v4122 = vunpack.c.l.b16 %v4058
        %v4123 = vpack.c.b16 %v4108, %v4107
        %v4124 = vpack.c.b16 %v4110, %v4109
        %v4125 = vpack.c.b16 %v4112, %v4111
        %v4126 = vpack.c.b16 %v4114, %v4113
        %v4127 = vpack.c.b16 %v4116, %v4115
        %v4128 = vpack.c.b16 %v4118, %v4117
        %v4129 = vpack.c.b16 %v4120, %v4119
        %v4130 = vpack.c.b16 %v4122, %v4121
        %4139 = vmatprep.subr.bf16.mxu0 0
        %4140 = vmatpush1.bf16.msra.mxu0 %v4130
        %4141 = vmatprep.subr.bf16.mxu0 0
        %4142 = vmatpush1.bf16.msra.mxu0 %v4129
        %4143 = vmatprep.subr.bf16.mxu0 0
        %4144 = vmatpush1.bf16.msra.mxu0 %v4128
        %4145 = vmatprep.subr.bf16.mxu0 0
        %4146 = vmatpush1.bf16.msra.mxu0 %v4127
        %4147 = vmatprep.subr.bf16.mxu0 0
        %4148 = vmatpush1.bf16.msra.mxu0 %v4126
        %4149 = vmatprep.subr.bf16.mxu0 0
        %4150 = vmatpush1.bf16.msra.mxu0 %v4125
        %4151 = vmatprep.subr.bf16.mxu0 0
        %4152 = vmatpush1.bf16.msra.mxu0 %v4124
        %4153 = vmatprep.subr.bf16.mxu0 0
        %4154 = vmatpush1.bf16.msra.mxu0 %v4123
        %4155 = vmatprep.subr.bf16.mxu0 0
        %4156 = vmatpush2.bf16.msra.mxu0 0
        %4157 = vmatprep.subr.bf16.mxu0 0
        %4158 = vmatpush2.bf16.msra.mxu0 0
        %4159 = vmatprep.subr.bf16.mxu0 0
        %4160 = vmatpush2.bf16.msra.mxu0 0
        %4161 = vmatprep.subr.bf16.mxu0 0
        %4162 = vmatpush2.bf16.msra.mxu0 0
        %4163 = vmatprep.subr.bf16.mxu0 0
        %4164 = vmatpush2.bf16.msra.mxu0 0
        %4165 = vmatprep.subr.bf16.mxu0 0
        %4166 = vmatpush2.bf16.msra.mxu0 0
        %4167 = vmatprep.subr.bf16.mxu0 0
        %4168 = vmatpush2.bf16.msra.mxu0 0
        %4169 = vmatprep.subr.bf16.mxu0 0
        %4170 = vmatpush2.bf16.msra.mxu0 0
        %4171 = vmatprep.mubr.bf16.mxu0 0
        %4172 = vmatmul.mubr.bf16.gmra.mxu0 %v4075
        %v4173 = vpop.f32.mrf.mxu0
        %v4174 = vadd.f32 0.0, %v4173
        %v4175 = vpop.f32.mrf.mxu0
        %v4176 = vpop.f32.mrf.mxu0
        %v4177 = vadd.f32 0.0, %v4176
        %v4178 = vpop.f32.mrf.mxu0
        %4179 = vmatprep.mubr.bf16.mxu0 0
        %4180 = vmatmul.mubr.bf16.gmra.mxu0 %v4076
        %v4181 = vpop.f32.mrf.mxu0
        %v4182 = vadd.f32 0.0, %v4181
        %v4183 = vpop.f32.mrf.mxu0
        %v4184 = vpop.f32.mrf.mxu0
        %v4185 = vadd.f32 0.0, %v4184
        %v4186 = vpop.f32.mrf.mxu0
        %4187 = vmatprep.mubr.bf16.mxu0 0
        %4188 = vmatmul.mubr.bf16.gmra.mxu0 %v4077
        %v4189 = vpop.f32.mrf.mxu0
        %v4190 = vadd.f32 0.0, %v4189
        %v4191 = vpop.f32.mrf.mxu0
        %v4192 = vpop.f32.mrf.mxu0
        %v4193 = vadd.f32 0.0, %v4192
        %v4194 = vpop.f32.mrf.mxu0
        %4195 = vmatprep.mubr.bf16.mxu0 0
        %4196 = vmatmul.mubr.bf16.gmra.mxu0 %v4078
        %v4197 = vpop.f32.mrf.mxu0
        %v4198 = vadd.f32 0.0, %v4197
        %v4199 = vpop.f32.mrf.mxu0
        %v4200 = vpop.f32.mrf.mxu0
        %v4201 = vadd.f32 0.0, %v4200
        %v4202 = vpop.f32.mrf.mxu0
        %4203 = vmatprep.mubr.bf16.mxu0 0
        %4204 = vmatmul.mubr.bf16.gmra.mxu0 %v4079
        %v4205 = vpop.f32.mrf.mxu0
        %v4206 = vadd.f32 0.0, %v4205
        %v4207 = vpop.f32.mrf.mxu0
        %v4208 = vpop.f32.mrf.mxu0
        %v4209 = vadd.f32 0.0, %v4208
        %v4210 = vpop.f32.mrf.mxu0
        %4211 = vmatprep.mubr.bf16.mxu0 0
        %4212 = vmatmul.mubr.bf16.gmra.mxu0 %v4080
        %v4213 = vpop.f32.mrf.mxu0
        %v4214 = vadd.f32 0.0, %v4213
        %v4215 = vpop.f32.mrf.mxu0
        %v4216 = vpop.f32.mrf.mxu0
        %v4217 = vadd.f32 0.0, %v4216
        %v4218 = vpop.f32.mrf.mxu0
        %4219 = vmatprep.mubr.bf16.mxu0 0
        %4220 = vmatmul.mubr.bf16.gmra.mxu0 %v4081
        %v4221 = vpop.f32.mrf.mxu0
        %v4222 = vadd.f32 0.0, %v4221
        %v4223 = vpop.f32.mrf.mxu0
        %v4224 = vpop.f32.mrf.mxu0
        %v4225 = vadd.f32 0.0, %v4224
        %v4226 = vpop.f32.mrf.mxu0
        %4227 = vmatprep.mubr.bf16.mxu0 0
        %4228 = vmatmul.mubr.bf16.gmra.mxu0 %v4082
        %v4229 = vpop.f32.mrf.mxu0
        %v4230 = vadd.f32 0.0, %v4229
        %v4231 = vpop.f32.mrf.mxu0
        %v4232 = vpop.f32.mrf.mxu0
        %v4233 = vadd.f32 0.0, %v4232
        %v4234 = vpop.f32.mrf.mxu0
        %4235 = vdwg.mxu0
        %v4252 = vunpack.c.l.b16 %v3810
        %v4253 = vunpack.c.l.b16 %v3811
        %v4254 = vunpack.c.l.b16 %v3812
        %v4255 = vunpack.c.l.b16 %v3813
        %v4256 = vunpack.c.l.b16 %v3814
        %v4257 = vunpack.c.l.b16 %v3815
        %v4258 = vunpack.c.l.b16 %v3816
        %v4259 = vunpack.c.l.b16 %v3817
        %v4260 = vunpack.c.l.b16 %v3818
        %v4261 = vunpack.c.l.b16 %v3819
        %v4262 = vunpack.c.l.b16 %v3820
        %v4263 = vunpack.c.l.b16 %v3821
        %v4264 = vunpack.c.l.b16 %v3822
        %v4265 = vunpack.c.l.b16 %v3823
        %v4266 = vunpack.c.l.b16 %v3824
        %v4267 = vunpack.c.l.b16 %v3825
        %v4268 = vpack.c.b16 %v4253, %v4252
        %v4269 = vpack.c.b16 %v4255, %v4254
        %v4270 = vpack.c.b16 %v4257, %v4256
        %v4271 = vpack.c.b16 %v4259, %v4258
        %v4272 = vpack.c.b16 %v4261, %v4260
        %v4273 = vpack.c.b16 %v4263, %v4262
        %v4274 = vpack.c.b16 %v4265, %v4264
        %v4275 = vpack.c.b16 %v4267, %v4266
        %v4300 = vunpack.c.l.b16 %v3826
        %v4301 = vunpack.c.l.b16 %v3827
        %v4302 = vunpack.c.l.b16 %v3828
        %v4303 = vunpack.c.l.b16 %v3829
        %v4304 = vunpack.c.l.b16 %v3830
        %v4305 = vunpack.c.l.b16 %v3831
        %v4306 = vunpack.c.l.b16 %v3832
        %v4307 = vunpack.c.l.b16 %v3833
        %v4308 = vunpack.c.l.b16 %v3834
        %v4309 = vunpack.c.l.b16 %v3835
        %v4310 = vunpack.c.l.b16 %v3836
        %v4311 = vunpack.c.l.b16 %v3837
        %v4312 = vunpack.c.l.b16 %v3838
        %v4313 = vunpack.c.l.b16 %v3839
        %v4314 = vunpack.c.l.b16 %v3840
        %v4315 = vunpack.c.l.b16 %v3841
        %v4316 = vpack.c.b16 %v4301, %v4300
        %v4317 = vpack.c.b16 %v4303, %v4302
        %v4318 = vpack.c.b16 %v4305, %v4304
        %v4319 = vpack.c.b16 %v4307, %v4306
        %v4320 = vpack.c.b16 %v4309, %v4308
        %v4321 = vpack.c.b16 %v4311, %v4310
        %v4322 = vpack.c.b16 %v4313, %v4312
        %v4323 = vpack.c.b16 %v4315, %v4314
        %4332 = vmatprep.subr.bf16.mxu0 0
        %4333 = vmatpush1.bf16.msra.mxu0 %v4323
        %4334 = vmatprep.subr.bf16.mxu0 0
        %4335 = vmatpush1.bf16.msra.mxu0 %v4322
        %4336 = vmatprep.subr.bf16.mxu0 0
        %4337 = vmatpush1.bf16.msra.mxu0 %v4321
        %4338 = vmatprep.subr.bf16.mxu0 0
        %4339 = vmatpush1.bf16.msra.mxu0 %v4320
        %4340 = vmatprep.subr.bf16.mxu0 0
        %4341 = vmatpush1.bf16.msra.mxu0 %v4319
        %4342 = vmatprep.subr.bf16.mxu0 0
        %4343 = vmatpush1.bf16.msra.mxu0 %v4318
        %4344 = vmatprep.subr.bf16.mxu0 0
        %4345 = vmatpush1.bf16.msra.mxu0 %v4317
        %4346 = vmatprep.subr.bf16.mxu0 0
        %4347 = vmatpush1.bf16.msra.mxu0 %v4316
        %4348 = vmatprep.subr.bf16.mxu0 0
        %4349 = vmatpush2.bf16.msra.mxu0 0
        %4350 = vmatprep.subr.bf16.mxu0 0
        %4351 = vmatpush2.bf16.msra.mxu0 0
        %4352 = vmatprep.subr.bf16.mxu0 0
        %4353 = vmatpush2.bf16.msra.mxu0 0
        %4354 = vmatprep.subr.bf16.mxu0 0
        %4355 = vmatpush2.bf16.msra.mxu0 0
        %4356 = vmatprep.subr.bf16.mxu0 0
        %4357 = vmatpush2.bf16.msra.mxu0 0
        %4358 = vmatprep.subr.bf16.mxu0 0
        %4359 = vmatpush2.bf16.msra.mxu0 0
        %4360 = vmatprep.subr.bf16.mxu0 0
        %4361 = vmatpush2.bf16.msra.mxu0 0
        %4362 = vmatprep.subr.bf16.mxu0 0
        %4363 = vmatpush2.bf16.msra.mxu0 0
        %4364 = vmatprep.mubr.bf16.mxu0 0
        %4365 = vmatmul.mubr.bf16.gmra.mxu0 %v4268
        %v4366 = vpop.f32.mrf.mxu0
        %v4367 = vadd.f32 %v4174, %v4366
        %v4368 = vpop.f32.mrf.mxu0
        %v4369 = vpop.f32.mrf.mxu0
        %v4370 = vadd.f32 %v4177, %v4369
        %v4371 = vpop.f32.mrf.mxu0
        %4372 = vmatprep.mubr.bf16.mxu0 0
        %4373 = vmatmul.mubr.bf16.gmra.mxu0 %v4269
        %v4374 = vpop.f32.mrf.mxu0
        %v4375 = vadd.f32 %v4182, %v4374
        %v4376 = vpop.f32.mrf.mxu0
        %v4377 = vpop.f32.mrf.mxu0
        %v4378 = vadd.f32 %v4185, %v4377
        %v4379 = vpop.f32.mrf.mxu0
        %4380 = vmatprep.mubr.bf16.mxu0 0
        %4381 = vmatmul.mubr.bf16.gmra.mxu0 %v4270
        %v4382 = vpop.f32.mrf.mxu0
        %v4383 = vadd.f32 %v4190, %v4382
        %v4384 = vpop.f32.mrf.mxu0
        %v4385 = vpop.f32.mrf.mxu0
        %v4386 = vadd.f32 %v4193, %v4385
        %v4387 = vpop.f32.mrf.mxu0
        %4388 = vmatprep.mubr.bf16.mxu0 0
        %4389 = vmatmul.mubr.bf16.gmra.mxu0 %v4271
        %v4390 = vpop.f32.mrf.mxu0
        %v4391 = vadd.f32 %v4198, %v4390
        %v4392 = vpop.f32.mrf.mxu0
        %v4393 = vpop.f32.mrf.mxu0
        %v4394 = vadd.f32 %v4201, %v4393
        %v4395 = vpop.f32.mrf.mxu0
        %4396 = vmatprep.mubr.bf16.mxu0 0
        %4397 = vmatmul.mubr.bf16.gmra.mxu0 %v4272
        %v4398 = vpop.f32.mrf.mxu0
        %v4399 = vadd.f32 %v4206, %v4398
        %v4400 = vpop.f32.mrf.mxu0
        %v4401 = vpop.f32.mrf.mxu0
        %v4402 = vadd.f32 %v4209, %v4401
        %v4403 = vpop.f32.mrf.mxu0
        %4404 = vmatprep.mubr.bf16.mxu0 0
        %4405 = vmatmul.mubr.bf16.gmra.mxu0 %v4273
        %v4406 = vpop.f32.mrf.mxu0
        %v4407 = vadd.f32 %v4214, %v4406
        %v4408 = vpop.f32.mrf.mxu0
        %v4409 = vpop.f32.mrf.mxu0
        %v4410 = vadd.f32 %v4217, %v4409
        %v4411 = vpop.f32.mrf.mxu0
        %4412 = vmatprep.mubr.bf16.mxu0 0
        %4413 = vmatmul.mubr.bf16.gmra.mxu0 %v4274
        %v4414 = vpop.f32.mrf.mxu0
        %v4415 = vadd.f32 %v4222, %v4414
        %v4416 = vpop.f32.mrf.mxu0
        %v4417 = vpop.f32.mrf.mxu0
        %v4418 = vadd.f32 %v4225, %v4417
        %v4419 = vpop.f32.mrf.mxu0
        %4420 = vmatprep.mubr.bf16.mxu0 0
        %4421 = vmatmul.mubr.bf16.gmra.mxu0 %v4275
        %v4422 = vpop.f32.mrf.mxu0
        %v4423 = vadd.f32 %v4230, %v4422
        %v4424 = vpop.f32.mrf.mxu0
        %v4425 = vpop.f32.mrf.mxu0
        %v4426 = vadd.f32 %v4233, %v4425
        %v4427 = vpop.f32.mrf.mxu0
        %4428 = vdwg.mxu0
        %v4429 = vld [vmem:[#allocation2] sm:$0xe]
        %v4430 = vld [vmem:[#allocation2 + $0xc] sm:$0xe]
        %v4431 = vld [vmem:[#allocation2 + $0x18] sm:$0xe]
        %v4432 = vld [vmem:[#allocation2 + $0x24] sm:$0xe]
        %v4433 = vld [vmem:[#allocation2 + $0x30] sm:$0xe]
        %v4434 = vld [vmem:[#allocation2 + $0x3c] sm:$0xe]
        %v4435 = vld [vmem:[#allocation2 + $0x48] sm:$0xe]
        %v4436 = vld [vmem:[#allocation2 + $0x54] sm:$0xe]
        %v4453 = vrot.slane %v4429, 5
        %v4454 = vrot.slane %v4453, 4
        %v4455 = vrot.slane %v3811, 5
        %v4456 = vsel %vm899, %v4454, %v4455
        %v4457 = vrot.slane %v4455, 4
        %v4458 = vrot.slane %v3842, 5
        %v4459 = vsel %vm899, %v4457, %v4458
        %v4460 = vrot.slane %v4430, 5
        %v4461 = vrot.slane %v4460, 4
        %v4462 = vrot.slane %v3813, 5
        %v4463 = vsel %vm899, %v4461, %v4462
        %v4464 = vrot.slane %v4462, 4
        %v4465 = vrot.slane %v3843, 5
        %v4466 = vsel %vm899, %v4464, %v4465
        %v4467 = vrot.slane %v4431, 5
        %v4468 = vrot.slane %v4467, 4
        %v4469 = vrot.slane %v3815, 5
        %v4470 = vsel %vm899, %v4468, %v4469
        %v4471 = vrot.slane %v4469, 4
        %v4472 = vrot.slane %v3844, 5
        %v4473 = vsel %vm899, %v4471, %v4472
        %v4474 = vrot.slane %v4432, 5
        %v4475 = vrot.slane %v4474, 4
        %v4476 = vrot.slane %v3817, 5
        %v4477 = vsel %vm899, %v4475, %v4476
        %v4478 = vrot.slane %v4476, 4
        %v4479 = vrot.slane %v3845, 5
        %v4480 = vsel %vm899, %v4478, %v4479
        %v4481 = vrot.slane %v4433, 5
        %v4482 = vrot.slane %v4481, 4
        %v4483 = vrot.slane %v3819, 5
        %v4484 = vsel %vm899, %v4482, %v4483
        %v4485 = vrot.slane %v4483, 4
        %v4486 = vrot.slane %v3846, 5
        %v4487 = vsel %vm899, %v4485, %v4486
        %v4488 = vrot.slane %v4434, 5
        %v4489 = vrot.slane %v4488, 4
        %v4490 = vrot.slane %v3821, 5
        %v4491 = vsel %vm899, %v4489, %v4490
        %v4492 = vrot.slane %v4490, 4
        %v4493 = vrot.slane %v3847, 5
        %v4494 = vsel %vm899, %v4492, %v4493
        %v4495 = vrot.slane %v4435, 5
        %v4496 = vrot.slane %v4495, 4
        %v4497 = vrot.slane %v3823, 5
        %v4498 = vsel %vm899, %v4496, %v4497
        %v4499 = vrot.slane %v4497, 4
        %v4500 = vrot.slane %v3848, 5
        %v4501 = vsel %vm899, %v4499, %v4500
        %v4502 = vrot.slane %v4436, 5
        %v4503 = vrot.slane %v4502, 4
        %v4504 = vrot.slane %v3825, 5
        %v4505 = vsel %vm899, %v4503, %v4504
        %v4506 = vrot.slane %v4504, 4
        %v4507 = vrot.slane %v3849, 5
        %v4508 = vsel %vm899, %v4506, %v4507
        %s4509 = scalar_lea.vmem %s2, 128
        %v4510 = vld [vmem:[%s4509] sm:$0xf]
        %v4511 = vld [vmem:[%s4509 + $0x4] sm:$0xf]
        %v4512 = vld [vmem:[%s4509 + $0x8] sm:$0xf]
        %v4513 = vld [vmem:[%s4509 + $0xc] sm:$0xf]
        %v4514 = vld [vmem:[%s4509 + $0x10] sm:$0xf]
        %v4515 = vld [vmem:[%s4509 + $0x14] sm:$0xf]
        %v4516 = vld [vmem:[%s4509 + $0x18] sm:$0xf]
        %v4517 = vld [vmem:[%s4509 + $0x1c] sm:$0xf]
        %v4518 = vld [vmem:[%s4509 + $0x20] sm:$0xf]
        %v4519 = vld [vmem:[%s4509 + $0x24] sm:$0xf]
        %v4520 = vld [vmem:[%s4509 + $0x28] sm:$0xf]
        %v4521 = vld [vmem:[%s4509 + $0x2c] sm:$0xf]
        %v4522 = vld [vmem:[%s4509 + $0x30] sm:$0xf]
        %v4523 = vld [vmem:[%s4509 + $0x34] sm:$0xf]
        %v4524 = vld [vmem:[%s4509 + $0x38] sm:$0xf]
        %v4525 = vld [vmem:[%s4509 + $0x3c] sm:$0xf]
        %v4526 = vunpack.c.l.b16 %v4456
        %v4527 = vunpack.c.l.b16 %v4459
        %v4528 = vunpack.c.l.b16 %v4463
        %v4529 = vunpack.c.l.b16 %v4466
        %v4530 = vunpack.c.l.b16 %v4470
        %v4531 = vunpack.c.l.b16 %v4473
        %v4532 = vunpack.c.l.b16 %v4477
        %v4533 = vunpack.c.l.b16 %v4480
        %v4534 = vunpack.c.l.b16 %v4484
        %v4535 = vunpack.c.l.b16 %v4487
        %v4536 = vunpack.c.l.b16 %v4491
        %v4537 = vunpack.c.l.b16 %v4494
        %v4538 = vunpack.c.l.b16 %v4498
        %v4539 = vunpack.c.l.b16 %v4501
        %v4540 = vunpack.c.l.b16 %v4505
        %v4541 = vunpack.c.l.b16 %v4508
        %v4542 = vpack.c.b16 %v4527, %v4526
        %v4543 = vpack.c.b16 %v4529, %v4528
        %v4544 = vpack.c.b16 %v4531, %v4530
        %v4545 = vpack.c.b16 %v4533, %v4532
        %v4546 = vpack.c.b16 %v4535, %v4534
        %v4547 = vpack.c.b16 %v4537, %v4536
        %v4548 = vpack.c.b16 %v4539, %v4538
        %v4549 = vpack.c.b16 %v4541, %v4540
        %v4574 = vunpack.c.l.b16 %v4510
        %v4575 = vunpack.c.l.b16 %v4511
        %v4576 = vunpack.c.l.b16 %v4512
        %v4577 = vunpack.c.l.b16 %v4513
        %v4578 = vunpack.c.l.b16 %v4514
        %v4579 = vunpack.c.l.b16 %v4515
        %v4580 = vunpack.c.l.b16 %v4516
        %v4581 = vunpack.c.l.b16 %v4517
        %v4582 = vunpack.c.l.b16 %v4518
        %v4583 = vunpack.c.l.b16 %v4519
        %v4584 = vunpack.c.l.b16 %v4520
        %v4585 = vunpack.c.l.b16 %v4521
        %v4586 = vunpack.c.l.b16 %v4522
        %v4587 = vunpack.c.l.b16 %v4523
        %v4588 = vunpack.c.l.b16 %v4524
        %v4589 = vunpack.c.l.b16 %v4525
        %v4590 = vpack.c.b16 %v4575, %v4574
        %v4591 = vpack.c.b16 %v4577, %v4576
        %v4592 = vpack.c.b16 %v4579, %v4578
        %v4593 = vpack.c.b16 %v4581, %v4580
        %v4594 = vpack.c.b16 %v4583, %v4582
        %v4595 = vpack.c.b16 %v4585, %v4584
        %v4596 = vpack.c.b16 %v4587, %v4586
        %v4597 = vpack.c.b16 %v4589, %v4588
        %4606 = vmatprep.subr.bf16.mxu0 0
        %4607 = vmatpush1.bf16.msra.mxu0 %v4597
        %4608 = vmatprep.subr.bf16.mxu0 0
        %4609 = vmatpush1.bf16.msra.mxu0 %v4596
        %4610 = vmatprep.subr.bf16.mxu0 0
        %4611 = vmatpush1.bf16.msra.mxu0 %v4595
        %4612 = vmatprep.subr.bf16.mxu0 0
        %4613 = vmatpush1.bf16.msra.mxu0 %v4594
        %4614 = vmatprep.subr.bf16.mxu0 0
        %4615 = vmatpush1.bf16.msra.mxu0 %v4593
        %4616 = vmatprep.subr.bf16.mxu0 0
        %4617 = vmatpush1.bf16.msra.mxu0 %v4592
        %4618 = vmatprep.subr.bf16.mxu0 0
        %4619 = vmatpush1.bf16.msra.mxu0 %v4591
        %4620 = vmatprep.subr.bf16.mxu0 0
        %4621 = vmatpush1.bf16.msra.mxu0 %v4590
        %4622 = vmatprep.subr.bf16.mxu0 0
        %4623 = vmatpush2.bf16.msra.mxu0 0
        %4624 = vmatprep.subr.bf16.mxu0 0
        %4625 = vmatpush2.bf16.msra.mxu0 0
        %4626 = vmatprep.subr.bf16.mxu0 0
        %4627 = vmatpush2.bf16.msra.mxu0 0
        %4628 = vmatprep.subr.bf16.mxu0 0
        %4629 = vmatpush2.bf16.msra.mxu0 0
        %4630 = vmatprep.subr.bf16.mxu0 0
        %4631 = vmatpush2.bf16.msra.mxu0 0
        %4632 = vmatprep.subr.bf16.mxu0 0
        %4633 = vmatpush2.bf16.msra.mxu0 0
        %4634 = vmatprep.subr.bf16.mxu0 0
        %4635 = vmatpush2.bf16.msra.mxu0 0
        %4636 = vmatprep.subr.bf16.mxu0 0
        %4637 = vmatpush2.bf16.msra.mxu0 0
        %4638 = vmatprep.mubr.bf16.mxu0 0
        %4639 = vmatmul.mubr.bf16.gmra.mxu0 %v4542
        %v4640 = vpop.f32.mrf.mxu0
        %v4641 = vadd.f32 0.0, %v4640
        %v4642 = vpop.f32.mrf.mxu0
        %v4643 = vpop.f32.mrf.mxu0
        %v4644 = vadd.f32 0.0, %v4643
        %v4645 = vpop.f32.mrf.mxu0
        %4646 = vmatprep.mubr.bf16.mxu0 0
        %4647 = vmatmul.mubr.bf16.gmra.mxu0 %v4543
        %v4648 = vpop.f32.mrf.mxu0
        %v4649 = vadd.f32 0.0, %v4648
        %v4650 = vpop.f32.mrf.mxu0
        %v4651 = vpop.f32.mrf.mxu0
        %v4652 = vadd.f32 0.0, %v4651
        %v4653 = vpop.f32.mrf.mxu0
        %4654 = vmatprep.mubr.bf16.mxu0 0
        %4655 = vmatmul.mubr.bf16.gmra.mxu0 %v4544
        %v4656 = vpop.f32.mrf.mxu0
        %v4657 = vadd.f32 0.0, %v4656
        %v4658 = vpop.f32.mrf.mxu0
        %v4659 = vpop.f32.mrf.mxu0
        %v4660 = vadd.f32 0.0, %v4659
        %v4661 = vpop.f32.mrf.mxu0
        %4662 = vmatprep.mubr.bf16.mxu0 0
        %4663 = vmatmul.mubr.bf16.gmra.mxu0 %v4545
        %v4664 = vpop.f32.mrf.mxu0
        %v4665 = vadd.f32 0.0, %v4664
        %v4666 = vpop.f32.mrf.mxu0
        %v4667 = vpop.f32.mrf.mxu0
        %v4668 = vadd.f32 0.0, %v4667
        %v4669 = vpop.f32.mrf.mxu0
        %4670 = vmatprep.mubr.bf16.mxu0 0
        %4671 = vmatmul.mubr.bf16.gmra.mxu0 %v4546
        %v4672 = vpop.f32.mrf.mxu0
        %v4673 = vadd.f32 0.0, %v4672
        %v4674 = vpop.f32.mrf.mxu0
        %v4675 = vpop.f32.mrf.mxu0
        %v4676 = vadd.f32 0.0, %v4675
        %v4677 = vpop.f32.mrf.mxu0
        %4678 = vmatprep.mubr.bf16.mxu0 0
        %4679 = vmatmul.mubr.bf16.gmra.mxu0 %v4547
        %v4680 = vpop.f32.mrf.mxu0
        %v4681 = vadd.f32 0.0, %v4680
        %v4682 = vpop.f32.mrf.mxu0
        %v4683 = vpop.f32.mrf.mxu0
        %v4684 = vadd.f32 0.0, %v4683
        %v4685 = vpop.f32.mrf.mxu0
        %4686 = vmatprep.mubr.bf16.mxu0 0
        %4687 = vmatmul.mubr.bf16.gmra.mxu0 %v4548
        %v4688 = vpop.f32.mrf.mxu0
        %v4689 = vadd.f32 0.0, %v4688
        %v4690 = vpop.f32.mrf.mxu0
        %v4691 = vpop.f32.mrf.mxu0
        %v4692 = vadd.f32 0.0, %v4691
        %v4693 = vpop.f32.mrf.mxu0
        %4694 = vmatprep.mubr.bf16.mxu0 0
        %4695 = vmatmul.mubr.bf16.gmra.mxu0 %v4549
        %v4696 = vpop.f32.mrf.mxu0
        %v4697 = vadd.f32 0.0, %v4696
        %v4698 = vpop.f32.mrf.mxu0
        %v4699 = vpop.f32.mrf.mxu0
        %v4700 = vadd.f32 0.0, %v4699
        %v4701 = vpop.f32.mrf.mxu0
        %4702 = vdwg.mxu0
        %v4703 = vadd.f32 %v4367, %v4641
        %v4704 = vadd.f32 %v4370, %v4644
        %v4705 = vadd.f32 %v4375, %v4649
        %v4706 = vadd.f32 %v4378, %v4652
        %v4707 = vadd.f32 %v4383, %v4657
        %v4708 = vadd.f32 %v4386, %v4660
        %v4709 = vadd.f32 %v4391, %v4665
        %v4710 = vadd.f32 %v4394, %v4668
        %v4711 = vadd.f32 %v4399, %v4673
        %v4712 = vadd.f32 %v4402, %v4676
        %v4713 = vadd.f32 %v4407, %v4681
        %v4714 = vadd.f32 %v4410, %v4684
        %v4715 = vadd.f32 %v4415, %v4689
        %v4716 = vadd.f32 %v4418, %v4692
        %v4717 = vadd.f32 %v4423, %v4697
        %v4718 = vadd.f32 %v4426, %v4700
        %s4719 = scalar_lea.vmem [#allocation2], 12
        %v4720 = vld [vmem:[%s4719] sm:$0xf]
        %v4721 = vld [vmem:[%s4719 + $0x4] sm:$0xf]
        %v4722 = vld [vmem:[%s4719 + $0xc] sm:$0xf]
        %v4723 = vld [vmem:[%s4719 + $0x10] sm:$0xf]
        %v4724 = vld [vmem:[%s4719 + $0x18] sm:$0xf]
        %v4725 = vld [vmem:[%s4719 + $0x1c] sm:$0xf]
        %v4726 = vld [vmem:[%s4719 + $0x24] sm:$0xf]
        %v4727 = vld [vmem:[%s4719 + $0x28] sm:$0xf]
        %v4728 = vld [vmem:[%s4719 + $0x30] sm:$0xf]
        %v4729 = vld [vmem:[%s4719 + $0x34] sm:$0xf]
        %v4730 = vld [vmem:[%s4719 + $0x3c] sm:$0xf]
        %v4731 = vld [vmem:[%s4719 + $0x40] sm:$0xf]
        %v4732 = vld [vmem:[%s4719 + $0x48] sm:$0xf]
        %v4733 = vld [vmem:[%s4719 + $0x4c] sm:$0xf]
        %v4734 = vld [vmem:[%s4719 + $0x54] sm:$0xf]
        %v4735 = vld [vmem:[%s4719 + $0x58] sm:$0xf]
        %s4736 = scalar_lea.vmem %s2, 192
        %v4737 = vld [vmem:[%s4736] sm:$0xf]
        %v4738 = vld [vmem:[%s4736 + $0x4] sm:$0xf]
        %v4739 = vld [vmem:[%s4736 + $0x8] sm:$0xf]
        %v4740 = vld [vmem:[%s4736 + $0xc] sm:$0xf]
        %v4741 = vld [vmem:[%s4736 + $0x10] sm:$0xf]
        %v4742 = vld [vmem:[%s4736 + $0x14] sm:$0xf]
        %v4743 = vld [vmem:[%s4736 + $0x18] sm:$0xf]
        %v4744 = vld [vmem:[%s4736 + $0x1c] sm:$0xf]
        %v4745 = vld [vmem:[%s4736 + $0x20] sm:$0xf]
        %v4746 = vld [vmem:[%s4736 + $0x24] sm:$0xf]
        %v4747 = vld [vmem:[%s4736 + $0x28] sm:$0xf]
        %v4748 = vld [vmem:[%s4736 + $0x2c] sm:$0xf]
        %v4749 = vld [vmem:[%s4736 + $0x30] sm:$0xf]
        %v4750 = vld [vmem:[%s4736 + $0x34] sm:$0xf]
        %v4751 = vld [vmem:[%s4736 + $0x38] sm:$0xf]
        %v4752 = vld [vmem:[%s4736 + $0x3c] sm:$0xf]
        %v4769 = vunpack.c.l.b16 %v4720
        %v4770 = vunpack.c.l.b16 %v4721
        %v4771 = vunpack.c.l.b16 %v4722
        %v4772 = vunpack.c.l.b16 %v4723
        %v4773 = vunpack.c.l.b16 %v4724
        %v4774 = vunpack.c.l.b16 %v4725
        %v4775 = vunpack.c.l.b16 %v4726
        %v4776 = vunpack.c.l.b16 %v4727
        %v4777 = vunpack.c.l.b16 %v4728
        %v4778 = vunpack.c.l.b16 %v4729
        %v4779 = vunpack.c.l.b16 %v4730
        %v4780 = vunpack.c.l.b16 %v4731
        %v4781 = vunpack.c.l.b16 %v4732
        %v4782 = vunpack.c.l.b16 %v4733
        %v4783 = vunpack.c.l.b16 %v4734
        %v4784 = vunpack.c.l.b16 %v4735
        %v4785 = vpack.c.b16 %v4770, %v4769
        %v4786 = vpack.c.b16 %v4772, %v4771
        %v4787 = vpack.c.b16 %v4774, %v4773
        %v4788 = vpack.c.b16 %v4776, %v4775
        %v4789 = vpack.c.b16 %v4778, %v4777
        %v4790 = vpack.c.b16 %v4780, %v4779
        %v4791 = vpack.c.b16 %v4782, %v4781
        %v4792 = vpack.c.b16 %v4784, %v4783
        %v4817 = vunpack.c.l.b16 %v4737
        %v4818 = vunpack.c.l.b16 %v4738
        %v4819 = vunpack.c.l.b16 %v4739
        %v4820 = vunpack.c.l.b16 %v4740
        %v4821 = vunpack.c.l.b16 %v4741
        %v4822 = vunpack.c.l.b16 %v4742
        %v4823 = vunpack.c.l.b16 %v4743
        %v4824 = vunpack.c.l.b16 %v4744
        %v4825 = vunpack.c.l.b16 %v4745
        %v4826 = vunpack.c.l.b16 %v4746
        %v4827 = vunpack.c.l.b16 %v4747
        %v4828 = vunpack.c.l.b16 %v4748
        %v4829 = vunpack.c.l.b16 %v4749
        %v4830 = vunpack.c.l.b16 %v4750
        %v4831 = vunpack.c.l.b16 %v4751
        %v4832 = vunpack.c.l.b16 %v4752
        %v4833 = vpack.c.b16 %v4818, %v4817
        %v4834 = vpack.c.b16 %v4820, %v4819
        %v4835 = vpack.c.b16 %v4822, %v4821
        %v4836 = vpack.c.b16 %v4824, %v4823
        %v4837 = vpack.c.b16 %v4826, %v4825
        %v4838 = vpack.c.b16 %v4828, %v4827
        %v4839 = vpack.c.b16 %v4830, %v4829
        %v4840 = vpack.c.b16 %v4832, %v4831
        %4849 = vmatprep.subr.bf16.mxu0 0
        %4850 = vmatpush1.bf16.msra.mxu0 %v4840
        %4851 = vmatprep.subr.bf16.mxu0 0
        %4852 = vmatpush1.bf16.msra.mxu0 %v4839
        %4853 = vmatprep.subr.bf16.mxu0 0
        %4854 = vmatpush1.bf16.msra.mxu0 %v4838
        %4855 = vmatprep.subr.bf16.mxu0 0
        %4856 = vmatpush1.bf16.msra.mxu0 %v4837
        %4857 = vmatprep.subr.bf16.mxu0 0
        %4858 = vmatpush1.bf16.msra.mxu0 %v4836
        %4859 = vmatprep.subr.bf16.mxu0 0
        %4860 = vmatpush1.bf16.msra.mxu0 %v4835
        %4861 = vmatprep.subr.bf16.mxu0 0
        %4862 = vmatpush1.bf16.msra.mxu0 %v4834
        %4863 = vmatprep.subr.bf16.mxu0 0
        %4864 = vmatpush1.bf16.msra.mxu0 %v4833
        %4865 = vmatprep.subr.bf16.mxu0 0
        %4866 = vmatpush2.bf16.msra.mxu0 0
        %4867 = vmatprep.subr.bf16.mxu0 0
        %4868 = vmatpush2.bf16.msra.mxu0 0
        %4869 = vmatprep.subr.bf16.mxu0 0
        %4870 = vmatpush2.bf16.msra.mxu0 0
        %4871 = vmatprep.subr.bf16.mxu0 0
        %4872 = vmatpush2.bf16.msra.mxu0 0
        %4873 = vmatprep.subr.bf16.mxu0 0
        %4874 = vmatpush2.bf16.msra.mxu0 0
        %4875 = vmatprep.subr.bf16.mxu0 0
        %4876 = vmatpush2.bf16.msra.mxu0 0
        %4877 = vmatprep.subr.bf16.mxu0 0
        %4878 = vmatpush2.bf16.msra.mxu0 0
        %4879 = vmatprep.subr.bf16.mxu0 0
        %4880 = vmatpush2.bf16.msra.mxu0 0
        %4881 = vmatprep.mubr.bf16.mxu0 0
        %4882 = vmatmul.mubr.bf16.gmra.mxu0 %v4785
        %v4883 = vpop.f32.mrf.mxu0
        %v4884 = vadd.f32 0.0, %v4883
        %v4885 = vpop.f32.mrf.mxu0
        %v4886 = vpop.f32.mrf.mxu0
        %v4887 = vadd.f32 0.0, %v4886
        %v4888 = vpop.f32.mrf.mxu0
        %4889 = vmatprep.mubr.bf16.mxu0 0
        %4890 = vmatmul.mubr.bf16.gmra.mxu0 %v4786
        %v4891 = vpop.f32.mrf.mxu0
        %v4892 = vadd.f32 0.0, %v4891
        %v4893 = vpop.f32.mrf.mxu0
        %v4894 = vpop.f32.mrf.mxu0
        %v4895 = vadd.f32 0.0, %v4894
        %v4896 = vpop.f32.mrf.mxu0
        %4897 = vmatprep.mubr.bf16.mxu0 0
        %4898 = vmatmul.mubr.bf16.gmra.mxu0 %v4787
        %v4899 = vpop.f32.mrf.mxu0
        %v4900 = vadd.f32 0.0, %v4899
        %v4901 = vpop.f32.mrf.mxu0
        %v4902 = vpop.f32.mrf.mxu0
        %v4903 = vadd.f32 0.0, %v4902
        %v4904 = vpop.f32.mrf.mxu0
        %4905 = vmatprep.mubr.bf16.mxu0 0
        %4906 = vmatmul.mubr.bf16.gmra.mxu0 %v4788
        %v4907 = vpop.f32.mrf.mxu0
        %v4908 = vadd.f32 0.0, %v4907
        %v4909 = vpop.f32.mrf.mxu0
        %v4910 = vpop.f32.mrf.mxu0
        %v4911 = vadd.f32 0.0, %v4910
        %v4912 = vpop.f32.mrf.mxu0
        %4913 = vmatprep.mubr.bf16.mxu0 0
        %4914 = vmatmul.mubr.bf16.gmra.mxu0 %v4789
        %v4915 = vpop.f32.mrf.mxu0
        %v4916 = vadd.f32 0.0, %v4915
        %v4917 = vpop.f32.mrf.mxu0
        %v4918 = vpop.f32.mrf.mxu0
        %v4919 = vadd.f32 0.0, %v4918
        %v4920 = vpop.f32.mrf.mxu0
        %4921 = vmatprep.mubr.bf16.mxu0 0
        %4922 = vmatmul.mubr.bf16.gmra.mxu0 %v4790
        %v4923 = vpop.f32.mrf.mxu0
        %v4924 = vadd.f32 0.0, %v4923
        %v4925 = vpop.f32.mrf.mxu0
        %v4926 = vpop.f32.mrf.mxu0
        %v4927 = vadd.f32 0.0, %v4926
        %v4928 = vpop.f32.mrf.mxu0
        %4929 = vmatprep.mubr.bf16.mxu0 0
        %4930 = vmatmul.mubr.bf16.gmra.mxu0 %v4791
        %v4931 = vpop.f32.mrf.mxu0
        %v4932 = vadd.f32 0.0, %v4931
        %v4933 = vpop.f32.mrf.mxu0
        %v4934 = vpop.f32.mrf.mxu0
        %v4935 = vadd.f32 0.0, %v4934
        %v4936 = vpop.f32.mrf.mxu0
        %4937 = vmatprep.mubr.bf16.mxu0 0
        %4938 = vmatmul.mubr.bf16.gmra.mxu0 %v4792
        %v4939 = vpop.f32.mrf.mxu0
        %v4940 = vadd.f32 0.0, %v4939
        %v4941 = vpop.f32.mrf.mxu0
        %v4942 = vpop.f32.mrf.mxu0
        %v4943 = vadd.f32 0.0, %v4942
        %v4944 = vpop.f32.mrf.mxu0
        %4945 = vdwg.mxu0
        %v4946 = vadd.f32 %v4703, %v4884
        %v4947 = vadd.f32 %v4704, %v4887
        %v4948 = vadd.f32 %v4705, %v4892
        %v4949 = vadd.f32 %v4706, %v4895
        %v4950 = vadd.f32 %v4707, %v4900
        %v4951 = vadd.f32 %v4708, %v4903
        %v4952 = vadd.f32 %v4709, %v4908
        %v4953 = vadd.f32 %v4710, %v4911
        %v4954 = vadd.f32 %v4711, %v4916
        %v4955 = vadd.f32 %v4712, %v4919
        %v4956 = vadd.f32 %v4713, %v4924
        %v4957 = vadd.f32 %v4714, %v4927
        %v4958 = vadd.f32 %v4715, %v4932
        %v4959 = vadd.f32 %v4716, %v4935
        %v4960 = vadd.f32 %v4717, %v4940
        %v4961 = vadd.f32 %v4718, %v4943
        %v4962 = vld [vmem:[%s4719] sm:$0xf]
        %v4963 = vld [vmem:[%s4719 + $0x4] sm:$0xf]
        %v4964 = vld [vmem:[%s4719 + $0x8] sm:$0x1]
        %v4965 = vld [vmem:[%s4719 + $0xc] sm:$0xf]
        %v4966 = vld [vmem:[%s4719 + $0x10] sm:$0xf]
        %v4967 = vld [vmem:[%s4719 + $0x14] sm:$0x1]
        %v4968 = vld [vmem:[%s4719 + $0x18] sm:$0xf]
        %v4969 = vld [vmem:[%s4719 + $0x1c] sm:$0xf]
        %v4970 = vld [vmem:[%s4719 + $0x20] sm:$0x1]
        %v4971 = vld [vmem:[%s4719 + $0x24] sm:$0xf]
        %v4972 = vld [vmem:[%s4719 + $0x28] sm:$0xf]
        %v4973 = vld [vmem:[%s4719 + $0x2c] sm:$0x1]
        %v4974 = vld [vmem:[%s4719 + $0x30] sm:$0xf]
        %v4975 = vld [vmem:[%s4719 + $0x34] sm:$0xf]
        %v4976 = vld [vmem:[%s4719 + $0x38] sm:$0x1]
        %v4977 = vld [vmem:[%s4719 + $0x3c] sm:$0xf]
        %v4978 = vld [vmem:[%s4719 + $0x40] sm:$0xf]
        %v4979 = vld [vmem:[%s4719 + $0x44] sm:$0x1]
        %v4980 = vld [vmem:[%s4719 + $0x48] sm:$0xf]
        %v4981 = vld [vmem:[%s4719 + $0x4c] sm:$0xf]
        %v4982 = vld [vmem:[%s4719 + $0x50] sm:$0x1]
        %v4983 = vld [vmem:[%s4719 + $0x54] sm:$0xf]
        %v4984 = vld [vmem:[%s4719 + $0x58] sm:$0xf]
        %v4985 = vld [vmem:[%s4719 + $0x5c] sm:$0x1]
        %v4987 = vshrl.u32 %v4962, 16
        %v4989 = vrot.slane %v4987, 4
        %v4990 = vshll.u32 %v4962, 16
        %v4992 = vrot.slane %v4990, 5
        %v4993 = vor.u32 %v4989, %v4992
        %v4994 = vrot.slane %v4993, 4
        %v4996 = vshll.u32 %v4963, 16
        %v4998 = vrot.slane %v4996, 5
        %v4999 = vsel %vm250, %v4994, %v4998
        %v5000 = vshrl.u32 %v4963, 16
        %v5002 = vrot.slane %v5000, 4
        %v5003 = vor.u32 %v5002, %v4998
        %v5004 = vrot.slane %v5003, 4
        %v5006 = vshll.u32 %v4964, 16
        %v5008 = vrot.slane %v5006, 5
        %v5009 = vsel %vm250, %v5004, %v5008
        %v5011 = vshrl.u32 %v4965, 16
        %v5013 = vrot.slane %v5011, 4
        %v5014 = vshll.u32 %v4965, 16
        %v5016 = vrot.slane %v5014, 5
        %v5017 = vor.u32 %v5013, %v5016
        %v5018 = vrot.slane %v5017, 4
        %v5020 = vshll.u32 %v4966, 16
        %v5022 = vrot.slane %v5020, 5
        %v5023 = vsel %vm250, %v5018, %v5022
        %v5024 = vshrl.u32 %v4966, 16
        %v5026 = vrot.slane %v5024, 4
        %v5027 = vor.u32 %v5026, %v5022
        %v5028 = vrot.slane %v5027, 4
        %v5030 = vshll.u32 %v4967, 16
        %v5032 = vrot.slane %v5030, 5
        %v5033 = vsel %vm250, %v5028, %v5032
        %v5035 = vshrl.u32 %v4968, 16
        %v5037 = vrot.slane %v5035, 4
        %v5038 = vshll.u32 %v4968, 16
        %v5040 = vrot.slane %v5038, 5
        %v5041 = vor.u32 %v5037, %v5040
        %v5042 = vrot.slane %v5041, 4
        %v5044 = vshll.u32 %v4969, 16
        %v5046 = vrot.slane %v5044, 5
        %v5047 = vsel %vm250, %v5042, %v5046
        %v5048 = vshrl.u32 %v4969, 16
        %v5050 = vrot.slane %v5048, 4
        %v5051 = vor.u32 %v5050, %v5046
        %v5052 = vrot.slane %v5051, 4
        %v5054 = vshll.u32 %v4970, 16
        %v5056 = vrot.slane %v5054, 5
        %v5057 = vsel %vm250, %v5052, %v5056
        %v5059 = vshrl.u32 %v4971, 16
        %v5061 = vrot.slane %v5059, 4
        %v5062 = vshll.u32 %v4971, 16
        %v5064 = vrot.slane %v5062, 5
        %v5065 = vor.u32 %v5061, %v5064
        %v5066 = vrot.slane %v5065, 4
        %v5068 = vshll.u32 %v4972, 16
        %v5070 = vrot.slane %v5068, 5
        %v5071 = vsel %vm250, %v5066, %v5070
        %v5072 = vshrl.u32 %v4972, 16
        %v5074 = vrot.slane %v5072, 4
        %v5075 = vor.u32 %v5074, %v5070
        %v5076 = vrot.slane %v5075, 4
        %v5078 = vshll.u32 %v4973, 16
        %v5080 = vrot.slane %v5078, 5
        %v5081 = vsel %vm250, %v5076, %v5080
        %v5083 = vshrl.u32 %v4974, 16
        %v5085 = vrot.slane %v5083, 4
        %v5086 = vshll.u32 %v4974, 16
        %v5088 = vrot.slane %v5086, 5
        %v5089 = vor.u32 %v5085, %v5088
        %v5090 = vrot.slane %v5089, 4
        %v5092 = vshll.u32 %v4975, 16
        %v5094 = vrot.slane %v5092, 5
        %v5095 = vsel %vm250, %v5090, %v5094
        %v5096 = vshrl.u32 %v4975, 16
        %v5098 = vrot.slane %v5096, 4
        %v5099 = vor.u32 %v5098, %v5094
        %v5100 = vrot.slane %v5099, 4
        %v5102 = vshll.u32 %v4976, 16
        %v5104 = vrot.slane %v5102, 5
        %v5105 = vsel %vm250, %v5100, %v5104
        %v5107 = vshrl.u32 %v4977, 16
        %v5109 = vrot.slane %v5107, 4
        %v5110 = vshll.u32 %v4977, 16
        %v5112 = vrot.slane %v5110, 5
        %v5113 = vor.u32 %v5109, %v5112
        %v5114 = vrot.slane %v5113, 4
        %v5116 = vshll.u32 %v4978, 16
        %v5118 = vrot.slane %v5116, 5
        %v5119 = vsel %vm250, %v5114, %v5118
        %v5120 = vshrl.u32 %v4978, 16
        %v5122 = vrot.slane %v5120, 4
        %v5123 = vor.u32 %v5122, %v5118
        %v5124 = vrot.slane %v5123, 4
        %v5126 = vshll.u32 %v4979, 16
        %v5128 = vrot.slane %v5126, 5
        %v5129 = vsel %vm250, %v5124, %v5128
        %v5131 = vshrl.u32 %v4980, 16
        %v5133 = vrot.slane %v5131, 4
        %v5134 = vshll.u32 %v4980, 16
        %v5136 = vrot.slane %v5134, 5
        %v5137 = vor.u32 %v5133, %v5136
        %v5138 = vrot.slane %v5137, 4
        %v5140 = vshll.u32 %v4981, 16
        %v5142 = vrot.slane %v5140, 5
        %v5143 = vsel %vm250, %v5138, %v5142
        %v5144 = vshrl.u32 %v4981, 16
        %v5146 = vrot.slane %v5144, 4
        %v5147 = vor.u32 %v5146, %v5142
        %v5148 = vrot.slane %v5147, 4
        %v5150 = vshll.u32 %v4982, 16
        %v5152 = vrot.slane %v5150, 5
        %v5153 = vsel %vm250, %v5148, %v5152
        %v5155 = vshrl.u32 %v4983, 16
        %v5157 = vrot.slane %v5155, 4
        %v5158 = vshll.u32 %v4983, 16
        %v5160 = vrot.slane %v5158, 5
        %v5161 = vor.u32 %v5157, %v5160
        %v5162 = vrot.slane %v5161, 4
        %v5164 = vshll.u32 %v4984, 16
        %v5166 = vrot.slane %v5164, 5
        %v5167 = vsel %vm250, %v5162, %v5166
        %v5168 = vshrl.u32 %v4984, 16
        %v5170 = vrot.slane %v5168, 4
        %v5171 = vor.u32 %v5170, %v5166
        %v5172 = vrot.slane %v5171, 4
        %v5174 = vshll.u32 %v4985, 16
        %v5176 = vrot.slane %v5174, 5
        %v5177 = vsel %vm250, %v5172, %v5176
        %s5178 = scalar_lea.vmem %s2, 256
        %v5179 = vld [vmem:[%s5178] sm:$0xf]
        %v5180 = vld [vmem:[%s5178 + $0x4] sm:$0xf]
        %v5181 = vld [vmem:[%s5178 + $0x8] sm:$0xf]
        %v5182 = vld [vmem:[%s5178 + $0xc] sm:$0xf]
        %v5183 = vld [vmem:[%s5178 + $0x10] sm:$0xf]
        %v5184 = vld [vmem:[%s5178 + $0x14] sm:$0xf]
        %v5185 = vld [vmem:[%s5178 + $0x18] sm:$0xf]
        %v5186 = vld [vmem:[%s5178 + $0x1c] sm:$0xf]
        %v5187 = vld [vmem:[%s5178 + $0x20] sm:$0xf]
        %v5188 = vld [vmem:[%s5178 + $0x24] sm:$0xf]
        %v5189 = vld [vmem:[%s5178 + $0x28] sm:$0xf]
        %v5190 = vld [vmem:[%s5178 + $0x2c] sm:$0xf]
        %v5191 = vld [vmem:[%s5178 + $0x30] sm:$0xf]
        %v5192 = vld [vmem:[%s5178 + $0x34] sm:$0xf]
        %v5193 = vld [vmem:[%s5178 + $0x38] sm:$0xf]
        %v5194 = vld [vmem:[%s5178 + $0x3c] sm:$0xf]
        %v5195 = vunpack.c.l.b16 %v4999
        %v5196 = vunpack.c.l.b16 %v5009
        %v5197 = vunpack.c.l.b16 %v5023
        %v5198 = vunpack.c.l.b16 %v5033
        %v5199 = vunpack.c.l.b16 %v5047
        %v5200 = vunpack.c.l.b16 %v5057
        %v5201 = vunpack.c.l.b16 %v5071
        %v5202 = vunpack.c.l.b16 %v5081
        %v5203 = vunpack.c.l.b16 %v5095
        %v5204 = vunpack.c.l.b16 %v5105
        %v5205 = vunpack.c.l.b16 %v5119
        %v5206 = vunpack.c.l.b16 %v5129
        %v5207 = vunpack.c.l.b16 %v5143
        %v5208 = vunpack.c.l.b16 %v5153
        %v5209 = vunpack.c.l.b16 %v5167
        %v5210 = vunpack.c.l.b16 %v5177
        %v5211 = vpack.c.b16 %v5196, %v5195
        %v5212 = vpack.c.b16 %v5198, %v5197
        %v5213 = vpack.c.b16 %v5200, %v5199
        %v5214 = vpack.c.b16 %v5202, %v5201
        %v5215 = vpack.c.b16 %v5204, %v5203
        %v5216 = vpack.c.b16 %v5206, %v5205
        %v5217 = vpack.c.b16 %v5208, %v5207
        %v5218 = vpack.c.b16 %v5210, %v5209
        %v5243 = vunpack.c.l.b16 %v5179
        %v5244 = vunpack.c.l.b16 %v5180
        %v5245 = vunpack.c.l.b16 %v5181
        %v5246 = vunpack.c.l.b16 %v5182
        %v5247 = vunpack.c.l.b16 %v5183
        %v5248 = vunpack.c.l.b16 %v5184
        %v5249 = vunpack.c.l.b16 %v5185
        %v5250 = vunpack.c.l.b16 %v5186
        %v5251 = vunpack.c.l.b16 %v5187
        %v5252 = vunpack.c.l.b16 %v5188
        %v5253 = vunpack.c.l.b16 %v5189
        %v5254 = vunpack.c.l.b16 %v5190
        %v5255 = vunpack.c.l.b16 %v5191
        %v5256 = vunpack.c.l.b16 %v5192
        %v5257 = vunpack.c.l.b16 %v5193
        %v5258 = vunpack.c.l.b16 %v5194
        %v5259 = vpack.c.b16 %v5244, %v5243
        %v5260 = vpack.c.b16 %v5246, %v5245
        %v5261 = vpack.c.b16 %v5248, %v5247
        %v5262 = vpack.c.b16 %v5250, %v5249
        %v5263 = vpack.c.b16 %v5252, %v5251
        %v5264 = vpack.c.b16 %v5254, %v5253
        %v5265 = vpack.c.b16 %v5256, %v5255
        %v5266 = vpack.c.b16 %v5258, %v5257
        %5275 = vmatprep.subr.bf16.mxu0 0
        %5276 = vmatpush1.bf16.msra.mxu0 %v5266
        %5277 = vmatprep.subr.bf16.mxu0 0
        %5278 = vmatpush1.bf16.msra.mxu0 %v5265
        %5279 = vmatprep.subr.bf16.mxu0 0
        %5280 = vmatpush1.bf16.msra.mxu0 %v5264
        %5281 = vmatprep.subr.bf16.mxu0 0
        %5282 = vmatpush1.bf16.msra.mxu0 %v5263
        %5283 = vmatprep.subr.bf16.mxu0 0
        %5284 = vmatpush1.bf16.msra.mxu0 %v5262
        %5285 = vmatprep.subr.bf16.mxu0 0
        %5286 = vmatpush1.bf16.msra.mxu0 %v5261
        %5287 = vmatprep.subr.bf16.mxu0 0
        %5288 = vmatpush1.bf16.msra.mxu0 %v5260
        %5289 = vmatprep.subr.bf16.mxu0 0
        %5290 = vmatpush1.bf16.msra.mxu0 %v5259
        %5291 = vmatprep.subr.bf16.mxu0 0
        %5292 = vmatpush2.bf16.msra.mxu0 0
        %5293 = vmatprep.subr.bf16.mxu0 0
        %5294 = vmatpush2.bf16.msra.mxu0 0
        %5295 = vmatprep.subr.bf16.mxu0 0
        %5296 = vmatpush2.bf16.msra.mxu0 0
        %5297 = vmatprep.subr.bf16.mxu0 0
        %5298 = vmatpush2.bf16.msra.mxu0 0
        %5299 = vmatprep.subr.bf16.mxu0 0
        %5300 = vmatpush2.bf16.msra.mxu0 0
        %5301 = vmatprep.subr.bf16.mxu0 0
        %5302 = vmatpush2.bf16.msra.mxu0 0
        %5303 = vmatprep.subr.bf16.mxu0 0
        %5304 = vmatpush2.bf16.msra.mxu0 0
        %5305 = vmatprep.subr.bf16.mxu0 0
        %5306 = vmatpush2.bf16.msra.mxu0 0
        %5307 = vmatprep.mubr.bf16.mxu0 0
        %5308 = vmatmul.mubr.bf16.gmra.mxu0 %v5211
        %v5309 = vpop.f32.mrf.mxu0
        %v5310 = vadd.f32 0.0, %v5309
        %v5311 = vpop.f32.mrf.mxu0
        %v5312 = vpop.f32.mrf.mxu0
        %v5313 = vadd.f32 0.0, %v5312
        %v5314 = vpop.f32.mrf.mxu0
        %5315 = vmatprep.mubr.bf16.mxu0 0
        %5316 = vmatmul.mubr.bf16.gmra.mxu0 %v5212
        %v5317 = vpop.f32.mrf.mxu0
        %v5318 = vadd.f32 0.0, %v5317
        %v5319 = vpop.f32.mrf.mxu0
        %v5320 = vpop.f32.mrf.mxu0
        %v5321 = vadd.f32 0.0, %v5320
        %v5322 = vpop.f32.mrf.mxu0
        %5323 = vmatprep.mubr.bf16.mxu0 0
        %5324 = vmatmul.mubr.bf16.gmra.mxu0 %v5213
        %v5325 = vpop.f32.mrf.mxu0
        %v5326 = vadd.f32 0.0, %v5325
        %v5327 = vpop.f32.mrf.mxu0
        %v5328 = vpop.f32.mrf.mxu0
        %v5329 = vadd.f32 0.0, %v5328
        %v5330 = vpop.f32.mrf.mxu0
        %5331 = vmatprep.mubr.bf16.mxu0 0
        %5332 = vmatmul.mubr.bf16.gmra.mxu0 %v5214
        %v5333 = vpop.f32.mrf.mxu0
        %v5334 = vadd.f32 0.0, %v5333
        %v5335 = vpop.f32.mrf.mxu0
        %v5336 = vpop.f32.mrf.mxu0
        %v5337 = vadd.f32 0.0, %v5336
        %v5338 = vpop.f32.mrf.mxu0
        %5339 = vmatprep.mubr.bf16.mxu0 0
        %5340 = vmatmul.mubr.bf16.gmra.mxu0 %v5215
        %v5341 = vpop.f32.mrf.mxu0
        %v5342 = vadd.f32 0.0, %v5341
        %v5343 = vpop.f32.mrf.mxu0
        %v5344 = vpop.f32.mrf.mxu0
        %v5345 = vadd.f32 0.0, %v5344
        %v5346 = vpop.f32.mrf.mxu0
        %5347 = vmatprep.mubr.bf16.mxu0 0
        %5348 = vmatmul.mubr.bf16.gmra.mxu0 %v5216
        %v5349 = vpop.f32.mrf.mxu0
        %v5350 = vadd.f32 0.0, %v5349
        %v5351 = vpop.f32.mrf.mxu0
        %v5352 = vpop.f32.mrf.mxu0
        %v5353 = vadd.f32 0.0, %v5352
        %v5354 = vpop.f32.mrf.mxu0
        %5355 = vmatprep.mubr.bf16.mxu0 0
        %5356 = vmatmul.mubr.bf16.gmra.mxu0 %v5217
        %v5357 = vpop.f32.mrf.mxu0
        %v5358 = vadd.f32 0.0, %v5357
        %v5359 = vpop.f32.mrf.mxu0
        %v5360 = vpop.f32.mrf.mxu0
        %v5361 = vadd.f32 0.0, %v5360
        %v5362 = vpop.f32.mrf.mxu0
        %5363 = vmatprep.mubr.bf16.mxu0 0
        %5364 = vmatmul.mubr.bf16.gmra.mxu0 %v5218
        %v5365 = vpop.f32.mrf.mxu0
        %v5366 = vadd.f32 0.0, %v5365
        %v5367 = vpop.f32.mrf.mxu0
        %v5368 = vpop.f32.mrf.mxu0
        %v5369 = vadd.f32 0.0, %v5368
        %v5370 = vpop.f32.mrf.mxu0
        %5371 = vdwg.mxu0
        %v5372 = vadd.f32 %v4946, %v5310
        %v5373 = vadd.f32 %v4947, %v5313
        %v5374 = vadd.f32 %v4948, %v5318
        %v5375 = vadd.f32 %v4949, %v5321
        %v5376 = vadd.f32 %v4950, %v5326
        %v5377 = vadd.f32 %v4951, %v5329
        %v5378 = vadd.f32 %v4952, %v5334
        %v5379 = vadd.f32 %v4953, %v5337
        %v5380 = vadd.f32 %v4954, %v5342
        %v5381 = vadd.f32 %v4955, %v5345
        %v5382 = vadd.f32 %v4956, %v5350
        %v5383 = vadd.f32 %v4957, %v5353
        %v5384 = vadd.f32 %v4958, %v5358
        %v5385 = vadd.f32 %v4959, %v5361
        %v5386 = vadd.f32 %v4960, %v5366
        %v5387 = vadd.f32 %v4961, %v5369
        %v5388 = vld [vmem:[%s4719] sm:$0xe]
        %v5389 = vld [vmem:[%s4719 + $0xc] sm:$0xe]
        %v5390 = vld [vmem:[%s4719 + $0x18] sm:$0xe]
        %v5391 = vld [vmem:[%s4719 + $0x24] sm:$0xe]
        %v5392 = vld [vmem:[%s4719 + $0x30] sm:$0xe]
        %v5393 = vld [vmem:[%s4719 + $0x3c] sm:$0xe]
        %v5394 = vld [vmem:[%s4719 + $0x48] sm:$0xe]
        %v5395 = vld [vmem:[%s4719 + $0x54] sm:$0xe]
        %v5420 = vrot.slane %v5388, 5
        %v5421 = vrot.slane %v5420, 4
        %v5422 = vrot.slane %v4963, 5
        %v5423 = vsel %vm899, %v5421, %v5422
        %v5424 = vrot.slane %v5422, 4
        %v5425 = vrot.slane %v4964, 5
        %v5426 = vsel %vm899, %v5424, %v5425
        %v5427 = vrot.slane %v5389, 5
        %v5428 = vrot.slane %v5427, 4
        %v5429 = vrot.slane %v4966, 5
        %v5430 = vsel %vm899, %v5428, %v5429
        %v5431 = vrot.slane %v5429, 4
        %v5432 = vrot.slane %v4967, 5
        %v5433 = vsel %vm899, %v5431, %v5432
        %v5434 = vrot.slane %v5390, 5
        %v5435 = vrot.slane %v5434, 4
        %v5436 = vrot.slane %v4969, 5
        %v5437 = vsel %vm899, %v5435, %v5436
        %v5438 = vrot.slane %v5436, 4
        %v5439 = vrot.slane %v4970, 5
        %v5440 = vsel %vm899, %v5438, %v5439
        %v5441 = vrot.slane %v5391, 5
        %v5442 = vrot.slane %v5441, 4
        %v5443 = vrot.slane %v4972, 5
        %v5444 = vsel %vm899, %v5442, %v5443
        %v5445 = vrot.slane %v5443, 4
        %v5446 = vrot.slane %v4973, 5
        %v5447 = vsel %vm899, %v5445, %v5446
        %v5448 = vrot.slane %v5392, 5
        %v5449 = vrot.slane %v5448, 4
        %v5450 = vrot.slane %v4975, 5
        %v5451 = vsel %vm899, %v5449, %v5450
        %v5452 = vrot.slane %v5450, 4
        %v5453 = vrot.slane %v4976, 5
        %v5454 = vsel %vm899, %v5452, %v5453
        %v5455 = vrot.slane %v5393, 5
        %v5456 = vrot.slane %v5455, 4
        %v5457 = vrot.slane %v4978, 5
        %v5458 = vsel %vm899, %v5456, %v5457
        %v5459 = vrot.slane %v5457, 4
        %v5460 = vrot.slane %v4979, 5
        %v5461 = vsel %vm899, %v5459, %v5460
        %v5462 = vrot.slane %v5394, 5
        %v5463 = vrot.slane %v5462, 4
        %v5464 = vrot.slane %v4981, 5
        %v5465 = vsel %vm899, %v5463, %v5464
        %v5466 = vrot.slane %v5464, 4
        %v5467 = vrot.slane %v4982, 5
        %v5468 = vsel %vm899, %v5466, %v5467
        %v5469 = vrot.slane %v5395, 5
        %v5470 = vrot.slane %v5469, 4
        %v5471 = vrot.slane %v4984, 5
        %v5472 = vsel %vm899, %v5470, %v5471
        %v5473 = vrot.slane %v5471, 4
        %v5474 = vrot.slane %v4985, 5
        %v5475 = vsel %vm899, %v5473, %v5474
        %s5476 = scalar_lea.vmem %s2, 320
        %v5477 = vld [vmem:[%s5476] sm:$0xf]
        %v5478 = vld [vmem:[%s5476 + $0x4] sm:$0xf]
        %v5479 = vld [vmem:[%s5476 + $0x8] sm:$0xf]
        %v5480 = vld [vmem:[%s5476 + $0xc] sm:$0xf]
        %v5481 = vld [vmem:[%s5476 + $0x10] sm:$0xf]
        %v5482 = vld [vmem:[%s5476 + $0x14] sm:$0xf]
        %v5483 = vld [vmem:[%s5476 + $0x18] sm:$0xf]
        %v5484 = vld [vmem:[%s5476 + $0x1c] sm:$0xf]
        %v5485 = vld [vmem:[%s5476 + $0x20] sm:$0xf]
        %v5486 = vld [vmem:[%s5476 + $0x24] sm:$0xf]
        %v5487 = vld [vmem:[%s5476 + $0x28] sm:$0xf]
        %v5488 = vld [vmem:[%s5476 + $0x2c] sm:$0xf]
        %v5489 = vld [vmem:[%s5476 + $0x30] sm:$0xf]
        %v5490 = vld [vmem:[%s5476 + $0x34] sm:$0xf]
        %v5491 = vld [vmem:[%s5476 + $0x38] sm:$0xf]
        %v5492 = vld [vmem:[%s5476 + $0x3c] sm:$0xf]
        %v5493 = vunpack.c.l.b16 %v5423
        %v5494 = vunpack.c.l.b16 %v5426
        %v5495 = vunpack.c.l.b16 %v5430
        %v5496 = vunpack.c.l.b16 %v5433
        %v5497 = vunpack.c.l.b16 %v5437
        %v5498 = vunpack.c.l.b16 %v5440
        %v5499 = vunpack.c.l.b16 %v5444
        %v5500 = vunpack.c.l.b16 %v5447
        %v5501 = vunpack.c.l.b16 %v5451
        %v5502 = vunpack.c.l.b16 %v5454
        %v5503 = vunpack.c.l.b16 %v5458
        %v5504 = vunpack.c.l.b16 %v5461
        %v5505 = vunpack.c.l.b16 %v5465
        %v5506 = vunpack.c.l.b16 %v5468
        %v5507 = vunpack.c.l.b16 %v5472
        %v5508 = vunpack.c.l.b16 %v5475
        %v5509 = vpack.c.b16 %v5494, %v5493
        %v5510 = vpack.c.b16 %v5496, %v5495
        %v5511 = vpack.c.b16 %v5498, %v5497
        %v5512 = vpack.c.b16 %v5500, %v5499
        %v5513 = vpack.c.b16 %v5502, %v5501
        %v5514 = vpack.c.b16 %v5504, %v5503
        %v5515 = vpack.c.b16 %v5506, %v5505
        %v5516 = vpack.c.b16 %v5508, %v5507
        %v5541 = vunpack.c.l.b16 %v5477
        %v5542 = vunpack.c.l.b16 %v5478
        %v5543 = vunpack.c.l.b16 %v5479
        %v5544 = vunpack.c.l.b16 %v5480
        %v5545 = vunpack.c.l.b16 %v5481
        %v5546 = vunpack.c.l.b16 %v5482
        %v5547 = vunpack.c.l.b16 %v5483
        %v5548 = vunpack.c.l.b16 %v5484
        %v5549 = vunpack.c.l.b16 %v5485
        %v5550 = vunpack.c.l.b16 %v5486
        %v5551 = vunpack.c.l.b16 %v5487
        %v5552 = vunpack.c.l.b16 %v5488
        %v5553 = vunpack.c.l.b16 %v5489
        %v5554 = vunpack.c.l.b16 %v5490
        %v5555 = vunpack.c.l.b16 %v5491
        %v5556 = vunpack.c.l.b16 %v5492
        %v5557 = vpack.c.b16 %v5542, %v5541
        %v5558 = vpack.c.b16 %v5544, %v5543
        %v5559 = vpack.c.b16 %v5546, %v5545
        %v5560 = vpack.c.b16 %v5548, %v5547
        %v5561 = vpack.c.b16 %v5550, %v5549
        %v5562 = vpack.c.b16 %v5552, %v5551
        %v5563 = vpack.c.b16 %v5554, %v5553
        %v5564 = vpack.c.b16 %v5556, %v5555
        %5573 = vmatprep.subr.bf16.mxu0 0
        %5574 = vmatpush1.bf16.msra.mxu0 %v5564
        %5575 = vmatprep.subr.bf16.mxu0 0
        %5576 = vmatpush1.bf16.msra.mxu0 %v5563
        %5577 = vmatprep.subr.bf16.mxu0 0
        %5578 = vmatpush1.bf16.msra.mxu0 %v5562
        %5579 = vmatprep.subr.bf16.mxu0 0
        %5580 = vmatpush1.bf16.msra.mxu0 %v5561
        %5581 = vmatprep.subr.bf16.mxu0 0
        %5582 = vmatpush1.bf16.msra.mxu0 %v5560
        %5583 = vmatprep.subr.bf16.mxu0 0
        %5584 = vmatpush1.bf16.msra.mxu0 %v5559
        %5585 = vmatprep.subr.bf16.mxu0 0
        %5586 = vmatpush1.bf16.msra.mxu0 %v5558
        %5587 = vmatprep.subr.bf16.mxu0 0
        %5588 = vmatpush1.bf16.msra.mxu0 %v5557
        %5589 = vmatprep.subr.bf16.mxu0 0
        %5590 = vmatpush2.bf16.msra.mxu0 0
        %5591 = vmatprep.subr.bf16.mxu0 0
        %5592 = vmatpush2.bf16.msra.mxu0 0
        %5593 = vmatprep.subr.bf16.mxu0 0
        %5594 = vmatpush2.bf16.msra.mxu0 0
        %5595 = vmatprep.subr.bf16.mxu0 0
        %5596 = vmatpush2.bf16.msra.mxu0 0
        %5597 = vmatprep.subr.bf16.mxu0 0
        %5598 = vmatpush2.bf16.msra.mxu0 0
        %5599 = vmatprep.subr.bf16.mxu0 0
        %5600 = vmatpush2.bf16.msra.mxu0 0
        %5601 = vmatprep.subr.bf16.mxu0 0
        %5602 = vmatpush2.bf16.msra.mxu0 0
        %5603 = vmatprep.subr.bf16.mxu0 0
        %5604 = vmatpush2.bf16.msra.mxu0 0
        %5605 = vmatprep.mubr.bf16.mxu0 0
        %5606 = vmatmul.mubr.bf16.gmra.mxu0 %v5509
        %v5607 = vpop.f32.mrf.mxu0
        %v5608 = vadd.f32 0.0, %v5607
        %v5609 = vpop.f32.mrf.mxu0
        %v5610 = vpop.f32.mrf.mxu0
        %v5611 = vadd.f32 0.0, %v5610
        %v5612 = vpop.f32.mrf.mxu0
        %5613 = vmatprep.mubr.bf16.mxu0 0
        %5614 = vmatmul.mubr.bf16.gmra.mxu0 %v5510
        %v5615 = vpop.f32.mrf.mxu0
        %v5616 = vadd.f32 0.0, %v5615
        %v5617 = vpop.f32.mrf.mxu0
        %v5618 = vpop.f32.mrf.mxu0
        %v5619 = vadd.f32 0.0, %v5618
        %v5620 = vpop.f32.mrf.mxu0
        %5621 = vmatprep.mubr.bf16.mxu0 0
        %5622 = vmatmul.mubr.bf16.gmra.mxu0 %v5511
        %v5623 = vpop.f32.mrf.mxu0
        %v5624 = vadd.f32 0.0, %v5623
        %v5625 = vpop.f32.mrf.mxu0
        %v5626 = vpop.f32.mrf.mxu0
        %v5627 = vadd.f32 0.0, %v5626
        %v5628 = vpop.f32.mrf.mxu0
        %5629 = vmatprep.mubr.bf16.mxu0 0
        %5630 = vmatmul.mubr.bf16.gmra.mxu0 %v5512
        %v5631 = vpop.f32.mrf.mxu0
        %v5632 = vadd.f32 0.0, %v5631
        %v5633 = vpop.f32.mrf.mxu0
        %v5634 = vpop.f32.mrf.mxu0
        %v5635 = vadd.f32 0.0, %v5634
        %v5636 = vpop.f32.mrf.mxu0
        %5637 = vmatprep.mubr.bf16.mxu0 0
        %5638 = vmatmul.mubr.bf16.gmra.mxu0 %v5513
        %v5639 = vpop.f32.mrf.mxu0
        %v5640 = vadd.f32 0.0, %v5639
        %v5641 = vpop.f32.mrf.mxu0
        %v5642 = vpop.f32.mrf.mxu0
        %v5643 = vadd.f32 0.0, %v5642
        %v5644 = vpop.f32.mrf.mxu0
        %5645 = vmatprep.mubr.bf16.mxu0 0
        %5646 = vmatmul.mubr.bf16.gmra.mxu0 %v5514
        %v5647 = vpop.f32.mrf.mxu0
        %v5648 = vadd.f32 0.0, %v5647
        %v5649 = vpop.f32.mrf.mxu0
        %v5650 = vpop.f32.mrf.mxu0
        %v5651 = vadd.f32 0.0, %v5650
        %v5652 = vpop.f32.mrf.mxu0
        %5653 = vmatprep.mubr.bf16.mxu0 0
        %5654 = vmatmul.mubr.bf16.gmra.mxu0 %v5515
        %v5655 = vpop.f32.mrf.mxu0
        %v5656 = vadd.f32 0.0, %v5655
        %v5657 = vpop.f32.mrf.mxu0
        %v5658 = vpop.f32.mrf.mxu0
        %v5659 = vadd.f32 0.0, %v5658
        %v5660 = vpop.f32.mrf.mxu0
        %5661 = vmatprep.mubr.bf16.mxu0 0
        %5662 = vmatmul.mubr.bf16.gmra.mxu0 %v5516
        %v5663 = vpop.f32.mrf.mxu0
        %v5664 = vadd.f32 0.0, %v5663
        %v5665 = vpop.f32.mrf.mxu0
        %v5666 = vpop.f32.mrf.mxu0
        %v5667 = vadd.f32 0.0, %v5666
        %v5668 = vpop.f32.mrf.mxu0
        %5669 = vdwg.mxu0
        %v5670 = vadd.f32 %v5372, %v5608
        %v5671 = vadd.f32 %v5373, %v5611
        %v5672 = vadd.f32 %v5374, %v5616
        %v5673 = vadd.f32 %v5375, %v5619
        %v5674 = vadd.f32 %v5376, %v5624
        %v5675 = vadd.f32 %v5377, %v5627
        %v5676 = vadd.f32 %v5378, %v5632
        %v5677 = vadd.f32 %v5379, %v5635
        %v5678 = vadd.f32 %v5380, %v5640
        %v5679 = vadd.f32 %v5381, %v5643
        %v5680 = vadd.f32 %v5382, %v5648
        %v5681 = vadd.f32 %v5383, %v5651
        %v5682 = vadd.f32 %v5384, %v5656
        %v5683 = vadd.f32 %v5385, %v5659
        %v5684 = vadd.f32 %v5386, %v5664
        %v5685 = vadd.f32 %v5387, %v5667
        %s5686 = scalar_lea.vmem [#allocation2], 24
        %v5687 = vld [vmem:[%s5686] sm:$0xf]
        %v5688 = vld [vmem:[%s5686 + $0x4] sm:$0xf]
        %v5689 = vld [vmem:[%s5686 + $0xc] sm:$0xf]
        %v5690 = vld [vmem:[%s5686 + $0x10] sm:$0xf]
        %v5691 = vld [vmem:[%s5686 + $0x18] sm:$0xf]
        %v5692 = vld [vmem:[%s5686 + $0x1c] sm:$0xf]
        %v5693 = vld [vmem:[%s5686 + $0x24] sm:$0xf]
        %v5694 = vld [vmem:[%s5686 + $0x28] sm:$0xf]
        %v5695 = vld [vmem:[%s5686 + $0x30] sm:$0xf]
        %v5696 = vld [vmem:[%s5686 + $0x34] sm:$0xf]
        %v5697 = vld [vmem:[%s5686 + $0x3c] sm:$0xf]
        %v5698 = vld [vmem:[%s5686 + $0x40] sm:$0xf]
        %v5699 = vld [vmem:[%s5686 + $0x48] sm:$0xf]
        %v5700 = vld [vmem:[%s5686 + $0x4c] sm:$0xf]
        %v5701 = vld [vmem:[%s5686 + $0x54] sm:$0xf]
        %v5702 = vld [vmem:[%s5686 + $0x58] sm:$0xf]
        %s5703 = scalar_lea.vmem %s2, 384
        %v5704 = vld [vmem:[%s5703] sm:$0xf]
        %v5705 = vld [vmem:[%s5703 + $0x4] sm:$0xf]
        %v5706 = vld [vmem:[%s5703 + $0x8] sm:$0xf]
        %v5707 = vld [vmem:[%s5703 + $0xc] sm:$0xf]
        %v5708 = vld [vmem:[%s5703 + $0x10] sm:$0xf]
        %v5709 = vld [vmem:[%s5703 + $0x14] sm:$0xf]
        %v5710 = vld [vmem:[%s5703 + $0x18] sm:$0xf]
        %v5711 = vld [vmem:[%s5703 + $0x1c] sm:$0xf]
        %v5712 = vld [vmem:[%s5703 + $0x20] sm:$0xf]
        %v5713 = vld [vmem:[%s5703 + $0x24] sm:$0xf]
        %v5714 = vld [vmem:[%s5703 + $0x28] sm:$0xf]
        %v5715 = vld [vmem:[%s5703 + $0x2c] sm:$0xf]
        %v5716 = vld [vmem:[%s5703 + $0x30] sm:$0xf]
        %v5717 = vld [vmem:[%s5703 + $0x34] sm:$0xf]
        %v5718 = vld [vmem:[%s5703 + $0x38] sm:$0xf]
        %v5719 = vld [vmem:[%s5703 + $0x3c] sm:$0xf]
        %v5736 = vunpack.c.l.b16 %v5687
        %v5737 = vunpack.c.l.b16 %v5688
        %v5738 = vunpack.c.l.b16 %v5689
        %v5739 = vunpack.c.l.b16 %v5690
        %v5740 = vunpack.c.l.b16 %v5691
        %v5741 = vunpack.c.l.b16 %v5692
        %v5742 = vunpack.c.l.b16 %v5693
        %v5743 = vunpack.c.l.b16 %v5694
        %v5744 = vunpack.c.l.b16 %v5695
        %v5745 = vunpack.c.l.b16 %v5696
        %v5746 = vunpack.c.l.b16 %v5697
        %v5747 = vunpack.c.l.b16 %v5698
        %v5748 = vunpack.c.l.b16 %v5699
        %v5749 = vunpack.c.l.b16 %v5700
        %v5750 = vunpack.c.l.b16 %v5701
        %v5751 = vunpack.c.l.b16 %v5702
        %v5752 = vpack.c.b16 %v5737, %v5736
        %v5753 = vpack.c.b16 %v5739, %v5738
        %v5754 = vpack.c.b16 %v5741, %v5740
        %v5755 = vpack.c.b16 %v5743, %v5742
        %v5756 = vpack.c.b16 %v5745, %v5744
        %v5757 = vpack.c.b16 %v5747, %v5746
        %v5758 = vpack.c.b16 %v5749, %v5748
        %v5759 = vpack.c.b16 %v5751, %v5750
        %v5784 = vunpack.c.l.b16 %v5704
        %v5785 = vunpack.c.l.b16 %v5705
        %v5786 = vunpack.c.l.b16 %v5706
        %v5787 = vunpack.c.l.b16 %v5707
        %v5788 = vunpack.c.l.b16 %v5708
        %v5789 = vunpack.c.l.b16 %v5709
        %v5790 = vunpack.c.l.b16 %v5710
        %v5791 = vunpack.c.l.b16 %v5711
        %v5792 = vunpack.c.l.b16 %v5712
        %v5793 = vunpack.c.l.b16 %v5713
        %v5794 = vunpack.c.l.b16 %v5714
        %v5795 = vunpack.c.l.b16 %v5715
        %v5796 = vunpack.c.l.b16 %v5716
        %v5797 = vunpack.c.l.b16 %v5717
        %v5798 = vunpack.c.l.b16 %v5718
        %v5799 = vunpack.c.l.b16 %v5719
        %v5800 = vpack.c.b16 %v5785, %v5784
        %v5801 = vpack.c.b16 %v5787, %v5786
        %v5802 = vpack.c.b16 %v5789, %v5788
        %v5803 = vpack.c.b16 %v5791, %v5790
        %v5804 = vpack.c.b16 %v5793, %v5792
        %v5805 = vpack.c.b16 %v5795, %v5794
        %v5806 = vpack.c.b16 %v5797, %v5796
        %v5807 = vpack.c.b16 %v5799, %v5798
        %5816 = vmatprep.subr.bf16.mxu0 0
        %5817 = vmatpush1.bf16.msra.mxu0 %v5807
        %5818 = vmatprep.subr.bf16.mxu0 0
        %5819 = vmatpush1.bf16.msra.mxu0 %v5806
        %5820 = vmatprep.subr.bf16.mxu0 0
        %5821 = vmatpush1.bf16.msra.mxu0 %v5805
        %5822 = vmatprep.subr.bf16.mxu0 0
        %5823 = vmatpush1.bf16.msra.mxu0 %v5804
        %5824 = vmatprep.subr.bf16.mxu0 0
        %5825 = vmatpush1.bf16.msra.mxu0 %v5803
        %5826 = vmatprep.subr.bf16.mxu0 0
        %5827 = vmatpush1.bf16.msra.mxu0 %v5802
        %5828 = vmatprep.subr.bf16.mxu0 0
        %5829 = vmatpush1.bf16.msra.mxu0 %v5801
        %5830 = vmatprep.subr.bf16.mxu0 0
        %5831 = vmatpush1.bf16.msra.mxu0 %v5800
        %5832 = vmatprep.subr.bf16.mxu0 0
        %5833 = vmatpush2.bf16.msra.mxu0 0
        %5834 = vmatprep.subr.bf16.mxu0 0
        %5835 = vmatpush2.bf16.msra.mxu0 0
        %5836 = vmatprep.subr.bf16.mxu0 0
        %5837 = vmatpush2.bf16.msra.mxu0 0
        %5838 = vmatprep.subr.bf16.mxu0 0
        %5839 = vmatpush2.bf16.msra.mxu0 0
        %5840 = vmatprep.subr.bf16.mxu0 0
        %5841 = vmatpush2.bf16.msra.mxu0 0
        %5842 = vmatprep.subr.bf16.mxu0 0
        %5843 = vmatpush2.bf16.msra.mxu0 0
        %5844 = vmatprep.subr.bf16.mxu0 0
        %5845 = vmatpush2.bf16.msra.mxu0 0
        %5846 = vmatprep.subr.bf16.mxu0 0
        %5847 = vmatpush2.bf16.msra.mxu0 0
        %5848 = vmatprep.mubr.bf16.mxu0 0
        %5849 = vmatmul.mubr.bf16.gmra.mxu0 %v5752
        %v5850 = vpop.f32.mrf.mxu0
        %v5851 = vadd.f32 0.0, %v5850
        %v5852 = vpop.f32.mrf.mxu0
        %v5853 = vpop.f32.mrf.mxu0
        %v5854 = vadd.f32 0.0, %v5853
        %v5855 = vpop.f32.mrf.mxu0
        %5856 = vmatprep.mubr.bf16.mxu0 0
        %5857 = vmatmul.mubr.bf16.gmra.mxu0 %v5753
        %v5858 = vpop.f32.mrf.mxu0
        %v5859 = vadd.f32 0.0, %v5858
        %v5860 = vpop.f32.mrf.mxu0
        %v5861 = vpop.f32.mrf.mxu0
        %v5862 = vadd.f32 0.0, %v5861
        %v5863 = vpop.f32.mrf.mxu0
        %5864 = vmatprep.mubr.bf16.mxu0 0
        %5865 = vmatmul.mubr.bf16.gmra.mxu0 %v5754
        %v5866 = vpop.f32.mrf.mxu0
        %v5867 = vadd.f32 0.0, %v5866
        %v5868 = vpop.f32.mrf.mxu0
        %v5869 = vpop.f32.mrf.mxu0
        %v5870 = vadd.f32 0.0, %v5869
        %v5871 = vpop.f32.mrf.mxu0
        %5872 = vmatprep.mubr.bf16.mxu0 0
        %5873 = vmatmul.mubr.bf16.gmra.mxu0 %v5755
        %v5874 = vpop.f32.mrf.mxu0
        %v5875 = vadd.f32 0.0, %v5874
        %v5876 = vpop.f32.mrf.mxu0
        %v5877 = vpop.f32.mrf.mxu0
        %v5878 = vadd.f32 0.0, %v5877
        %v5879 = vpop.f32.mrf.mxu0
        %5880 = vmatprep.mubr.bf16.mxu0 0
        %5881 = vmatmul.mubr.bf16.gmra.mxu0 %v5756
        %v5882 = vpop.f32.mrf.mxu0
        %v5883 = vadd.f32 0.0, %v5882
        %v5884 = vpop.f32.mrf.mxu0
        %v5885 = vpop.f32.mrf.mxu0
        %v5886 = vadd.f32 0.0, %v5885
        %v5887 = vpop.f32.mrf.mxu0
        %5888 = vmatprep.mubr.bf16.mxu0 0
        %5889 = vmatmul.mubr.bf16.gmra.mxu0 %v5757
        %v5890 = vpop.f32.mrf.mxu0
        %v5891 = vadd.f32 0.0, %v5890
        %v5892 = vpop.f32.mrf.mxu0
        %v5893 = vpop.f32.mrf.mxu0
        %v5894 = vadd.f32 0.0, %v5893
        %v5895 = vpop.f32.mrf.mxu0
        %5896 = vmatprep.mubr.bf16.mxu0 0
        %5897 = vmatmul.mubr.bf16.gmra.mxu0 %v5758
        %v5898 = vpop.f32.mrf.mxu0
        %v5899 = vadd.f32 0.0, %v5898
        %v5900 = vpop.f32.mrf.mxu0
        %v5901 = vpop.f32.mrf.mxu0
        %v5902 = vadd.f32 0.0, %v5901
        %v5903 = vpop.f32.mrf.mxu0
        %5904 = vmatprep.mubr.bf16.mxu0 0
        %5905 = vmatmul.mubr.bf16.gmra.mxu0 %v5759
        %v5906 = vpop.f32.mrf.mxu0
        %v5907 = vadd.f32 0.0, %v5906
        %v5908 = vpop.f32.mrf.mxu0
        %v5909 = vpop.f32.mrf.mxu0
        %v5910 = vadd.f32 0.0, %v5909
        %v5911 = vpop.f32.mrf.mxu0
        %5912 = vdwg.mxu0
        %v5913 = vadd.f32 %v5670, %v5851
        %v5914 = vadd.f32 %v5671, %v5854
        %v5915 = vadd.f32 %v5672, %v5859
        %v5916 = vadd.f32 %v5673, %v5862
        %v5917 = vadd.f32 %v5674, %v5867
        %v5918 = vadd.f32 %v5675, %v5870
        %v5919 = vadd.f32 %v5676, %v5875
        %v5920 = vadd.f32 %v5677, %v5878
        %v5921 = vadd.f32 %v5678, %v5883
        %v5922 = vadd.f32 %v5679, %v5886
        %v5923 = vadd.f32 %v5680, %v5891
        %v5924 = vadd.f32 %v5681, %v5894
        %v5925 = vadd.f32 %v5682, %v5899
        %v5926 = vadd.f32 %v5683, %v5902
        %v5927 = vadd.f32 %v5684, %v5907
        %v5928 = vadd.f32 %v5685, %v5910
        %v5929 = vld [vmem:[%s5686] sm:$0xf]
        %v5930 = vld [vmem:[%s5686 + $0x4] sm:$0xf]
        %v5931 = vld [vmem:[%s5686 + $0x8] sm:$0x1]
        %v5932 = vld [vmem:[%s5686 + $0xc] sm:$0xf]
        %v5933 = vld [vmem:[%s5686 + $0x10] sm:$0xf]
        %v5934 = vld [vmem:[%s5686 + $0x14] sm:$0x1]
        %v5935 = vld [vmem:[%s5686 + $0x18] sm:$0xf]
        %v5936 = vld [vmem:[%s5686 + $0x1c] sm:$0xf]
        %v5937 = vld [vmem:[%s5686 + $0x20] sm:$0x1]
        %v5938 = vld [vmem:[%s5686 + $0x24] sm:$0xf]
        %v5939 = vld [vmem:[%s5686 + $0x28] sm:$0xf]
        %v5940 = vld [vmem:[%s5686 + $0x2c] sm:$0x1]
        %v5941 = vld [vmem:[%s5686 + $0x30] sm:$0xf]
        %v5942 = vld [vmem:[%s5686 + $0x34] sm:$0xf]
        %v5943 = vld [vmem:[%s5686 + $0x38] sm:$0x1]
        %v5944 = vld [vmem:[%s5686 + $0x3c] sm:$0xf]
        %v5945 = vld [vmem:[%s5686 + $0x40] sm:$0xf]
        %v5946 = vld [vmem:[%s5686 + $0x44] sm:$0x1]
        %v5947 = vld [vmem:[%s5686 + $0x48] sm:$0xf]
        %v5948 = vld [vmem:[%s5686 + $0x4c] sm:$0xf]
        %v5949 = vld [vmem:[%s5686 + $0x50] sm:$0x1]
        %v5950 = vld [vmem:[%s5686 + $0x54] sm:$0xf]
        %v5951 = vld [vmem:[%s5686 + $0x58] sm:$0xf]
        %v5952 = vld [vmem:[%s5686 + $0x5c] sm:$0x1]
        %v5954 = vshrl.u32 %v5929, 16
        %v5956 = vrot.slane %v5954, 4
        %v5957 = vshll.u32 %v5929, 16
        %v5959 = vrot.slane %v5957, 5
        %v5960 = vor.u32 %v5956, %v5959
        %v5961 = vrot.slane %v5960, 4
        %v5963 = vshll.u32 %v5930, 16
        %v5965 = vrot.slane %v5963, 5
        %v5966 = vsel %vm250, %v5961, %v5965
        %v5967 = vshrl.u32 %v5930, 16
        %v5969 = vrot.slane %v5967, 4
        %v5970 = vor.u32 %v5969, %v5965
        %v5971 = vrot.slane %v5970, 4
        %v5973 = vshll.u32 %v5931, 16
        %v5975 = vrot.slane %v5973, 5
        %v5976 = vsel %vm250, %v5971, %v5975
        %v5978 = vshrl.u32 %v5932, 16
        %v5980 = vrot.slane %v5978, 4
        %v5981 = vshll.u32 %v5932, 16
        %v5983 = vrot.slane %v5981, 5
        %v5984 = vor.u32 %v5980, %v5983
        %v5985 = vrot.slane %v5984, 4
        %v5987 = vshll.u32 %v5933, 16
        %v5989 = vrot.slane %v5987, 5
        %v5990 = vsel %vm250, %v5985, %v5989
        %v5991 = vshrl.u32 %v5933, 16
        %v5993 = vrot.slane %v5991, 4
        %v5994 = vor.u32 %v5993, %v5989
        %v5995 = vrot.slane %v5994, 4
        %v5997 = vshll.u32 %v5934, 16
        %v5999 = vrot.slane %v5997, 5
        %v6000 = vsel %vm250, %v5995, %v5999
        %v6002 = vshrl.u32 %v5935, 16
        %v6004 = vrot.slane %v6002, 4
        %v6005 = vshll.u32 %v5935, 16
        %v6007 = vrot.slane %v6005, 5
        %v6008 = vor.u32 %v6004, %v6007
        %v6009 = vrot.slane %v6008, 4
        %v6011 = vshll.u32 %v5936, 16
        %v6013 = vrot.slane %v6011, 5
        %v6014 = vsel %vm250, %v6009, %v6013
        %v6015 = vshrl.u32 %v5936, 16
        %v6017 = vrot.slane %v6015, 4
        %v6018 = vor.u32 %v6017, %v6013
        %v6019 = vrot.slane %v6018, 4
        %v6021 = vshll.u32 %v5937, 16
        %v6023 = vrot.slane %v6021, 5
        %v6024 = vsel %vm250, %v6019, %v6023
        %v6026 = vshrl.u32 %v5938, 16
        %v6028 = vrot.slane %v6026, 4
        %v6029 = vshll.u32 %v5938, 16
        %v6031 = vrot.slane %v6029, 5
        %v6032 = vor.u32 %v6028, %v6031
        %v6033 = vrot.slane %v6032, 4
        %v6035 = vshll.u32 %v5939, 16
        %v6037 = vrot.slane %v6035, 5
        %v6038 = vsel %vm250, %v6033, %v6037
        %v6039 = vshrl.u32 %v5939, 16
        %v6041 = vrot.slane %v6039, 4
        %v6042 = vor.u32 %v6041, %v6037
        %v6043 = vrot.slane %v6042, 4
        %v6045 = vshll.u32 %v5940, 16
        %v6047 = vrot.slane %v6045, 5
        %v6048 = vsel %vm250, %v6043, %v6047
        %v6050 = vshrl.u32 %v5941, 16
        %v6052 = vrot.slane %v6050, 4
        %v6053 = vshll.u32 %v5941, 16
        %v6055 = vrot.slane %v6053, 5
        %v6056 = vor.u32 %v6052, %v6055
        %v6057 = vrot.slane %v6056, 4
        %v6059 = vshll.u32 %v5942, 16
        %v6061 = vrot.slane %v6059, 5
        %v6062 = vsel %vm250, %v6057, %v6061
        %v6063 = vshrl.u32 %v5942, 16
        %v6065 = vrot.slane %v6063, 4
        %v6066 = vor.u32 %v6065, %v6061
        %v6067 = vrot.slane %v6066, 4
        %v6069 = vshll.u32 %v5943, 16
        %v6071 = vrot.slane %v6069, 5
        %v6072 = vsel %vm250, %v6067, %v6071
        %v6074 = vshrl.u32 %v5944, 16
        %v6076 = vrot.slane %v6074, 4
        %v6077 = vshll.u32 %v5944, 16
        %v6079 = vrot.slane %v6077, 5
        %v6080 = vor.u32 %v6076, %v6079
        %v6081 = vrot.slane %v6080, 4
        %v6083 = vshll.u32 %v5945, 16
        %v6085 = vrot.slane %v6083, 5
        %v6086 = vsel %vm250, %v6081, %v6085
        %v6087 = vshrl.u32 %v5945, 16
        %v6089 = vrot.slane %v6087, 4
        %v6090 = vor.u32 %v6089, %v6085
        %v6091 = vrot.slane %v6090, 4
        %v6093 = vshll.u32 %v5946, 16
        %v6095 = vrot.slane %v6093, 5
        %v6096 = vsel %vm250, %v6091, %v6095
        %v6098 = vshrl.u32 %v5947, 16
        %v6100 = vrot.slane %v6098, 4
        %v6101 = vshll.u32 %v5947, 16
        %v6103 = vrot.slane %v6101, 5
        %v6104 = vor.u32 %v6100, %v6103
        %v6105 = vrot.slane %v6104, 4
        %v6107 = vshll.u32 %v5948, 16
        %v6109 = vrot.slane %v6107, 5
        %v6110 = vsel %vm250, %v6105, %v6109
        %v6111 = vshrl.u32 %v5948, 16
        %v6113 = vrot.slane %v6111, 4
        %v6114 = vor.u32 %v6113, %v6109
        %v6115 = vrot.slane %v6114, 4
        %v6117 = vshll.u32 %v5949, 16
        %v6119 = vrot.slane %v6117, 5
        %v6120 = vsel %vm250, %v6115, %v6119
        %v6122 = vshrl.u32 %v5950, 16
        %v6124 = vrot.slane %v6122, 4
        %v6125 = vshll.u32 %v5950, 16
        %v6127 = vrot.slane %v6125, 5
        %v6128 = vor.u32 %v6124, %v6127
        %v6129 = vrot.slane %v6128, 4
        %v6131 = vshll.u32 %v5951, 16
        %v6133 = vrot.slane %v6131, 5
        %v6134 = vsel %vm250, %v6129, %v6133
        %v6135 = vshrl.u32 %v5951, 16
        %v6137 = vrot.slane %v6135, 4
        %v6138 = vor.u32 %v6137, %v6133
        %v6139 = vrot.slane %v6138, 4
        %v6141 = vshll.u32 %v5952, 16
        %v6143 = vrot.slane %v6141, 5
        %v6144 = vsel %vm250, %v6139, %v6143
        %s6145 = scalar_lea.vmem %s2, 448
        %v6146 = vld [vmem:[%s6145] sm:$0xf]
        %v6147 = vld [vmem:[%s6145 + $0x4] sm:$0xf]
        %v6148 = vld [vmem:[%s6145 + $0x8] sm:$0xf]
        %v6149 = vld [vmem:[%s6145 + $0xc] sm:$0xf]
        %v6150 = vld [vmem:[%s6145 + $0x10] sm:$0xf]
        %v6151 = vld [vmem:[%s6145 + $0x14] sm:$0xf]
        %v6152 = vld [vmem:[%s6145 + $0x18] sm:$0xf]
        %v6153 = vld [vmem:[%s6145 + $0x1c] sm:$0xf]
        %v6154 = vld [vmem:[%s6145 + $0x20] sm:$0xf]
        %v6155 = vld [vmem:[%s6145 + $0x24] sm:$0xf]
        %v6156 = vld [vmem:[%s6145 + $0x28] sm:$0xf]
        %v6157 = vld [vmem:[%s6145 + $0x2c] sm:$0xf]
        %v6158 = vld [vmem:[%s6145 + $0x30] sm:$0xf]
        %v6159 = vld [vmem:[%s6145 + $0x34] sm:$0xf]
        %v6160 = vld [vmem:[%s6145 + $0x38] sm:$0xf]
        %v6161 = vld [vmem:[%s6145 + $0x3c] sm:$0xf]
        %v6162 = vunpack.c.l.b16 %v5966
        %v6163 = vunpack.c.l.b16 %v5976
        %v6164 = vunpack.c.l.b16 %v5990
        %v6165 = vunpack.c.l.b16 %v6000
        %v6166 = vunpack.c.l.b16 %v6014
        %v6167 = vunpack.c.l.b16 %v6024
        %v6168 = vunpack.c.l.b16 %v6038
        %v6169 = vunpack.c.l.b16 %v6048
        %v6170 = vunpack.c.l.b16 %v6062
        %v6171 = vunpack.c.l.b16 %v6072
        %v6172 = vunpack.c.l.b16 %v6086
        %v6173 = vunpack.c.l.b16 %v6096
        %v6174 = vunpack.c.l.b16 %v6110
        %v6175 = vunpack.c.l.b16 %v6120
        %v6176 = vunpack.c.l.b16 %v6134
        %v6177 = vunpack.c.l.b16 %v6144
        %v6178 = vpack.c.b16 %v6163, %v6162
        %v6179 = vpack.c.b16 %v6165, %v6164
        %v6180 = vpack.c.b16 %v6167, %v6166
        %v6181 = vpack.c.b16 %v6169, %v6168
        %v6182 = vpack.c.b16 %v6171, %v6170
        %v6183 = vpack.c.b16 %v6173, %v6172
        %v6184 = vpack.c.b16 %v6175, %v6174
        %v6185 = vpack.c.b16 %v6177, %v6176
        %v6210 = vunpack.c.l.b16 %v6146
        %v6211 = vunpack.c.l.b16 %v6147
        %v6212 = vunpack.c.l.b16 %v6148
        %v6213 = vunpack.c.l.b16 %v6149
        %v6214 = vunpack.c.l.b16 %v6150
        %v6215 = vunpack.c.l.b16 %v6151
        %v6216 = vunpack.c.l.b16 %v6152
        %v6217 = vunpack.c.l.b16 %v6153
        %v6218 = vunpack.c.l.b16 %v6154
        %v6219 = vunpack.c.l.b16 %v6155
        %v6220 = vunpack.c.l.b16 %v6156
        %v6221 = vunpack.c.l.b16 %v6157
        %v6222 = vunpack.c.l.b16 %v6158
        %v6223 = vunpack.c.l.b16 %v6159
        %v6224 = vunpack.c.l.b16 %v6160
        %v6225 = vunpack.c.l.b16 %v6161
        %v6226 = vpack.c.b16 %v6211, %v6210
        %v6227 = vpack.c.b16 %v6213, %v6212
        %v6228 = vpack.c.b16 %v6215, %v6214
        %v6229 = vpack.c.b16 %v6217, %v6216
        %v6230 = vpack.c.b16 %v6219, %v6218
        %v6231 = vpack.c.b16 %v6221, %v6220
        %v6232 = vpack.c.b16 %v6223, %v6222
        %v6233 = vpack.c.b16 %v6225, %v6224
        %6242 = vmatprep.subr.bf16.mxu0 0
        %6243 = vmatpush1.bf16.msra.mxu0 %v6233
        %6244 = vmatprep.subr.bf16.mxu0 0
        %6245 = vmatpush1.bf16.msra.mxu0 %v6232
        %6246 = vmatprep.subr.bf16.mxu0 0
        %6247 = vmatpush1.bf16.msra.mxu0 %v6231
        %6248 = vmatprep.subr.bf16.mxu0 0
        %6249 = vmatpush1.bf16.msra.mxu0 %v6230
        %6250 = vmatprep.subr.bf16.mxu0 0
        %6251 = vmatpush1.bf16.msra.mxu0 %v6229
        %6252 = vmatprep.subr.bf16.mxu0 0
        %6253 = vmatpush1.bf16.msra.mxu0 %v6228
        %6254 = vmatprep.subr.bf16.mxu0 0
        %6255 = vmatpush1.bf16.msra.mxu0 %v6227
        %6256 = vmatprep.subr.bf16.mxu0 0
        %6257 = vmatpush1.bf16.msra.mxu0 %v6226
        %6258 = vmatprep.subr.bf16.mxu0 0
        %6259 = vmatpush2.bf16.msra.mxu0 0
        %6260 = vmatprep.subr.bf16.mxu0 0
        %6261 = vmatpush2.bf16.msra.mxu0 0
        %6262 = vmatprep.subr.bf16.mxu0 0
        %6263 = vmatpush2.bf16.msra.mxu0 0
        %6264 = vmatprep.subr.bf16.mxu0 0
        %6265 = vmatpush2.bf16.msra.mxu0 0
        %6266 = vmatprep.subr.bf16.mxu0 0
        %6267 = vmatpush2.bf16.msra.mxu0 0
        %6268 = vmatprep.subr.bf16.mxu0 0
        %6269 = vmatpush2.bf16.msra.mxu0 0
        %6270 = vmatprep.subr.bf16.mxu0 0
        %6271 = vmatpush2.bf16.msra.mxu0 0
        %6272 = vmatprep.subr.bf16.mxu0 0
        %6273 = vmatpush2.bf16.msra.mxu0 0
        %6274 = vmatprep.mubr.bf16.mxu0 0
        %6275 = vmatmul.mubr.bf16.gmra.mxu0 %v6178
        %v6276 = vpop.f32.mrf.mxu0
        %v6277 = vadd.f32 0.0, %v6276
        %v6278 = vpop.f32.mrf.mxu0
        %v6279 = vpop.f32.mrf.mxu0
        %v6280 = vadd.f32 0.0, %v6279
        %v6281 = vpop.f32.mrf.mxu0
        %6282 = vmatprep.mubr.bf16.mxu0 0
        %6283 = vmatmul.mubr.bf16.gmra.mxu0 %v6179
        %v6284 = vpop.f32.mrf.mxu0
        %v6285 = vadd.f32 0.0, %v6284
        %v6286 = vpop.f32.mrf.mxu0
        %v6287 = vpop.f32.mrf.mxu0
        %v6288 = vadd.f32 0.0, %v6287
        %v6289 = vpop.f32.mrf.mxu0
        %6290 = vmatprep.mubr.bf16.mxu0 0
        %6291 = vmatmul.mubr.bf16.gmra.mxu0 %v6180
        %v6292 = vpop.f32.mrf.mxu0
        %v6293 = vadd.f32 0.0, %v6292
        %v6294 = vpop.f32.mrf.mxu0
        %v6295 = vpop.f32.mrf.mxu0
        %v6296 = vadd.f32 0.0, %v6295
        %v6297 = vpop.f32.mrf.mxu0
        %6298 = vmatprep.mubr.bf16.mxu0 0
        %6299 = vmatmul.mubr.bf16.gmra.mxu0 %v6181
        %v6300 = vpop.f32.mrf.mxu0
        %v6301 = vadd.f32 0.0, %v6300
        %v6302 = vpop.f32.mrf.mxu0
        %v6303 = vpop.f32.mrf.mxu0
        %v6304 = vadd.f32 0.0, %v6303
        %v6305 = vpop.f32.mrf.mxu0
        %6306 = vmatprep.mubr.bf16.mxu0 0
        %6307 = vmatmul.mubr.bf16.gmra.mxu0 %v6182
        %v6308 = vpop.f32.mrf.mxu0
        %v6309 = vadd.f32 0.0, %v6308
        %v6310 = vpop.f32.mrf.mxu0
        %v6311 = vpop.f32.mrf.mxu0
        %v6312 = vadd.f32 0.0, %v6311
        %v6313 = vpop.f32.mrf.mxu0
        %6314 = vmatprep.mubr.bf16.mxu0 0
        %6315 = vmatmul.mubr.bf16.gmra.mxu0 %v6183
        %v6316 = vpop.f32.mrf.mxu0
        %v6317 = vadd.f32 0.0, %v6316
        %v6318 = vpop.f32.mrf.mxu0
        %v6319 = vpop.f32.mrf.mxu0
        %v6320 = vadd.f32 0.0, %v6319
        %v6321 = vpop.f32.mrf.mxu0
        %6322 = vmatprep.mubr.bf16.mxu0 0
        %6323 = vmatmul.mubr.bf16.gmra.mxu0 %v6184
        %v6324 = vpop.f32.mrf.mxu0
        %v6325 = vadd.f32 0.0, %v6324
        %v6326 = vpop.f32.mrf.mxu0
        %v6327 = vpop.f32.mrf.mxu0
        %v6328 = vadd.f32 0.0, %v6327
        %v6329 = vpop.f32.mrf.mxu0
        %6330 = vmatprep.mubr.bf16.mxu0 0
        %6331 = vmatmul.mubr.bf16.gmra.mxu0 %v6185
        %v6332 = vpop.f32.mrf.mxu0
        %v6333 = vadd.f32 0.0, %v6332
        %v6334 = vpop.f32.mrf.mxu0
        %v6335 = vpop.f32.mrf.mxu0
        %v6336 = vadd.f32 0.0, %v6335
        %v6337 = vpop.f32.mrf.mxu0
        %6338 = vdwg.mxu0
        %v6339 = vadd.f32 %v5913, %v6277
        %v6340 = vadd.f32 %v5914, %v6280
        %v6341 = vadd.f32 %v5915, %v6285
        %v6342 = vadd.f32 %v5916, %v6288
        %v6343 = vadd.f32 %v5917, %v6293
        %v6344 = vadd.f32 %v5918, %v6296
        %v6345 = vadd.f32 %v5919, %v6301
        %v6346 = vadd.f32 %v5920, %v6304
        %v6347 = vadd.f32 %v5921, %v6309
        %v6348 = vadd.f32 %v5922, %v6312
        %v6349 = vadd.f32 %v5923, %v6317
        %v6350 = vadd.f32 %v5924, %v6320
        %v6351 = vadd.f32 %v5925, %v6325
        %v6352 = vadd.f32 %v5926, %v6328
        %v6353 = vadd.f32 %v5927, %v6333
        %v6354 = vadd.f32 %v5928, %v6336
        %v6355 = vld [vmem:[%s5686] sm:$0xe]
        %v6356 = vld [vmem:[%s5686 + $0xc] sm:$0xe]
        %v6357 = vld [vmem:[%s5686 + $0x18] sm:$0xe]
        %v6358 = vld [vmem:[%s5686 + $0x24] sm:$0xe]
        %v6359 = vld [vmem:[%s5686 + $0x30] sm:$0xe]
        %v6360 = vld [vmem:[%s5686 + $0x3c] sm:$0xe]
        %v6361 = vld [vmem:[%s5686 + $0x48] sm:$0xe]
        %v6362 = vld [vmem:[%s5686 + $0x54] sm:$0xe]
        %v6387 = vrot.slane %v6355, 5
        %v6388 = vrot.slane %v6387, 4
        %v6389 = vrot.slane %v5930, 5
        %v6390 = vsel %vm899, %v6388, %v6389
        %v6391 = vrot.slane %v6389, 4
        %v6392 = vrot.slane %v5931, 5
        %v6393 = vsel %vm899, %v6391, %v6392
        %v6394 = vrot.slane %v6356, 5
        %v6395 = vrot.slane %v6394, 4
        %v6396 = vrot.slane %v5933, 5
        %v6397 = vsel %vm899, %v6395, %v6396
        %v6398 = vrot.slane %v6396, 4
        %v6399 = vrot.slane %v5934, 5
        %v6400 = vsel %vm899, %v6398, %v6399
        %v6401 = vrot.slane %v6357, 5
        %v6402 = vrot.slane %v6401, 4
        %v6403 = vrot.slane %v5936, 5
        %v6404 = vsel %vm899, %v6402, %v6403
        %v6405 = vrot.slane %v6403, 4
        %v6406 = vrot.slane %v5937, 5
        %v6407 = vsel %vm899, %v6405, %v6406
        %v6408 = vrot.slane %v6358, 5
        %v6409 = vrot.slane %v6408, 4
        %v6410 = vrot.slane %v5939, 5
        %v6411 = vsel %vm899, %v6409, %v6410
        %v6412 = vrot.slane %v6410, 4
        %v6413 = vrot.slane %v5940, 5
        %v6414 = vsel %vm899, %v6412, %v6413
        %v6415 = vrot.slane %v6359, 5
        %v6416 = vrot.slane %v6415, 4
        %v6417 = vrot.slane %v5942, 5
        %v6418 = vsel %vm899, %v6416, %v6417
        %v6419 = vrot.slane %v6417, 4
        %v6420 = vrot.slane %v5943, 5
        %v6421 = vsel %vm899, %v6419, %v6420
        %v6422 = vrot.slane %v6360, 5
        %v6423 = vrot.slane %v6422, 4
        %v6424 = vrot.slane %v5945, 5
        %v6425 = vsel %vm899, %v6423, %v6424
        %v6426 = vrot.slane %v6424, 4
        %v6427 = vrot.slane %v5946, 5
        %v6428 = vsel %vm899, %v6426, %v6427
        %v6429 = vrot.slane %v6361, 5
        %v6430 = vrot.slane %v6429, 4
        %v6431 = vrot.slane %v5948, 5
        %v6432 = vsel %vm899, %v6430, %v6431
        %v6433 = vrot.slane %v6431, 4
        %v6434 = vrot.slane %v5949, 5
        %v6435 = vsel %vm899, %v6433, %v6434
        %v6436 = vrot.slane %v6362, 5
        %v6437 = vrot.slane %v6436, 4
        %v6438 = vrot.slane %v5951, 5
        %v6439 = vsel %vm899, %v6437, %v6438
        %v6440 = vrot.slane %v6438, 4
        %v6441 = vrot.slane %v5952, 5
        %v6442 = vsel %vm899, %v6440, %v6441
        %s6443 = scalar_lea.vmem %s2, 512
        %v6444 = vld [vmem:[%s6443] sm:$0xf]
        %v6445 = vld [vmem:[%s6443 + $0x4] sm:$0xf]
        %v6446 = vld [vmem:[%s6443 + $0x8] sm:$0xf]
        %v6447 = vld [vmem:[%s6443 + $0xc] sm:$0xf]
        %v6448 = vld [vmem:[%s6443 + $0x10] sm:$0xf]
        %v6449 = vld [vmem:[%s6443 + $0x14] sm:$0xf]
        %v6450 = vld [vmem:[%s6443 + $0x18] sm:$0xf]
        %v6451 = vld [vmem:[%s6443 + $0x1c] sm:$0xf]
        %v6452 = vld [vmem:[%s6443 + $0x20] sm:$0xf]
        %v6453 = vld [vmem:[%s6443 + $0x24] sm:$0xf]
        %v6454 = vld [vmem:[%s6443 + $0x28] sm:$0xf]
        %v6455 = vld [vmem:[%s6443 + $0x2c] sm:$0xf]
        %v6456 = vld [vmem:[%s6443 + $0x30] sm:$0xf]
        %v6457 = vld [vmem:[%s6443 + $0x34] sm:$0xf]
        %v6458 = vld [vmem:[%s6443 + $0x38] sm:$0xf]
        %v6459 = vld [vmem:[%s6443 + $0x3c] sm:$0xf]
        %v6460 = vunpack.c.l.b16 %v6390
        %v6461 = vunpack.c.l.b16 %v6393
        %v6462 = vunpack.c.l.b16 %v6397
        %v6463 = vunpack.c.l.b16 %v6400
        %v6464 = vunpack.c.l.b16 %v6404
        %v6465 = vunpack.c.l.b16 %v6407
        %v6466 = vunpack.c.l.b16 %v6411
        %v6467 = vunpack.c.l.b16 %v6414
        %v6468 = vunpack.c.l.b16 %v6418
        %v6469 = vunpack.c.l.b16 %v6421
        %v6470 = vunpack.c.l.b16 %v6425
        %v6471 = vunpack.c.l.b16 %v6428
        %v6472 = vunpack.c.l.b16 %v6432
        %v6473 = vunpack.c.l.b16 %v6435
        %v6474 = vunpack.c.l.b16 %v6439
        %v6475 = vunpack.c.l.b16 %v6442
        %v6476 = vpack.c.b16 %v6461, %v6460
        %v6477 = vpack.c.b16 %v6463, %v6462
        %v6478 = vpack.c.b16 %v6465, %v6464
        %v6479 = vpack.c.b16 %v6467, %v6466
        %v6480 = vpack.c.b16 %v6469, %v6468
        %v6481 = vpack.c.b16 %v6471, %v6470
        %v6482 = vpack.c.b16 %v6473, %v6472
        %v6483 = vpack.c.b16 %v6475, %v6474
        %v6508 = vunpack.c.l.b16 %v6444
        %v6509 = vunpack.c.l.b16 %v6445
        %v6510 = vunpack.c.l.b16 %v6446
        %v6511 = vunpack.c.l.b16 %v6447
        %v6512 = vunpack.c.l.b16 %v6448
        %v6513 = vunpack.c.l.b16 %v6449
        %v6514 = vunpack.c.l.b16 %v6450
        %v6515 = vunpack.c.l.b16 %v6451
        %v6516 = vunpack.c.l.b16 %v6452
        %v6517 = vunpack.c.l.b16 %v6453
        %v6518 = vunpack.c.l.b16 %v6454
        %v6519 = vunpack.c.l.b16 %v6455
        %v6520 = vunpack.c.l.b16 %v6456
        %v6521 = vunpack.c.l.b16 %v6457
        %v6522 = vunpack.c.l.b16 %v6458
        %v6523 = vunpack.c.l.b16 %v6459
        %v6524 = vpack.c.b16 %v6509, %v6508
        %v6525 = vpack.c.b16 %v6511, %v6510
        %v6526 = vpack.c.b16 %v6513, %v6512
        %v6527 = vpack.c.b16 %v6515, %v6514
        %v6528 = vpack.c.b16 %v6517, %v6516
        %v6529 = vpack.c.b16 %v6519, %v6518
        %v6530 = vpack.c.b16 %v6521, %v6520
        %v6531 = vpack.c.b16 %v6523, %v6522
        %6540 = vmatprep.subr.bf16.mxu0 0
        %6541 = vmatpush1.bf16.msra.mxu0 %v6531
        %6542 = vmatprep.subr.bf16.mxu0 0
        %6543 = vmatpush1.bf16.msra.mxu0 %v6530
        %6544 = vmatprep.subr.bf16.mxu0 0
        %6545 = vmatpush1.bf16.msra.mxu0 %v6529
        %6546 = vmatprep.subr.bf16.mxu0 0
        %6547 = vmatpush1.bf16.msra.mxu0 %v6528
        %6548 = vmatprep.subr.bf16.mxu0 0
        %6549 = vmatpush1.bf16.msra.mxu0 %v6527
        %6550 = vmatprep.subr.bf16.mxu0 0
        %6551 = vmatpush1.bf16.msra.mxu0 %v6526
        %6552 = vmatprep.subr.bf16.mxu0 0
        %6553 = vmatpush1.bf16.msra.mxu0 %v6525
        %6554 = vmatprep.subr.bf16.mxu0 0
        %6555 = vmatpush1.bf16.msra.mxu0 %v6524
        %6556 = vmatprep.subr.bf16.mxu0 0
        %6557 = vmatpush2.bf16.msra.mxu0 0
        %6558 = vmatprep.subr.bf16.mxu0 0
        %6559 = vmatpush2.bf16.msra.mxu0 0
        %6560 = vmatprep.subr.bf16.mxu0 0
        %6561 = vmatpush2.bf16.msra.mxu0 0
        %6562 = vmatprep.subr.bf16.mxu0 0
        %6563 = vmatpush2.bf16.msra.mxu0 0
        %6564 = vmatprep.subr.bf16.mxu0 0
        %6565 = vmatpush2.bf16.msra.mxu0 0
        %6566 = vmatprep.subr.bf16.mxu0 0
        %6567 = vmatpush2.bf16.msra.mxu0 0
        %6568 = vmatprep.subr.bf16.mxu0 0
        %6569 = vmatpush2.bf16.msra.mxu0 0
        %6570 = vmatprep.subr.bf16.mxu0 0
        %6571 = vmatpush2.bf16.msra.mxu0 0
        %6572 = vmatprep.mubr.bf16.mxu0 0
        %6573 = vmatmul.mubr.bf16.gmra.mxu0 %v6476
        %v6574 = vpop.f32.mrf.mxu0
        %v6575 = vadd.f32 0.0, %v6574
        %v6576 = vpop.f32.mrf.mxu0
        %v6577 = vpop.f32.mrf.mxu0
        %v6578 = vadd.f32 0.0, %v6577
        %v6579 = vpop.f32.mrf.mxu0
        %6580 = vmatprep.mubr.bf16.mxu0 0
        %6581 = vmatmul.mubr.bf16.gmra.mxu0 %v6477
        %v6582 = vpop.f32.mrf.mxu0
        %v6583 = vadd.f32 0.0, %v6582
        %v6584 = vpop.f32.mrf.mxu0
        %v6585 = vpop.f32.mrf.mxu0
        %v6586 = vadd.f32 0.0, %v6585
        %v6587 = vpop.f32.mrf.mxu0
        %6588 = vmatprep.mubr.bf16.mxu0 0
        %6589 = vmatmul.mubr.bf16.gmra.mxu0 %v6478
        %v6590 = vpop.f32.mrf.mxu0
        %v6591 = vadd.f32 0.0, %v6590
        %v6592 = vpop.f32.mrf.mxu0
        %v6593 = vpop.f32.mrf.mxu0
        %v6594 = vadd.f32 0.0, %v6593
        %v6595 = vpop.f32.mrf.mxu0
        %6596 = vmatprep.mubr.bf16.mxu0 0
        %6597 = vmatmul.mubr.bf16.gmra.mxu0 %v6479
        %v6598 = vpop.f32.mrf.mxu0
        %v6599 = vadd.f32 0.0, %v6598
        %v6600 = vpop.f32.mrf.mxu0
        %v6601 = vpop.f32.mrf.mxu0
        %v6602 = vadd.f32 0.0, %v6601
        %v6603 = vpop.f32.mrf.mxu0
        %6604 = vmatprep.mubr.bf16.mxu0 0
        %6605 = vmatmul.mubr.bf16.gmra.mxu0 %v6480
        %v6606 = vpop.f32.mrf.mxu0
        %v6607 = vadd.f32 0.0, %v6606
        %v6608 = vpop.f32.mrf.mxu0
        %v6609 = vpop.f32.mrf.mxu0
        %v6610 = vadd.f32 0.0, %v6609
        %v6611 = vpop.f32.mrf.mxu0
        %6612 = vmatprep.mubr.bf16.mxu0 0
        %6613 = vmatmul.mubr.bf16.gmra.mxu0 %v6481
        %v6614 = vpop.f32.mrf.mxu0
        %v6615 = vadd.f32 0.0, %v6614
        %v6616 = vpop.f32.mrf.mxu0
        %v6617 = vpop.f32.mrf.mxu0
        %v6618 = vadd.f32 0.0, %v6617
        %v6619 = vpop.f32.mrf.mxu0
        %6620 = vmatprep.mubr.bf16.mxu0 0
        %6621 = vmatmul.mubr.bf16.gmra.mxu0 %v6482
        %v6622 = vpop.f32.mrf.mxu0
        %v6623 = vadd.f32 0.0, %v6622
        %v6624 = vpop.f32.mrf.mxu0
        %v6625 = vpop.f32.mrf.mxu0
        %v6626 = vadd.f32 0.0, %v6625
        %v6627 = vpop.f32.mrf.mxu0
        %6628 = vmatprep.mubr.bf16.mxu0 0
        %6629 = vmatmul.mubr.bf16.gmra.mxu0 %v6483
        %v6630 = vpop.f32.mrf.mxu0
        %v6631 = vadd.f32 0.0, %v6630
        %v6632 = vpop.f32.mrf.mxu0
        %v6633 = vpop.f32.mrf.mxu0
        %v6634 = vadd.f32 0.0, %v6633
        %v6635 = vpop.f32.mrf.mxu0
        %6636 = vdwg.mxu0
        %v6637 = vadd.f32 %v6339, %v6575
        %v6638 = vadd.f32 %v6340, %v6578
        %v6639 = vadd.f32 %v6341, %v6583
        %v6640 = vadd.f32 %v6342, %v6586
        %v6641 = vadd.f32 %v6343, %v6591
        %v6642 = vadd.f32 %v6344, %v6594
        %v6643 = vadd.f32 %v6345, %v6599
        %v6644 = vadd.f32 %v6346, %v6602
        %v6645 = vadd.f32 %v6347, %v6607
        %v6646 = vadd.f32 %v6348, %v6610
        %v6647 = vadd.f32 %v6349, %v6615
        %v6648 = vadd.f32 %v6350, %v6618
        %v6649 = vadd.f32 %v6351, %v6623
        %v6650 = vadd.f32 %v6352, %v6626
        %v6651 = vadd.f32 %v6353, %v6631
        %v6652 = vadd.f32 %v6354, %v6634
        %v6653 = vlaneseq
        %v6654 = vshrl.u32 %v6653, 7
        %v6655 = vsub.s32 3, %v6654
        %v6656 = vrot.slane %v213, %v6655
        %v6657 = vadd.f32 %v6637, %v6656
        %v6658 = vadd.f32 %v6638, %v6656
        %v6659 = vadd.f32 %v6639, %v6656
        %v6660 = vadd.f32 %v6640, %v6656
        %v6661 = vadd.f32 %v6641, %v6656
        %v6662 = vadd.f32 %v6642, %v6656
        %v6663 = vadd.f32 %v6643, %v6656
        %v6664 = vadd.f32 %v6644, %v6656
        %v6665 = vadd.f32 %v6645, %v6656
        %v6666 = vadd.f32 %v6646, %v6656
        %v6667 = vadd.f32 %v6647, %v6656
        %v6668 = vadd.f32 %v6648, %v6656
        %v6669 = vadd.f32 %v6649, %v6656
        %v6670 = vadd.f32 %v6650, %v6656
        %v6671 = vadd.f32 %v6651, %v6656
        %v6672 = vadd.f32 %v6652, %v6656
        %v6673 = vmul.f32 %v6657, 3.3333333
        %v6674 = vmul.f32 %v6658, 3.3333333
        %v6675 = vmul.f32 %v6659, 3.3333333
        %v6676 = vmul.f32 %v6660, 3.3333333
        %v6677 = vmul.f32 %v6661, 3.3333333
        %v6678 = vmul.f32 %v6662, 3.3333333
        %v6679 = vmul.f32 %v6663, 3.3333333
        %v6680 = vmul.f32 %v6664, 3.3333333
        %v6681 = vmul.f32 %v6665, 3.3333333
        %v6682 = vmul.f32 %v6666, 3.3333333
        %v6683 = vmul.f32 %v6667, 3.3333333
        %v6684 = vmul.f32 %v6668, 3.3333333
        %v6685 = vmul.f32 %v6669, 3.3333333
        %v6686 = vmul.f32 %v6670, 3.3333333
        %v6687 = vmul.f32 %v6671, 3.3333333
        %v6688 = vmul.f32 %v6672, 3.3333333
        %v6689 = vsub.f32 1.0, %v6657
        %v6690 = vsub.f32 1.0, %v6658
        %v6691 = vsub.f32 1.0, %v6659
        %v6692 = vsub.f32 1.0, %v6660
        %v6693 = vsub.f32 1.0, %v6661
        %v6694 = vsub.f32 1.0, %v6662
        %v6695 = vsub.f32 1.0, %v6663
        %v6696 = vsub.f32 1.0, %v6664
        %v6697 = vsub.f32 1.0, %v6665
        %v6698 = vsub.f32 1.0, %v6666
        %v6699 = vsub.f32 1.0, %v6667
        %v6700 = vsub.f32 1.0, %v6668
        %v6701 = vsub.f32 1.0, %v6669
        %v6702 = vsub.f32 1.0, %v6670
        %v6703 = vsub.f32 1.0, %v6671
        %v6704 = vsub.f32 1.0, %v6672
        %v6705 = vmul.f32 %v6689, 3.3333333
        %v6706 = vmul.f32 %v6690, 3.3333333
        %v6707 = vmul.f32 %v6691, 3.3333333
        %v6708 = vmul.f32 %v6692, 3.3333333
        %v6709 = vmul.f32 %v6693, 3.3333333
        %v6710 = vmul.f32 %v6694, 3.3333333
        %v6711 = vmul.f32 %v6695, 3.3333333
        %v6712 = vmul.f32 %v6696, 3.3333333
        %v6713 = vmul.f32 %v6697, 3.3333333
        %v6714 = vmul.f32 %v6698, 3.3333333
        %v6715 = vmul.f32 %v6699, 3.3333333
        %v6716 = vmul.f32 %v6700, 3.3333333
        %v6717 = vmul.f32 %v6701, 3.3333333
        %v6718 = vmul.f32 %v6702, 3.3333333
        %v6719 = vmul.f32 %v6703, 3.3333333
        %v6720 = vmul.f32 %v6704, 3.3333333
        %v6721 = vmin.f32 %v6673, %v6705
        %v6722 = vmin.f32 %v6674, %v6706
        %v6723 = vmin.f32 %v6675, %v6707
        %v6724 = vmin.f32 %v6676, %v6708
        %v6725 = vmin.f32 %v6677, %v6709
        %v6726 = vmin.f32 %v6678, %v6710
        %v6727 = vmin.f32 %v6679, %v6711
        %v6728 = vmin.f32 %v6680, %v6712
        %v6729 = vmin.f32 %v6681, %v6713
        %v6730 = vmin.f32 %v6682, %v6714
        %v6731 = vmin.f32 %v6683, %v6715
        %v6732 = vmin.f32 %v6684, %v6716
        %v6733 = vmin.f32 %v6685, %v6717
        %v6734 = vmin.f32 %v6686, %v6718
        %v6735 = vmin.f32 %v6687, %v6719
        %v6736 = vmin.f32 %v6688, %v6720
        %v6737 = vmax.f32 %v6721, 0.0
        %v6738 = vmax.f32 %v6722, 0.0
        %v6739 = vmax.f32 %v6723, 0.0
        %v6740 = vmax.f32 %v6724, 0.0
        %v6741 = vmax.f32 %v6725, 0.0
        %v6742 = vmax.f32 %v6726, 0.0
        %v6743 = vmax.f32 %v6727, 0.0
        %v6744 = vmax.f32 %v6728, 0.0
        %v6745 = vmax.f32 %v6729, 0.0
        %v6746 = vmax.f32 %v6730, 0.0
        %v6747 = vmax.f32 %v6731, 0.0
        %v6748 = vmax.f32 %v6732, 0.0
        %v6749 = vmax.f32 %v6733, 0.0
        %v6750 = vmax.f32 %v6734, 0.0
        %v6751 = vmax.f32 %v6735, 0.0
        %v6752 = vmax.f32 %v6736, 0.0
        %v6753 = vlaneseq
        %v6754 = vshrl.u32 %v6753, 7
        %v6755 = vsub.s32 4, %v6754
        %v6756 = vrot.slane %v213, %v6755
        %v6757 = vmul.f32 %v6737, %v6756
        %v6758 = vmul.f32 %v6738, %v6756
        %v6759 = vmul.f32 %v6739, %v6756
        %v6760 = vmul.f32 %v6740, %v6756
        %v6761 = vmul.f32 %v6741, %v6756
        %v6762 = vmul.f32 %v6742, %v6756
        %v6763 = vmul.f32 %v6743, %v6756
        %v6764 = vmul.f32 %v6744, %v6756
        %v6765 = vmul.f32 %v6745, %v6756
        %v6766 = vmul.f32 %v6746, %v6756
        %v6767 = vmul.f32 %v6747, %v6756
        %v6768 = vmul.f32 %v6748, %v6756
        %v6769 = vmul.f32 %v6749, %v6756
        %v6770 = vmul.f32 %v6750, %v6756
        %v6771 = vmul.f32 %v6751, %v6756
        %v6772 = vmul.f32 %v6752, %v6756
        %v6773 = vlaneseq
        %v6774 = vshrl.u32 %v6773, 7
        %v6775 = vsub.s32 5, %v6774
        %v6776 = vrot.slane %v213, %v6775
        %v6777 = vadd.f32 %v6757, %v6776
        %v6778 = vadd.f32 %v6758, %v6776
        %v6779 = vadd.f32 %v6759, %v6776
        %v6780 = vadd.f32 %v6760, %v6776
        %v6781 = vadd.f32 %v6761, %v6776
        %v6782 = vadd.f32 %v6762, %v6776
        %v6783 = vadd.f32 %v6763, %v6776
        %v6784 = vadd.f32 %v6764, %v6776
        %v6785 = vadd.f32 %v6765, %v6776
        %v6786 = vadd.f32 %v6766, %v6776
        %v6787 = vadd.f32 %v6767, %v6776
        %v6788 = vadd.f32 %v6768, %v6776
        %v6789 = vadd.f32 %v6769, %v6776
        %v6790 = vadd.f32 %v6770, %v6776
        %v6791 = vadd.f32 %v6771, %v6776
        %v6792 = vadd.f32 %v6772, %v6776
        %v6793 = vmax.f32 %v6777, 0.0
        %v6794 = vmax.f32 %v6778, 0.0
        %v6795 = vmax.f32 %v6779, 0.0
        %v6796 = vmax.f32 %v6780, 0.0
        %v6797 = vmax.f32 %v6781, 0.0
        %v6798 = vmax.f32 %v6782, 0.0
        %v6799 = vmax.f32 %v6783, 0.0
        %v6800 = vmax.f32 %v6784, 0.0
        %v6801 = vmax.f32 %v6785, 0.0
        %v6802 = vmax.f32 %v6786, 0.0
        %v6803 = vmax.f32 %v6787, 0.0
        %v6804 = vmax.f32 %v6788, 0.0
        %v6805 = vmax.f32 %v6789, 0.0
        %v6806 = vmax.f32 %v6790, 0.0
        %v6807 = vmax.f32 %v6791, 0.0
        %v6808 = vmax.f32 %v6792, 0.0
        %6809 = vst [vmem:[%s204] sm:$0xff] %v6793
        %6810 = vst [vmem:[%s204 + $0x8] sm:$0xff] %v6794
        %6811 = vst [vmem:[%s204 + $0x10] sm:$0xff] %v6795
        %6812 = vst [vmem:[%s204 + $0x18] sm:$0xff] %v6796
        %6813 = vst [vmem:[%s204 + $0x20] sm:$0xff] %v6797
        %6814 = vst [vmem:[%s204 + $0x28] sm:$0xff] %v6798
        %6815 = vst [vmem:[%s204 + $0x30] sm:$0xff] %v6799
        %6816 = vst [vmem:[%s204 + $0x38] sm:$0xff] %v6800
        %6817 = vst [vmem:[%s204 + $0x40] sm:$0xff] %v6801
        %6818 = vst [vmem:[%s204 + $0x48] sm:$0xff] %v6802
        %6819 = vst [vmem:[%s204 + $0x50] sm:$0xff] %v6803
        %6820 = vst [vmem:[%s204 + $0x58] sm:$0xff] %v6804
        %6821 = vst [vmem:[%s204 + $0x60] sm:$0xff] %v6805
        %6822 = vst [vmem:[%s204 + $0x68] sm:$0xff] %v6806
        %6823 = vst [vmem:[%s204 + $0x70] sm:$0xff] %v6807
        %6824 = vst [vmem:[%s204 + $0x78] sm:$0xff] %v6808
        %s6825 = sand.u32 %s129, 1
        %s6826 = scalar_lea.sflag [#allocation4], %s6825
        %s6827 = sand.u32 %s129, 1
        %s6828 = smul.addr %s6827, 128
        %s6829 = scalar_lea.vmem [#allocation3], %s6828
        // Predicated region
        $region45: #{double_conv.1} parent=35 // pred_check
          %p6830 = pneg %p139
        $region46: #{double_conv.1} parent=35 // pred_check_branch
          %6832 = sbr.rel (%p6830) target = $region48
        $region47: #{double_conv.1} parent=35 // pred_region
          %s6833 = smul.u32 16, %s23
          %s6835 = ssub.s32 2048, 2048
          %6836 = vsyncadd %s6826, %s6835
          %s6837 = smul.addr %s22, 32
          %s6838 = sadd.s32 %s6833, %s6837
          %s6839 = smul.addr %s6838, 128
          %s6840 = scalar_lea.hbm %s4, %s6839
          %s6841 = sshll.u32 %s6829, 4
          %s6842 = int_to_ptr.vmem [resolvable:$true] %s6841
          %6847 = dma.vmem_to_hbm [thread:$0]  %s6842, 2048, %s6840, %s6826, 128, 128, 8
        $region48: #{double_conv.1} parent=35 // pred_fallthru
          _
      $region36: #{double_conv.1} parent=5 // pred_fallthru
        _
      %p6848 = scmp.le.s32.totalorder 2, %s13
      // Predicated region
      $region49: #{double_conv.1} parent=5 // pred_check
        %p6849 = pneg %p6848
      $region50: #{double_conv.1} parent=5 // pred_check_branch
        %6851 = sbr.rel (%p6849) target = $region52
      $region51: #{double_conv.1} parent=5 // pred_region
        %s6852 = ssub.s32 %s13, 2
        // Predicated region
        $region53: #{double_conv.1} parent=51 // pred_check
          %p6853 = pneg %p145
        $region54: #{double_conv.1} parent=51 // pred_check_branch
          %6855 = sbr.rel (%p6853) target = $region56
        $region55: #{double_conv.1} parent=51 // pred_region
          %s6856 = sand.u32 %s130, 1
          %s6857 = scalar_lea.sflag [#allocation4], %s6856
          %s6858 = sand.u32 %s130, 1
          %s6859 = smul.addr %s6858, 128
          %s6860 = scalar_lea.vmem [#allocation3], %s6859
          %6861 = dma.done %s6857, 2048
        $region56: #{double_conv.1} parent=51 // pred_fallthru
          _
      $region52: #{double_conv.1} parent=5 // pred_fallthru
        _
    $region6: #{double_conv.1} parent=1 // loop_footer
      %s17 = sadd.s32 1, %s13
    $region7: #{double_conv.1} parent=1 // loop_footer_branch
      %12 = sbr.rel target = $region3
    $region8: #{double_conv.1} parent=1 // loop_exit
      _
    %6862 = vsyncpa [#allocation4], 1
    %s6863 = scalar_lea.sflag [#allocation4], 1
    %6864 = vsyncpa %s6863, 1

</llo_original>
